<compile_context>
chip_gen: v7x
topology: tpu7x:2x2x1
jax: 0.10.0
libtpu: 0.0.40
codegen_flags: <defaults>
</compile_context>

<pallas_src>
import functools

import jax
import jax.numpy as jnp
from jax import lax
from jax.experimental import pallas as pl
from jax.experimental.pallas import tpu as pltpu


# ---------------------------------------------------------------------------
# Fused kernel: block_b batches per grid step, heads unrolled inside.
# ---------------------------------------------------------------------------
def _fused_cross_attn_kernel(x_ref, y_ref, qw_ref, kvw_ref, pw_ref, pb_ref,
                             o_ref, o_scr, *, num_heads, scale):
    Bt, N, C = x_ref.shape
    _, Ny, Ce = y_ref.shape
    Dh = C // num_heads
    cdt = qw_ref.dtype                         # MXU operand dtype (f32 or bf16)

    x = x_ref[...].reshape(Bt * N, C)          # batch-flattened activations
    y = y_ref[...].reshape(Bt * Ny, Ce)

    # Batched projections across the whole block (softmax scale folded into q).
    q = jnp.dot(x.astype(cdt), qw_ref[...],
                preferred_element_type=jnp.float32) * scale        # (Bt*N, C)
    kv = jnp.dot(y.astype(cdt), kvw_ref[...],
                 preferred_element_type=jnp.float32)               # (Bt*Ny, 2C)
    q = q.astype(cdt)
    k = kv[:, :C].astype(cdt)                  # (Bt*Ny, C)
    v = kv[:, C:].astype(cdt)                  # (Bt*Ny, C)

    # Per-(batch, head) attention with static lane slices; outputs are written
    # into a lane-dense (Bt*N, C) scratch (8-lane-aligned writes in one tile).
    # TODO(synk): switch to lax.fori_loop with pl.ds lane slices if num_heads
    # grows beyond ~8 (bounds live ranges / avoids huge unrolled code).
    for b in range(Bt):
        q_b = q[b * N:(b + 1) * N, :]
        k_b = k[b * Ny:(b + 1) * Ny, :]
        v_b = v[b * Ny:(b + 1) * Ny, :]
        for h in range(num_heads):
            lo, hi = h * Dh, (h + 1) * Dh
            # scores: contract Dh directly (no explicit k transpose)
            s = lax.dot_general(q_b[:, lo:hi], k_b[:, lo:hi],
                                (((1,), (1,)), ((), ())),
                                preferred_element_type=jnp.float32)   # (N, Ny)
            s = s - jnp.max(s, axis=-1, keepdims=True)
            p = jnp.exp(s)
            p = p / jnp.sum(p, axis=-1, keepdims=True)     # exact softmax
            o_scr[b * N:(b + 1) * N, lo:hi] = jnp.dot(
                p.astype(cdt), v_b[:, lo:hi],
                preferred_element_type=jnp.float32)

    # Single deep-contraction (K=C) output projection + bias, lane-dense store.
    o = o_scr[...]
    out = jnp.dot(o.astype(cdt), pw_ref[...],
                  preferred_element_type=jnp.float32) + pb_ref[...]
    o_ref[...] = out.reshape(Bt, N, C).astype(o_ref.dtype)


# ---------------------------------------------------------------------------
# pallas_call builder (weight_mode lets us request single-buffered weights).
# ---------------------------------------------------------------------------
def _make_call(B, N, C, Ny, Ce, block_b, kernel, out_dtype, weight_mode):
    def wspec(shape):
        zeros = (0,) * len(shape)
        if weight_mode is None:
            return pl.BlockSpec(shape, lambda b: zeros)
        return pl.BlockSpec(shape, lambda b: zeros, pipeline_mode=weight_mode)

    return pl.pallas_call(
        kernel,
        out_shape=jax.ShapeDtypeStruct((B, N, C), out_dtype),
        grid=(B // block_b,),
        in_specs=[
            pl.BlockSpec((block_b, N, C), lambda b: (b, 0, 0)),    # x
            pl.BlockSpec((block_b, Ny, Ce), lambda b: (b, 0, 0)),  # y
            wspec((C, C)),          # Wq      (constant block index)
            wspec((Ce, 2 * C)),     # Wkv
            wspec((C, C)),          # Wproj
            wspec((1, C)),          # bproj
        ],
        out_specs=pl.BlockSpec((block_b, N, C), lambda b: (b, 0, 0)),
        scratch_shapes=[pltpu.VMEM((block_b * N, C), jnp.float32)],
        compiler_params=pltpu.CompilerParams(
            dimension_semantics=("parallel",),   # v7x: 2 TCs split the grid
            vmem_limit_bytes=64 * 1024 * 1024,   # explicit headroom for blocks
        ),
    )


# ---------------------------------------------------------------------------
# Wrapper.
# ---------------------------------------------------------------------------
def cross_attention_diff(x, y, params, num_heads, block_b=None,
                         use_bf16_mxu=False):
    B, N, C = x.shape
    _, Ny, Ce = y.shape
    Dh = C // num_heads
    scale = Dh ** (-0.5)

    if block_b is None:
        # Batch several examples per grid step (amortize per-step overhead),
        # but keep >= 2 grid steps when possible so v7x's two TCs share work.
        if B >= 2 and B % 2 == 0:
            block_b = min(8, B // 2)
            while B % block_b != 0:
                block_b -= 1
        else:
            block_b = 1
    assert B % block_b == 0, "block_b must divide the batch size"

    q_w, kv_w, p_w = params["q_w"], params["kv_w"], params["proj_w"]
    if use_bf16_mxu:
        # Downcast weights once in the wrapper: halves weight DMA + VMEM and
        # hits the native bf16 MXU path; accumulation stays f32 in-kernel.
        q_w, kv_w, p_w = (w.astype(jnp.bfloat16) for w in (q_w, kv_w, p_w))

    kernel = functools.partial(_fused_cross_attn_kernel,
                               num_heads=num_heads, scale=scale)
    args = (x, y, q_w, kv_w, p_w, params["proj_b"].reshape(1, C))

    try:
        # Constant-index weight blocks: single VMEM copy (no double-buffering).
        call = _make_call(B, N, C, Ny, Ce, block_b, kernel, x.dtype,
                          weight_mode=pl.Buffered(1))
        return call(*args)
    except Exception:
        # Fallback for JAX builds that reject Buffered(1) on pallas_call specs.
        call = _make_call(B, N, C, Ny, Ce, block_b, kernel, x.dtype,
                          weight_mode=None)
        return call(*args)


# ---------------------------------------------------------------------------
# Pure-JAX reference for verification.
# ---------------------------------------------------------------------------
def reference(x, y, params, num_heads):
    B, N, C = x.shape
    Ny = y.shape[1]
    Dh = C // num_heads
    scale = Dh ** (-0.5)
    q = (x.reshape(B * N, C) @ params["q_w"]).reshape(
        B, N, num_heads, Dh).transpose(0, 2, 1, 3)
    kv = (y.reshape(B * Ny, -1) @ params["kv_w"]).reshape(
        B, Ny, 2, num_heads, Dh).transpose(2, 0, 3, 1, 4)
    k, v = kv[0], kv[1]
    s = jnp.einsum("bhnd,bhmd->bhnm", q, k) * scale
    p = jax.nn.softmax(s, axis=-1)
    o = jnp.einsum("bhnm,bhmd->bhnd", p, v).transpose(0, 2, 1, 3).reshape(B * N, C)
    return (o @ params["proj_w"] + params["proj_b"]).reshape(B, N, C)


if __name__ == "__main__":
    # Small shapes consistent with the module's forward.
    B, N, Ny = 2, 8, 16
    encoder_dim, decoder_dim, num_heads = 24, 32, 4

    key = jax.random.PRNGKey(0)
    kx, ky, kq, kkv, kp, kpb = jax.random.split(key, 6)

    x = jax.random.normal(kx, (B, N, decoder_dim), dtype=jnp.float32)
    y = jax.random.normal(ky, (B, Ny, encoder_dim), dtype=jnp.float32)

    # Deterministic synthetic parameters (stored as (in, out); qkv_bias=False).
    params = {
        "q_w": jax.random.normal(kq, (decoder_dim, decoder_dim), jnp.float32) * 0.1,
        "kv_w": jax.random.normal(kkv, (encoder_dim, 2 * decoder_dim), jnp.float32) * 0.1,
        "proj_w": jax.random.normal(kp, (decoder_dim, decoder_dim), jnp.float32) * 0.1,
        "proj_b": jax.random.normal(kpb, (decoder_dim,), jnp.float32) * 0.1,
    }

    ref = jax.block_until_ready(reference(x, y, params, num_heads))

    # f32 MXU path (exact softmax; tight tolerance).
    out = jax.block_until_ready(cross_attention_diff(x, y, params, num_heads))
    assert out.shape == (B, N, decoder_dim)
    assert jnp.allclose(out, ref, atol=1e-4, rtol=1e-4), "f32 mismatch vs reference"

    # bf16 MXU-operand path (native fast path on v6e/v7x); accumulation in f32.
    out_bf16 = jax.block_until_ready(
        cross_attention_diff(x, y, params, num_heads, use_bf16_mxu=True))
    assert jnp.allclose(out_bf16, ref, atol=5e-2, rtol=5e-2), "bf16 mismatch vs reference"

    print("KERNEL_OK")
</pallas_src>

<mosaic_0001>
module attributes {stable_mosaic.version = 11 : i64} {
  func.func @_fused_cross_attn_kernel(%arg0: i32, %arg1: memref<1x8x32xf32, #tpu.memory_space<vmem>>, %arg2: memref<1x16x24xf32, #tpu.memory_space<vmem>>, %arg3: memref<32x32xf32, #tpu.memory_space<vmem>>, %arg4: memref<24x64xf32, #tpu.memory_space<vmem>>, %arg5: memref<32x32xf32, #tpu.memory_space<vmem>>, %arg6: memref<1x32xf32, #tpu.memory_space<vmem>>, %arg7: memref<1x8x32xf32, #tpu.memory_space<vmem>>, %arg8: memref<8x32xf32, #tpu.memory_space<vmem>>) attributes {dimension_semantics = [#tpu.dimension_semantics<parallel>], iteration_bounds = array<i64: 2>, scalar_prefetch = 0 : i64, scratch_operands = 1 : i64, tpu.core_type = #tpu.core_type<tc>, window_params = [{transform_indices = @transform_0, window_bounds = array<i64: 1, 8, 32>}, {transform_indices = @transform_1, window_bounds = array<i64: 1, 16, 24>}, {pipeline_mode = #tpu.pipeline_mode<synchronous>, transform_indices = @transform_2, window_bounds = array<i64: 32, 32>}, {pipeline_mode = #tpu.pipeline_mode<synchronous>, transform_indices = @transform_3, window_bounds = array<i64: 24, 64>}, {pipeline_mode = #tpu.pipeline_mode<synchronous>, transform_indices = @transform_4, window_bounds = array<i64: 32, 32>}, {pipeline_mode = #tpu.pipeline_mode<synchronous>, transform_indices = @transform_5, window_bounds = array<i64: 1, 32>}, {transform_indices = @transform_6, window_bounds = array<i64: 1, 8, 32>}]} {
    %c0 = arith.constant 0 : index
    %c0_0 = arith.constant 0 : index
    %c0_1 = arith.constant 0 : index
    %0 = vector.load %arg1[%c0, %c0_0, %c0_1] : memref<1x8x32xf32, #tpu.memory_space<vmem>>, vector<1x8x32xf32>
    %1 = vector.shape_cast %0 : vector<1x8x32xf32> to vector<8x32xf32>
    %c0_2 = arith.constant 0 : index
    %c0_3 = arith.constant 0 : index
    %c0_4 = arith.constant 0 : index
    %2 = vector.load %arg2[%c0_2, %c0_3, %c0_4] : memref<1x16x24xf32, #tpu.memory_space<vmem>>, vector<1x16x24xf32>
    %3 = vector.shape_cast %2 : vector<1x16x24xf32> to vector<16x24xf32>
    %c0_5 = arith.constant 0 : index
    %c0_6 = arith.constant 0 : index
    %4 = vector.load %arg3[%c0_5, %c0_6] : memref<32x32xf32, #tpu.memory_space<vmem>>, vector<32x32xf32>
    %cst = arith.constant dense<0.000000e+00> : vector<8x32xf32>
    %5 = tpu.matmul %1, %4, %cst {dimension_numbers = #tpu.dot_dimension_numbers<[1], [0], [0], [1], [0, 0, 1, 1], [], []>} : vector<8x32xf32>, vector<32x32xf32>, vector<8x32xf32> -> vector<8x32xf32>
    %cst_7 = arith.constant 0.353553385 : f32
    %6 = vector.broadcast %cst_7 : f32 to vector<8x32xf32>
    %7 = arith.mulf %5, %6 : vector<8x32xf32>
    %c0_8 = arith.constant 0 : index
    %c0_9 = arith.constant 0 : index
    %8 = vector.load %arg4[%c0_8, %c0_9] : memref<24x64xf32, #tpu.memory_space<vmem>>, vector<24x64xf32>
    %cst_10 = arith.constant dense<0.000000e+00> : vector<16x64xf32>
    %9 = tpu.matmul %3, %8, %cst_10 {dimension_numbers = #tpu.dot_dimension_numbers<[1], [0], [0], [1], [0, 0, 1, 1], [], []>} : vector<16x24xf32>, vector<24x64xf32>, vector<16x64xf32> -> vector<16x64xf32>
    %10 = vector.extract_strided_slice %9 {offsets = [0, 0], sizes = [16, 32], strides = [1, 1]} : vector<16x64xf32> to vector<16x32xf32>
    %11 = vector.extract_strided_slice %9 {offsets = [0, 32], sizes = [16, 32], strides = [1, 1]} : vector<16x64xf32> to vector<16x32xf32>
    %12 = vector.extract_strided_slice %7 {offsets = [0, 0], sizes = [8, 8], strides = [1, 1]} : vector<8x32xf32> to vector<8x8xf32>
    %13 = vector.extract_strided_slice %10 {offsets = [0, 0], sizes = [16, 8], strides = [1, 1]} : vector<16x32xf32> to vector<16x8xf32>
    %cst_11 = arith.constant dense<0.000000e+00> : vector<8x16xf32>
    %14 = tpu.matmul %12, %13, %cst_11 {dimension_numbers = #tpu.dot_dimension_numbers<[1], [1], [0], [0], [0, 0, 1, 0], [], []>} : vector<8x8xf32>, vector<16x8xf32>, vector<8x16xf32> -> vector<8x16xf32>
    %cst_12 = arith.constant dense<0xFF800000> : vector<8xf32>
    %15 = vector.multi_reduction <maximumf>, %14, %cst_12 [1] : vector<8x16xf32> to vector<8xf32>
    %16 = vector.shape_cast %15 : vector<8xf32> to vector<8x1xf32>
    %17 = vector.broadcast %16 : vector<8x1xf32> to vector<8x16xf32>
    %18 = arith.subf %14, %17 : vector<8x16xf32>
    %19 = math.exp %18 : vector<8x16xf32>
    %cst_13 = arith.constant dense<0.000000e+00> : vector<8xf32>
    %20 = vector.multi_reduction <add>, %19, %cst_13 [1] : vector<8x16xf32> to vector<8xf32>
    %21 = vector.shape_cast %20 : vector<8xf32> to vector<8x1xf32>
    %22 = vector.broadcast %21 : vector<8x1xf32> to vector<8x16xf32>
    %23 = arith.divf %19, %22 : vector<8x16xf32>
    %24 = vector.extract_strided_slice %11 {offsets = [0, 0], sizes = [16, 8], strides = [1, 1]} : vector<16x32xf32> to vector<16x8xf32>
    %cst_14 = arith.constant dense<0.000000e+00> : vector<8x8xf32>
    %25 = tpu.matmul %23, %24, %cst_14 {dimension_numbers = #tpu.dot_dimension_numbers<[1], [0], [0], [1], [0, 0, 1, 1], [], []>} : vector<8x16xf32>, vector<16x8xf32>, vector<8x8xf32> -> vector<8x8xf32>
    %c0_15 = arith.constant 0 : index
    %c0_16 = arith.constant 0 : index
    %26 = vector.load %arg8[%c0_15, %c0_16] : memref<8x32xf32, #tpu.memory_space<vmem>>, vector<8x8xf32>
    tpu.vector_store %arg8[%c0_15, %c0_16], %25 {strides = array<i32>} : memref<8x32xf32, #tpu.memory_space<vmem>>, vector<8x8xf32>,
    %27 = vector.extract_strided_slice %7 {offsets = [0, 8], sizes = [8, 8], strides = [1, 1]} : vector<8x32xf32> to vector<8x8xf32>
    %28 = vector.extract_strided_slice %10 {offsets = [0, 8], sizes = [16, 8], strides = [1, 1]} : vector<16x32xf32> to vector<16x8xf32>
    %cst_17 = arith.constant dense<0.000000e+00> : vector<8x16xf32>
    %29 = tpu.matmul %27, %28, %cst_17 {dimension_numbers = #tpu.dot_dimension_numbers<[1], [1], [0], [0], [0, 0, 1, 0], [], []>} : vector<8x8xf32>, vector<16x8xf32>, vector<8x16xf32> -> vector<8x16xf32>
    %cst_18 = arith.constant dense<0xFF800000> : vector<8xf32>
    %30 = vector.multi_reduction <maximumf>, %29, %cst_18 [1] : vector<8x16xf32> to vector<8xf32>
    %31 = vector.shape_cast %30 : vector<8xf32> to vector<8x1xf32>
    %32 = vector.broadcast %31 : vector<8x1xf32> to vector<8x16xf32>
    %33 = arith.subf %29, %32 : vector<8x16xf32>
    %34 = math.exp %33 : vector<8x16xf32>
    %cst_19 = arith.constant dense<0.000000e+00> : vector<8xf32>
    %35 = vector.multi_reduction <add>, %34, %cst_19 [1] : vector<8x16xf32> to vector<8xf32>
    %36 = vector.shape_cast %35 : vector<8xf32> to vector<8x1xf32>
    %37 = vector.broadcast %36 : vector<8x1xf32> to vector<8x16xf32>
    %38 = arith.divf %34, %37 : vector<8x16xf32>
    %39 = vector.extract_strided_slice %11 {offsets = [0, 8], sizes = [16, 8], strides = [1, 1]} : vector<16x32xf32> to vector<16x8xf32>
    %cst_20 = arith.constant dense<0.000000e+00> : vector<8x8xf32>
    %40 = tpu.matmul %38, %39, %cst_20 {dimension_numbers = #tpu.dot_dimension_numbers<[1], [0], [0], [1], [0, 0, 1, 1], [], []>} : vector<8x16xf32>, vector<16x8xf32>, vector<8x8xf32> -> vector<8x8xf32>
    %c0_21 = arith.constant 0 : index
    %c8 = arith.constant 8 : index
    %41 = vector.load %arg8[%c0_21, %c8] : memref<8x32xf32, #tpu.memory_space<vmem>>, vector<8x8xf32>
    tpu.vector_store %arg8[%c0_21, %c8], %40 {strides = array<i32>} : memref<8x32xf32, #tpu.memory_space<vmem>>, vector<8x8xf32>,
    %42 = vector.extract_strided_slice %7 {offsets = [0, 16], sizes = [8, 8], strides = [1, 1]} : vector<8x32xf32> to vector<8x8xf32>
    %43 = vector.extract_strided_slice %10 {offsets = [0, 16], sizes = [16, 8], strides = [1, 1]} : vector<16x32xf32> to vector<16x8xf32>
    %cst_22 = arith.constant dense<0.000000e+00> : vector<8x16xf32>
    %44 = tpu.matmul %42, %43, %cst_22 {dimension_numbers = #tpu.dot_dimension_numbers<[1], [1], [0], [0], [0, 0, 1, 0], [], []>} : vector<8x8xf32>, vector<16x8xf32>, vector<8x16xf32> -> vector<8x16xf32>
    %cst_23 = arith.constant dense<0xFF800000> : vector<8xf32>
    %45 = vector.multi_reduction <maximumf>, %44, %cst_23 [1] : vector<8x16xf32> to vector<8xf32>
    %46 = vector.shape_cast %45 : vector<8xf32> to vector<8x1xf32>
    %47 = vector.broadcast %46 : vector<8x1xf32> to vector<8x16xf32>
    %48 = arith.subf %44, %47 : vector<8x16xf32>
    %49 = math.exp %48 : vector<8x16xf32>
    %cst_24 = arith.constant dense<0.000000e+00> : vector<8xf32>
    %50 = vector.multi_reduction <add>, %49, %cst_24 [1] : vector<8x16xf32> to vector<8xf32>
    %51 = vector.shape_cast %50 : vector<8xf32> to vector<8x1xf32>
    %52 = vector.broadcast %51 : vector<8x1xf32> to vector<8x16xf32>
    %53 = arith.divf %49, %52 : vector<8x16xf32>
    %54 = vector.extract_strided_slice %11 {offsets = [0, 16], sizes = [16, 8], strides = [1, 1]} : vector<16x32xf32> to vector<16x8xf32>
    %cst_25 = arith.constant dense<0.000000e+00> : vector<8x8xf32>
    %55 = tpu.matmul %53, %54, %cst_25 {dimension_numbers = #tpu.dot_dimension_numbers<[1], [0], [0], [1], [0, 0, 1, 1], [], []>} : vector<8x16xf32>, vector<16x8xf32>, vector<8x8xf32> -> vector<8x8xf32>
    %c0_26 = arith.constant 0 : index
    %c16 = arith.constant 16 : index
    %56 = vector.load %arg8[%c0_26, %c16] : memref<8x32xf32, #tpu.memory_space<vmem>>, vector<8x8xf32>
    tpu.vector_store %arg8[%c0_26, %c16], %55 {strides = array<i32>} : memref<8x32xf32, #tpu.memory_space<vmem>>, vector<8x8xf32>,
    %57 = vector.extract_strided_slice %7 {offsets = [0, 24], sizes = [8, 8], strides = [1, 1]} : vector<8x32xf32> to vector<8x8xf32>
    %58 = vector.extract_strided_slice %10 {offsets = [0, 24], sizes = [16, 8], strides = [1, 1]} : vector<16x32xf32> to vector<16x8xf32>
    %cst_27 = arith.constant dense<0.000000e+00> : vector<8x16xf32>
    %59 = tpu.matmul %57, %58, %cst_27 {dimension_numbers = #tpu.dot_dimension_numbers<[1], [1], [0], [0], [0, 0, 1, 0], [], []>} : vector<8x8xf32>, vector<16x8xf32>, vector<8x16xf32> -> vector<8x16xf32>
    %cst_28 = arith.constant dense<0xFF800000> : vector<8xf32>
    %60 = vector.multi_reduction <maximumf>, %59, %cst_28 [1] : vector<8x16xf32> to vector<8xf32>
    %61 = vector.shape_cast %60 : vector<8xf32> to vector<8x1xf32>
    %62 = vector.broadcast %61 : vector<8x1xf32> to vector<8x16xf32>
    %63 = arith.subf %59, %62 : vector<8x16xf32>
    %64 = math.exp %63 : vector<8x16xf32>
    %cst_29 = arith.constant dense<0.000000e+00> : vector<8xf32>
    %65 = vector.multi_reduction <add>, %64, %cst_29 [1] : vector<8x16xf32> to vector<8xf32>
    %66 = vector.shape_cast %65 : vector<8xf32> to vector<8x1xf32>
    %67 = vector.broadcast %66 : vector<8x1xf32> to vector<8x16xf32>
    %68 = arith.divf %64, %67 : vector<8x16xf32>
    %69 = vector.extract_strided_slice %11 {offsets = [0, 24], sizes = [16, 8], strides = [1, 1]} : vector<16x32xf32> to vector<16x8xf32>
    %cst_30 = arith.constant dense<0.000000e+00> : vector<8x8xf32>
    %70 = tpu.matmul %68, %69, %cst_30 {dimension_numbers = #tpu.dot_dimension_numbers<[1], [0], [0], [1], [0, 0, 1, 1], [], []>} : vector<8x16xf32>, vector<16x8xf32>, vector<8x8xf32> -> vector<8x8xf32>
    %c0_31 = arith.constant 0 : index
    %c24 = arith.constant 24 : index
    %71 = vector.load %arg8[%c0_31, %c24] : memref<8x32xf32, #tpu.memory_space<vmem>>, vector<8x8xf32>
    tpu.vector_store %arg8[%c0_31, %c24], %70 {strides = array<i32>} : memref<8x32xf32, #tpu.memory_space<vmem>>, vector<8x8xf32>,
    %c0_32 = arith.constant 0 : index
    %c0_33 = arith.constant 0 : index
    %72 = vector.load %arg8[%c0_32, %c0_33] : memref<8x32xf32, #tpu.memory_space<vmem>>, vector<8x32xf32>
    %c0_34 = arith.constant 0 : index
    %c0_35 = arith.constant 0 : index
    %73 = vector.load %arg5[%c0_34, %c0_35] : memref<32x32xf32, #tpu.memory_space<vmem>>, vector<32x32xf32>
    %cst_36 = arith.constant dense<0.000000e+00> : vector<8x32xf32>
    %74 = tpu.matmul %72, %73, %cst_36 {dimension_numbers = #tpu.dot_dimension_numbers<[1], [0], [0], [1], [0, 0, 1, 1], [], []>} : vector<8x32xf32>, vector<32x32xf32>, vector<8x32xf32> -> vector<8x32xf32>
    %c0_37 = arith.constant 0 : index
    %c0_38 = arith.constant 0 : index
    %75 = vector.load %arg6[%c0_37, %c0_38] : memref<1x32xf32, #tpu.memory_space<vmem>>, vector<1x32xf32>
    %76 = vector.broadcast %75 : vector<1x32xf32> to vector<8x32xf32>
    %77 = arith.addf %74, %76 : vector<8x32xf32>
    %78 = vector.shape_cast %77 : vector<8x32xf32> to vector<1x8x32xf32>
    %c0_39 = arith.constant 0 : index
    %c0_40 = arith.constant 0 : index
    %c0_41 = arith.constant 0 : index
    %79 = vector.load %arg7[%c0_39, %c0_40, %c0_41] : memref<1x8x32xf32, #tpu.memory_space<vmem>>, vector<1x8x32xf32>
    tpu.vector_store %arg7[%c0_39, %c0_40, %c0_41], %78 {strides = array<i32>} : memref<1x8x32xf32, #tpu.memory_space<vmem>>, vector<1x8x32xf32>,
    return
  }
  func.func @transform_0(%arg0: i32) -> (i32, i32, i32) {
    %c0_i32 = arith.constant 0 : i32
    %c0_i32_0 = arith.constant 0 : i32
    %c0_i32_1 = arith.constant 0 : i32
    return %arg0, %c0_i32, %c0_i32_0 : i32, i32, i32
  }
  func.func @transform_1(%arg0: i32) -> (i32, i32, i32) {
    %c0_i32 = arith.constant 0 : i32
    %c0_i32_0 = arith.constant 0 : i32
    %c0_i32_1 = arith.constant 0 : i32
    return %arg0, %c0_i32, %c0_i32_0 : i32, i32, i32
  }
  func.func @transform_2(%arg0: i32) -> (i32, i32) {
    %c0_i32 = arith.constant 0 : i32
    %c0_i32_0 = arith.constant 0 : i32
    %c0_i32_1 = arith.constant 0 : i32
    return %c0_i32, %c0_i32_0 : i32, i32
  }
  func.func @transform_3(%arg0: i32) -> (i32, i32) {
    %c0_i32 = arith.constant 0 : i32
    %c0_i32_0 = arith.constant 0 : i32
    %c0_i32_1 = arith.constant 0 : i32
    return %c0_i32, %c0_i32_0 : i32, i32
  }
  func.func @transform_4(%arg0: i32) -> (i32, i32) {
    %c0_i32 = arith.constant 0 : i32
    %c0_i32_0 = arith.constant 0 : i32
    %c0_i32_1 = arith.constant 0 : i32
    return %c0_i32, %c0_i32_0 : i32, i32
  }
  func.func @transform_5(%arg0: i32) -> (i32, i32) {
    %c0_i32 = arith.constant 0 : i32
    %c0_i32_0 = arith.constant 0 : i32
    %c0_i32_1 = arith.constant 0 : i32
    return %c0_i32, %c0_i32_0 : i32, i32
  }
  func.func @transform_6(%arg0: i32) -> (i32, i32, i32) {
    %c0_i32 = arith.constant 0 : i32
    %c0_i32_0 = arith.constant 0 : i32
    %c0_i32_1 = arith.constant 0 : i32
    return %arg0, %c0_i32, %c0_i32_0 : i32, i32, i32
  }
}

module attributes {stable_mosaic.version = 11 : i64} {
  func.func @_fused_cross_attn_kernel(%arg0: i32, %arg1: memref<1x8x32xf32, #tpu.memory_space<vmem>>, %arg2: memref<1x16x24xf32, #tpu.memory_space<vmem>>, %arg3: memref<32x32xf32, #tpu.memory_space<vmem>>, %arg4: memref<24x64xf32, #tpu.memory_space<vmem>>, %arg5: memref<32x32xf32, #tpu.memory_space<vmem>>, %arg6: memref<1x32xf32, #tpu.memory_space<vmem>>, %arg7: memref<1x8x32xf32, #tpu.memory_space<vmem>>, %arg8: memref<8x32xf32, #tpu.memory_space<vmem>>) attributes {dimension_semantics = [#tpu.dimension_semantics<parallel>], iteration_bounds = array<i64: 2>, scalar_prefetch = 0 : i64, scratch_operands = 1 : i64, tpu.core_type = #tpu.core_type<tc>, window_params = [{transform_indices = @transform_0, window_bounds = array<i64: 1, 8, 32>}, {transform_indices = @transform_1, window_bounds = array<i64: 1, 16, 24>}, {pipeline_mode = #tpu.pipeline_mode<synchronous>, transform_indices = @transform_2, window_bounds = array<i64: 32, 32>}, {pipeline_mode = #tpu.pipeline_mode<synchronous>, transform_indices = @transform_3, window_bounds = array<i64: 24, 64>}, {pipeline_mode = #tpu.pipeline_mode<synchronous>, transform_indices = @transform_4, window_bounds = array<i64: 32, 32>}, {pipeline_mode = #tpu.pipeline_mode<synchronous>, transform_indices = @transform_5, window_bounds = array<i64: 1, 32>}, {transform_indices = @transform_6, window_bounds = array<i64: 1, 8, 32>}]} {
    %c0 = arith.constant 0 : index
    %c0_0 = arith.constant 0 : index
    %c0_1 = arith.constant 0 : index
    %0 = vector.load %arg1[%c0, %c0_0, %c0_1] : memref<1x8x32xf32, #tpu.memory_space<vmem>>, vector<1x8x32xf32>
    %1 = vector.shape_cast %0 : vector<1x8x32xf32> to vector<8x32xf32>
    %c0_2 = arith.constant 0 : index
    %c0_3 = arith.constant 0 : index
    %c0_4 = arith.constant 0 : index
    %2 = vector.load %arg2[%c0_2, %c0_3, %c0_4] : memref<1x16x24xf32, #tpu.memory_space<vmem>>, vector<1x16x24xf32>
    %3 = vector.shape_cast %2 : vector<1x16x24xf32> to vector<16x24xf32>
    %c0_5 = arith.constant 0 : index
    %c0_6 = arith.constant 0 : index
    %4 = vector.load %arg3[%c0_5, %c0_6] : memref<32x32xf32, #tpu.memory_space<vmem>>, vector<32x32xf32>
    %cst = arith.constant dense<0.000000e+00> : vector<8x32xf32>
    %5 = tpu.matmul %1, %4, %cst {dimension_numbers = #tpu.dot_dimension_numbers<[1], [0], [0], [1], [0, 0, 1, 1], [], []>} : vector<8x32xf32>, vector<32x32xf32>, vector<8x32xf32> -> vector<8x32xf32>
    %cst_7 = arith.constant 0.353553385 : f32
    %6 = vector.broadcast %cst_7 : f32 to vector<8x32xf32>
    %7 = arith.mulf %5, %6 : vector<8x32xf32>
    %c0_8 = arith.constant 0 : index
    %c0_9 = arith.constant 0 : index
    %8 = vector.load %arg4[%c0_8, %c0_9] : memref<24x64xf32, #tpu.memory_space<vmem>>, vector<24x64xf32>
    %cst_10 = arith.constant dense<0.000000e+00> : vector<16x64xf32>
    %9 = tpu.matmul %3, %8, %cst_10 {dimension_numbers = #tpu.dot_dimension_numbers<[1], [0], [0], [1], [0, 0, 1, 1], [], []>} : vector<16x24xf32>, vector<24x64xf32>, vector<16x64xf32> -> vector<16x64xf32>
    %10 = vector.extract_strided_slice %9 {offsets = [0, 0], sizes = [16, 32], strides = [1, 1]} : vector<16x64xf32> to vector<16x32xf32>
    %11 = vector.extract_strided_slice %9 {offsets = [0, 32], sizes = [16, 32], strides = [1, 1]} : vector<16x64xf32> to vector<16x32xf32>
    %12 = vector.extract_strided_slice %7 {offsets = [0, 0], sizes = [8, 8], strides = [1, 1]} : vector<8x32xf32> to vector<8x8xf32>
    %13 = vector.extract_strided_slice %10 {offsets = [0, 0], sizes = [16, 8], strides = [1, 1]} : vector<16x32xf32> to vector<16x8xf32>
    %cst_11 = arith.constant dense<0.000000e+00> : vector<8x16xf32>
    %14 = tpu.matmul %12, %13, %cst_11 {dimension_numbers = #tpu.dot_dimension_numbers<[1], [1], [0], [0], [0, 0, 1, 0], [], []>} : vector<8x8xf32>, vector<16x8xf32>, vector<8x16xf32> -> vector<8x16xf32>
    %cst_12 = arith.constant dense<0xFF800000> : vector<8xf32>
    %15 = vector.multi_reduction <maximumf>, %14, %cst_12 [1] : vector<8x16xf32> to vector<8xf32>
    %16 = vector.shape_cast %15 : vector<8xf32> to vector<8x1xf32>
    %17 = vector.broadcast %16 : vector<8x1xf32> to vector<8x16xf32>
    %18 = arith.subf %14, %17 : vector<8x16xf32>
    %19 = math.exp %18 : vector<8x16xf32>
    %cst_13 = arith.constant dense<0.000000e+00> : vector<8xf32>
    %20 = vector.multi_reduction <add>, %19, %cst_13 [1] : vector<8x16xf32> to vector<8xf32>
    %21 = vector.shape_cast %20 : vector<8xf32> to vector<8x1xf32>
    %22 = vector.broadcast %21 : vector<8x1xf32> to vector<8x16xf32>
    %23 = arith.divf %19, %22 : vector<8x16xf32>
    %24 = vector.extract_strided_slice %11 {offsets = [0, 0], sizes = [16, 8], strides = [1, 1]} : vector<16x32xf32> to vector<16x8xf32>
    %cst_14 = arith.constant dense<0.000000e+00> : vector<8x8xf32>
    %25 = tpu.matmul %23, %24, %cst_14 {dimension_numbers = #tpu.dot_dimension_numbers<[1], [0], [0], [1], [0, 0, 1, 1], [], []>} : vector<8x16xf32>, vector<16x8xf32>, vector<8x8xf32> -> vector<8x8xf32>
    %c0_15 = arith.constant 0 : index
    %c0_16 = arith.constant 0 : index
    %26 = vector.load %arg8[%c0_15, %c0_16] : memref<8x32xf32, #tpu.memory_space<vmem>>, vector<8x8xf32>
    tpu.vector_store %arg8[%c0_15, %c0_16], %25 {strides = array<i32>} : memref<8x32xf32, #tpu.memory_space<vmem>>, vector<8x8xf32>,
    %27 = vector.extract_strided_slice %7 {offsets = [0, 8], sizes = [8, 8], strides = [1, 1]} : vector<8x32xf32> to vector<8x8xf32>
    %28 = vector.extract_strided_slice %10 {offsets = [0, 8], sizes = [16, 8], strides = [1, 1]} : vector<16x32xf32> to vector<16x8xf32>
    %cst_17 = arith.constant dense<0.000000e+00> : vector<8x16xf32>
    %29 = tpu.matmul %27, %28, %cst_17 {dimension_numbers = #tpu.dot_dimension_numbers<[1], [1], [0], [0], [0, 0, 1, 0], [], []>} : vector<8x8xf32>, vector<16x8xf32>, vector<8x16xf32> -> vector<8x16xf32>
    %cst_18 = arith.constant dense<0xFF800000> : vector<8xf32>
    %30 = vector.multi_reduction <maximumf>, %29, %cst_18 [1] : vector<8x16xf32> to vector<8xf32>
    %31 = vector.shape_cast %30 : vector<8xf32> to vector<8x1xf32>
    %32 = vector.broadcast %31 : vector<8x1xf32> to vector<8x16xf32>
    %33 = arith.subf %29, %32 : vector<8x16xf32>
    %34 = math.exp %33 : vector<8x16xf32>
    %cst_19 = arith.constant dense<0.000000e+00> : vector<8xf32>
    %35 = vector.multi_reduction <add>, %34, %cst_19 [1] : vector<8x16xf32> to vector<8xf32>
    %36 = vector.shape_cast %35 : vector<8xf32> to vector<8x1xf32>
    %37 = vector.broadcast %36 : vector<8x1xf32> to vector<8x16xf32>
    %38 = arith.divf %34, %37 : vector<8x16xf32>
    %39 = vector.extract_strided_slice %11 {offsets = [0, 8], sizes = [16, 8], strides = [1, 1]} : vector<16x32xf32> to vector<16x8xf32>
    %cst_20 = arith.constant dense<0.000000e+00> : vector<8x8xf32>
    %40 = tpu.matmul %38, %39, %cst_20 {dimension_numbers = #tpu.dot_dimension_numbers<[1], [0], [0], [1], [0, 0, 1, 1], [], []>} : vector<8x16xf32>, vector<16x8xf32>, vector<8x8xf32> -> vector<8x8xf32>
    %c0_21 = arith.constant 0 : index
    %c8 = arith.constant 8 : index
    %41 = vector.load %arg8[%c0_21, %c8] : memref<8x32xf32, #tpu.memory_space<vmem>>, vector<8x8xf32>
    tpu.vector_store %arg8[%c0_21, %c8], %40 {strides = array<i32>} : memref<8x32xf32, #tpu.memory_space<vmem>>, vector<8x8xf32>,
    %42 = vector.extract_strided_slice %7 {offsets = [0, 16], sizes = [8, 8], strides = [1, 1]} : vector<8x32xf32> to vector<8x8xf32>
    %43 = vector.extract_strided_slice %10 {offsets = [0, 16], sizes = [16, 8], strides = [1, 1]} : vector<16x32xf32> to vector<16x8xf32>
    %cst_22 = arith.constant dense<0.000000e+00> : vector<8x16xf32>
    %44 = tpu.matmul %42, %43, %cst_22 {dimension_numbers = #tpu.dot_dimension_numbers<[1], [1], [0], [0], [0, 0, 1, 0], [], []>} : vector<8x8xf32>, vector<16x8xf32>, vector<8x16xf32> -> vector<8x16xf32>
    %cst_23 = arith.constant dense<0xFF800000> : vector<8xf32>
    %45 = vector.multi_reduction <maximumf>, %44, %cst_23 [1] : vector<8x16xf32> to vector<8xf32>
    %46 = vector.shape_cast %45 : vector<8xf32> to vector<8x1xf32>
    %47 = vector.broadcast %46 : vector<8x1xf32> to vector<8x16xf32>
    %48 = arith.subf %44, %47 : vector<8x16xf32>
    %49 = math.exp %48 : vector<8x16xf32>
    %cst_24 = arith.constant dense<0.000000e+00> : vector<8xf32>
    %50 = vector.multi_reduction <add>, %49, %cst_24 [1] : vector<8x16xf32> to vector<8xf32>
    %51 = vector.shape_cast %50 : vector<8xf32> to vector<8x1xf32>
    %52 = vector.broadcast %51 : vector<8x1xf32> to vector<8x16xf32>
    %53 = arith.divf %49, %52 : vector<8x16xf32>
    %54 = vector.extract_strided_slice %11 {offsets = [0, 16], sizes = [16, 8], strides = [1, 1]} : vector<16x32xf32> to vector<16x8xf32>
    %cst_25 = arith.constant dense<0.000000e+00> : vector<8x8xf32>
    %55 = tpu.matmul %53, %54, %cst_25 {dimension_numbers = #tpu.dot_dimension_numbers<[1], [0], [0], [1], [0, 0, 1, 1], [], []>} : vector<8x16xf32>, vector<16x8xf32>, vector<8x8xf32> -> vector<8x8xf32>
    %c0_26 = arith.constant 0 : index
    %c16 = arith.constant 16 : index
    %56 = vector.load %arg8[%c0_26, %c16] : memref<8x32xf32, #tpu.memory_space<vmem>>, vector<8x8xf32>
    tpu.vector_store %arg8[%c0_26, %c16], %55 {strides = array<i32>} : memref<8x32xf32, #tpu.memory_space<vmem>>, vector<8x8xf32>,
    %57 = vector.extract_strided_slice %7 {offsets = [0, 24], sizes = [8, 8], strides = [1, 1]} : vector<8x32xf32> to vector<8x8xf32>
    %58 = vector.extract_strided_slice %10 {offsets = [0, 24], sizes = [16, 8], strides = [1, 1]} : vector<16x32xf32> to vector<16x8xf32>
    %cst_27 = arith.constant dense<0.000000e+00> : vector<8x16xf32>
    %59 = tpu.matmul %57, %58, %cst_27 {dimension_numbers = #tpu.dot_dimension_numbers<[1], [1], [0], [0], [0, 0, 1, 0], [], []>} : vector<8x8xf32>, vector<16x8xf32>, vector<8x16xf32> -> vector<8x16xf32>
    %cst_28 = arith.constant dense<0xFF800000> : vector<8xf32>
    %60 = vector.multi_reduction <maximumf>, %59, %cst_28 [1] : vector<8x16xf32> to vector<8xf32>
    %61 = vector.shape_cast %60 : vector<8xf32> to vector<8x1xf32>
    %62 = vector.broadcast %61 : vector<8x1xf32> to vector<8x16xf32>
    %63 = arith.subf %59, %62 : vector<8x16xf32>
    %64 = math.exp %63 : vector<8x16xf32>
    %cst_29 = arith.constant dense<0.000000e+00> : vector<8xf32>
    %65 = vector.multi_reduction <add>, %64, %cst_29 [1] : vector<8x16xf32> to vector<8xf32>
    %66 = vector.shape_cast %65 : vector<8xf32> to vector<8x1xf32>
    %67 = vector.broadcast %66 : vector<8x1xf32> to vector<8x16xf32>
    %68 = arith.divf %64, %67 : vector<8x16xf32>
    %69 = vector.extract_strided_slice %11 {offsets = [0, 24], sizes = [16, 8], strides = [1, 1]} : vector<16x32xf32> to vector<16x8xf32>
    %cst_30 = arith.constant dense<0.000000e+00> : vector<8x8xf32>
    %70 = tpu.matmul %68, %69, %cst_30 {dimension_numbers = #tpu.dot_dimension_numbers<[1], [0], [0], [1], [0, 0, 1, 1], [], []>} : vector<8x16xf32>, vector<16x8xf32>, vector<8x8xf32> -> vector<8x8xf32>
    %c0_31 = arith.constant 0 : index
    %c24 = arith.constant 24 : index
    %71 = vector.load %arg8[%c0_31, %c24] : memref<8x32xf32, #tpu.memory_space<vmem>>, vector<8x8xf32>
    tpu.vector_store %arg8[%c0_31, %c24], %70 {strides = array<i32>} : memref<8x32xf32, #tpu.memory_space<vmem>>, vector<8x8xf32>,
    %c0_32 = arith.constant 0 : index
    %c0_33 = arith.constant 0 : index
    %72 = vector.load %arg8[%c0_32, %c0_33] : memref<8x32xf32, #tpu.memory_space<vmem>>, vector<8x32xf32>
    %c0_34 = arith.constant 0 : index
    %c0_35 = arith.constant 0 : index
    %73 = vector.load %arg5[%c0_34, %c0_35] : memref<32x32xf32, #tpu.memory_space<vmem>>, vector<32x32xf32>
    %cst_36 = arith.constant dense<0.000000e+00> : vector<8x32xf32>
    %74 = tpu.matmul %72, %73, %cst_36 {dimension_numbers = #tpu.dot_dimension_numbers<[1], [0], [0], [1], [0, 0, 1, 1], [], []>} : vector<8x32xf32>, vector<32x32xf32>, vector<8x32xf32> -> vector<8x32xf32>
    %c0_37 = arith.constant 0 : index
    %c0_38 = arith.constant 0 : index
    %75 = vector.load %arg6[%c0_37, %c0_38] : memref<1x32xf32, #tpu.memory_space<vmem>>, vector<1x32xf32>
    %76 = vector.broadcast %75 : vector<1x32xf32> to vector<8x32xf32>
    %77 = arith.addf %74, %76 : vector<8x32xf32>
    %78 = vector.shape_cast %77 : vector<8x32xf32> to vector<1x8x32xf32>
    %c0_39 = arith.constant 0 : index
    %c0_40 = arith.constant 0 : index
    %c0_41 = arith.constant 0 : index
    %79 = vector.load %arg7[%c0_39, %c0_40, %c0_41] : memref<1x8x32xf32, #tpu.memory_space<vmem>>, vector<1x8x32xf32>
    tpu.vector_store %arg7[%c0_39, %c0_40, %c0_41], %78 {strides = array<i32>} : memref<1x8x32xf32, #tpu.memory_space<vmem>>, vector<1x8x32xf32>,
    return
  }
  func.func @transform_0(%arg0: i32) -> (i32, i32, i32) {
    %c0_i32 = arith.constant 0 : i32
    %c0_i32_0 = arith.constant 0 : i32
    %c0_i32_1 = arith.constant 0 : i32
    return %arg0, %c0_i32, %c0_i32_0 : i32, i32, i32
  }
  func.func @transform_1(%arg0: i32) -> (i32, i32, i32) {
    %c0_i32 = arith.constant 0 : i32
    %c0_i32_0 = arith.constant 0 : i32
    %c0_i32_1 = arith.constant 0 : i32
    return %arg0, %c0_i32, %c0_i32_0 : i32, i32, i32
  }
  func.func @transform_2(%arg0: i32) -> (i32, i32) {
    %c0_i32 = arith.constant 0 : i32
    %c0_i32_0 = arith.constant 0 : i32
    %c0_i32_1 = arith.constant 0 : i32
    return %c0_i32, %c0_i32_0 : i32, i32
  }
  func.func @transform_3(%arg0: i32) -> (i32, i32) {
    %c0_i32 = arith.constant 0 : i32
    %c0_i32_0 = arith.constant 0 : i32
    %c0_i32_1 = arith.constant 0 : i32
    return %c0_i32, %c0_i32_0 : i32, i32
  }
  func.func @transform_4(%arg0: i32) -> (i32, i32) {
    %c0_i32 = arith.constant 0 : i32
    %c0_i32_0 = arith.constant 0 : i32
    %c0_i32_1 = arith.constant 0 : i32
    return %c0_i32, %c0_i32_0 : i32, i32
  }
  func.func @transform_5(%arg0: i32) -> (i32, i32) {
    %c0_i32 = arith.constant 0 : i32
    %c0_i32_0 = arith.constant 0 : i32
    %c0_i32_1 = arith.constant 0 : i32
    return %c0_i32, %c0_i32_0 : i32, i32
  }
  func.func @transform_6(%arg0: i32) -> (i32, i32, i32) {
    %c0_i32 = arith.constant 0 : i32
    %c0_i32_0 = arith.constant 0 : i32
    %c0_i32_1 = arith.constant 0 : i32
    return %arg0, %c0_i32, %c0_i32_0 : i32, i32, i32
  }
}

</mosaic_0001>

<llo_original>
// kernel: tpu_custom_call.1
$region0: #{tpu_custom_call.1}
  #allocation0 [shape = 'u32[]', space=smem, size = 0x4, offset = 0x4, fixed_abs, tag = 'smem constant byte address 0x4 - core index']
  #allocation1 [shape = 'u32[144,128]{1,0:T(1,128)}', space=vmem, size = 0x12000, scoped, tag = 'internal scratch']
  #allocation2 [shape = 'f32[8,32]{1,0:T(8,128)}', space=vmem, size = 0x1000, scoped, tag = 'scratch operand']
  %s0 = inlined_call_operand.hbm [shape: f32[2,8,32], index: 0, kind: input, shape index: {}]
  %s1 = inlined_call_operand.hbm [shape: f32[2,16,24], index: 1, kind: input, shape index: {}]
  %s2 = inlined_call_operand.hbm [shape: f32[32,32], index: 2, kind: input, shape index: {}]
  %s3 = inlined_call_operand.hbm [shape: f32[24,64], index: 3, kind: input, shape index: {}]
  %s4 = inlined_call_operand.hbm [shape: f32[32,32], index: 4, kind: input, shape index: {}]
  %s5 = inlined_call_operand.hbm [shape: f32[1,32], index: 5, kind: input, shape index: {}]
  %s6 = inlined_call_operand.hbm [shape: f32[2,8,32], index: 6, kind: output, shape index: {}]
  %s7 = sld [smem:[#allocation0]]
  $region81: #{tpu_custom_call.1} parent=0
    _
  %s9 = ssub.s32 1, %s7
  %s10 = scalar_select 0, %s9, %s7
  $region1: #{tpu_custom_call.1} parent=0
    #allocation3 [shape = 'u8[8192]{0}', space=vmem, size = 0x2000, scoped, tag = 'input window, operand 0']
    #allocation4 [shape = 's32[2]{0}', space=sflag, size = 0x8, scoped, tag = 'scoped memory for tpu_custom_call.1']
    #allocation5 [shape = 's32[2]{0}', space=sflag, size = 0x8, scoped, tag = 'scoped memory for tpu_custom_call.1']
    #allocation6 [shape = 'u8[16384]{0}', space=vmem, size = 0x4000, scoped, tag = 'input window, operand 1']
    #allocation7 [shape = 's32[2]{0}', space=sflag, size = 0x8, scoped, tag = 'scoped memory for tpu_custom_call.1']
    #allocation8 [shape = 'u8[16384]{0}', space=vmem, size = 0x4000, scoped, tag = 'input window, operand 2, single buffered']
    #allocation9 [shape = 'u8[12288]{0}', space=vmem, size = 0x3000, scoped, tag = 'input window, operand 3, single buffered']
    #allocation10 [shape = 's32[1]{0}', space=sflag, size = 0x4, scoped, tag = 'scoped memory for tpu_custom_call.1']
    #allocation11 [shape = 'u8[16384]{0}', space=vmem, size = 0x4000, scoped, tag = 'input window, operand 4, single buffered']
    #allocation12 [shape = 'u8[512]{0}', space=vmem, size = 0x400, scoped, tag = 'input window, operand 5, single buffered']
    #allocation13 [shape = 's32[1]{0}', space=sflag, size = 0x4, scoped, tag = 'scoped memory for tpu_custom_call.1']
    #allocation14 [shape = 'u8[8192]{0}', space=vmem, size = 0x2000, scoped, tag = 'output window, operand 0']
    %11 = vsyncpa [#allocation4], 0
    %s12 = scalar_lea.sflag [#allocation4], 1
    %13 = vsyncpa %s12, 0
    %14 = vsyncpa [#allocation7], 0
    %s15 = scalar_lea.sflag [#allocation7], 1
    %16 = vsyncpa %s15, 0
    %17 = vsyncpa [#allocation10], 0
    %18 = vsyncpa [#allocation13], 0
    %19 = vsyncpa [#allocation5], 0
    %s20 = scalar_lea.sflag [#allocation5], 1
    %21 = vsyncpa %s20, 0
    loop: start=0, step=1, limit=4
    $region2: #{tpu_custom_call.1} parent=1 // loop_pre_header
      _
    $region3: #{tpu_custom_call.1} parent=1 // loop_header
      %s23 = sphi 0, %s27
      %p24 = scmp.ge.s32.totalorder %s23, 4
      %s33 = sphi 0, %s35
      %s36 = sphi 0, %s33
      %s37 = sphi 0, %s36
      %s53 = sphi 0, %s37
      %s59 = sphi 0, %s61
      %s62 = sphi 0, %s59
      %s63 = sphi 0, %s62
      %s79 = sphi 0, %s63
      %s83 = sphi 0, %s83
      %s85 = sphi 0, %s83
      %s86 = sphi 0, %s85
      %s100 = sphi 0, %s86
      %s104 = sphi 0, %s104
      %s106 = sphi 0, %s104
      %s107 = sphi 0, %s106
      %s121 = sphi 0, %s107
      %s125 = sphi 0, %s125
      %s127 = sphi 0, %s125
      %s128 = sphi 0, %s127
      %s142 = sphi 0, %s128
      %s146 = sphi 0, %s146
      %s148 = sphi 0, %s146
      %s149 = sphi 0, %s148
      %s163 = sphi 0, %s149
      %s169 = sphi 0, %s171
      %s172 = sphi 0, %s169
      %s173 = sphi 0, %s172
      %s189 = sphi 0, %s173
    $region4: #{tpu_custom_call.1} parent=1 // loop_header_branch
      %26 = sbr.rel (%p24) target = $region8
    $region5: #{tpu_custom_call.1} parent=1 // loop_body
      %s28 = ssub.s32 %s23, 1
      %s29 = ssub.s32 %s23, 2
      %s30 = sadd.s32 %s23, 1
      %s31 = ssub.s32 %s23, %s30
      %p32 = scmp.eq.s32.totalorder %s31, 0
      %s34 = sadd.s32 %s33, 1
      %s35 = scalar_select %p32, %s33, %s34
      %p38 = pneg %p32
      %p39 = scmp.eq.s32.totalorder %s23, 1
      %p40 = por %p38, %p39
      %p41 = scmp.ne.s32.totalorder %s33, %s36
      %p42 = scmp.eq.s32.totalorder %s23, 0
      %p43 = por %p41, %p42
      %p44 = scmp.ne.s32.totalorder %s33, %s36
      %p45 = scmp.eq.s32.totalorder %s28, 1
      %p46 = por %p44, %p45
      %p47 = scmp.ne.s32.totalorder %s36, %s37
      %p48 = scmp.eq.s32.totalorder %s28, 0
      %p49 = por %p47, %p48
      %p50 = scmp.ne.s32.totalorder %s36, %s37
      %p51 = scmp.eq.s32.totalorder %s29, 1
      %p52 = por %p50, %p51
      %p54 = scmp.ne.s32.totalorder %s37, %s53
      %p55 = scmp.eq.s32.totalorder %s29, 0
      %p56 = por %p54, %p55
      %s57 = ssub.s32 %s23, %s30
      %p58 = scmp.eq.s32.totalorder %s57, 0
      %s60 = sadd.s32 %s59, 1
      %s61 = scalar_select %p58, %s59, %s60
      %p64 = pneg %p58
      %p65 = scmp.eq.s32.totalorder %s23, 1
      %p66 = por %p64, %p65
      %p67 = scmp.ne.s32.totalorder %s59, %s62
      %p68 = scmp.eq.s32.totalorder %s23, 0
      %p69 = por %p67, %p68
      %p70 = scmp.ne.s32.totalorder %s59, %s62
      %p71 = scmp.eq.s32.totalorder %s28, 1
      %p72 = por %p70, %p71
      %p73 = scmp.ne.s32.totalorder %s62, %s63
      %p74 = scmp.eq.s32.totalorder %s28, 0
      %p75 = por %p73, %p74
      %p76 = scmp.ne.s32.totalorder %s62, %s63
      %p77 = scmp.eq.s32.totalorder %s29, 1
      %p78 = por %p76, %p77
      %p80 = scmp.ne.s32.totalorder %s63, %s79
      %p81 = scmp.eq.s32.totalorder %s29, 0
      %p82 = por %p80, %p81
      %s84 = sadd.s32 %s83, 1
      %p87 = scmp.eq.s32.totalorder %s23, 1
      %p88 = scmp.ne.s32.totalorder %s83, %s85
      %p89 = scmp.eq.s32.totalorder %s23, 0
      %p90 = por %p88, %p89
      %p91 = scmp.ne.s32.totalorder %s83, %s85
      %p92 = scmp.eq.s32.totalorder %s28, 1
      %p93 = por %p91, %p92
      %p94 = scmp.ne.s32.totalorder %s85, %s86
      %p95 = scmp.eq.s32.totalorder %s28, 0
      %p96 = por %p94, %p95
      %p97 = scmp.ne.s32.totalorder %s85, %s86
      %p98 = scmp.eq.s32.totalorder %s29, 1
      %p99 = por %p97, %p98
      %p101 = scmp.ne.s32.totalorder %s86, %s100
      %p102 = scmp.eq.s32.totalorder %s29, 0
      %p103 = por %p101, %p102
      %s105 = sadd.s32 %s104, 1
      %p108 = scmp.eq.s32.totalorder %s23, 1
      %p109 = scmp.ne.s32.totalorder %s104, %s106
      %p110 = scmp.eq.s32.totalorder %s23, 0
      %p111 = por %p109, %p110
      %p112 = scmp.ne.s32.totalorder %s104, %s106
      %p113 = scmp.eq.s32.totalorder %s28, 1
      %p114 = por %p112, %p113
      %p115 = scmp.ne.s32.totalorder %s106, %s107
      %p116 = scmp.eq.s32.totalorder %s28, 0
      %p117 = por %p115, %p116
      %p118 = scmp.ne.s32.totalorder %s106, %s107
      %p119 = scmp.eq.s32.totalorder %s29, 1
      %p120 = por %p118, %p119
      %p122 = scmp.ne.s32.totalorder %s107, %s121
      %p123 = scmp.eq.s32.totalorder %s29, 0
      %p124 = por %p122, %p123
      %s126 = sadd.s32 %s125, 1
      %p129 = scmp.eq.s32.totalorder %s23, 1
      %p130 = scmp.ne.s32.totalorder %s125, %s127
      %p131 = scmp.eq.s32.totalorder %s23, 0
      %p132 = por %p130, %p131
      %p133 = scmp.ne.s32.totalorder %s125, %s127
      %p134 = scmp.eq.s32.totalorder %s28, 1
      %p135 = por %p133, %p134
      %p136 = scmp.ne.s32.totalorder %s127, %s128
      %p137 = scmp.eq.s32.totalorder %s28, 0
      %p138 = por %p136, %p137
      %p139 = scmp.ne.s32.totalorder %s127, %s128
      %p140 = scmp.eq.s32.totalorder %s29, 1
      %p141 = por %p139, %p140
      %p143 = scmp.ne.s32.totalorder %s128, %s142
      %p144 = scmp.eq.s32.totalorder %s29, 0
      %p145 = por %p143, %p144
      %s147 = sadd.s32 %s146, 1
      %p150 = scmp.eq.s32.totalorder %s23, 1
      %p151 = scmp.ne.s32.totalorder %s146, %s148
      %p152 = scmp.eq.s32.totalorder %s23, 0
      %p153 = por %p151, %p152
      %p154 = scmp.ne.s32.totalorder %s146, %s148
      %p155 = scmp.eq.s32.totalorder %s28, 1
      %p156 = por %p154, %p155
      %p157 = scmp.ne.s32.totalorder %s148, %s149
      %p158 = scmp.eq.s32.totalorder %s28, 0
      %p159 = por %p157, %p158
      %p160 = scmp.ne.s32.totalorder %s148, %s149
      %p161 = scmp.eq.s32.totalorder %s29, 1
      %p162 = por %p160, %p161
      %p164 = scmp.ne.s32.totalorder %s149, %s163
      %p165 = scmp.eq.s32.totalorder %s29, 0
      %p166 = por %p164, %p165
      %s167 = ssub.s32 %s23, %s30
      %p168 = scmp.eq.s32.totalorder %s167, 0
      %s170 = sadd.s32 %s169, 1
      %s171 = scalar_select %p168, %s169, %s170
      %p174 = pneg %p168
      %p175 = scmp.eq.s32.totalorder %s23, 1
      %p176 = por %p174, %p175
      %p177 = scmp.ne.s32.totalorder %s169, %s172
      %p178 = scmp.eq.s32.totalorder %s23, 0
      %p179 = por %p177, %p178
      %p180 = scmp.ne.s32.totalorder %s169, %s172
      %p181 = scmp.eq.s32.totalorder %s28, 1
      %p182 = por %p180, %p181
      %p183 = scmp.ne.s32.totalorder %s172, %s173
      %p184 = scmp.eq.s32.totalorder %s28, 0
      %p185 = por %p183, %p184
      %p186 = scmp.ne.s32.totalorder %s172, %s173
      %p187 = scmp.eq.s32.totalorder %s29, 1
      %p188 = por %p186, %p187
      %p190 = scmp.ne.s32.totalorder %s173, %s189
      %p191 = scmp.eq.s32.totalorder %s29, 0
      %p192 = por %p190, %p191
      %p193 = scmp.le.s32.totalorder 1, %s23
      %p194 = scmp.lt.s32.totalorder %s23, 3
      %p195 = pnand %p193, %p194
      %p196 = pneg %p195
      // Predicated region
      $region9: #{tpu_custom_call.1} parent=5 // pred_check
        _
      $region10: #{tpu_custom_call.1} parent=5 // pred_check_branch
        %198 = sbr.rel (%p195) target = $region12
      $region11: #{tpu_custom_call.1} parent=5 // pred_region
        %s199 = ssub.s32 %s23, 1
        // Predicated region
        $region13: #{tpu_custom_call.1} parent=11 // pred_check
          %p200 = pneg %p96
        $region14: #{tpu_custom_call.1} parent=11 // pred_check_branch
          %202 = sbr.rel (%p200) target = $region16
        $region15: #{tpu_custom_call.1} parent=11 // pred_region
          %s204 = ssub.s32 512, 512
          %205 = vsyncadd [#allocation7], %s204
          %s206 = sshll.u32 [#allocation8], 4
          %s207 = int_to_ptr.vmem [resolvable:$true] %s206
          %212 = dma.hbm_to_vmem [thread:$0]  %s2, 512, %s207, [#allocation7], 128, 128, 8
        $region16: #{tpu_custom_call.1} parent=11 // pred_fallthru
          _
        // Predicated region
        $region17: #{tpu_custom_call.1} parent=11 // pred_check
          %p213 = pneg %p117
        $region18: #{tpu_custom_call.1} parent=11 // pred_check_branch
          %215 = sbr.rel (%p213) target = $region20
        $region19: #{tpu_custom_call.1} parent=11 // pred_region
          %s217 = ssub.s32 384, 384
          %218 = vsyncadd [#allocation10], %s217
          %s219 = sshll.u32 [#allocation9], 4
          %s220 = int_to_ptr.vmem [resolvable:$true] %s219
          %225 = dma.hbm_to_vmem [thread:$0]  %s3, 384, %s220, [#allocation10], 128, 128, 8
        $region20: #{tpu_custom_call.1} parent=11 // pred_fallthru
          _
        // Predicated region
        $region21: #{tpu_custom_call.1} parent=11 // pred_check
          %p226 = pneg %p138
        $region22: #{tpu_custom_call.1} parent=11 // pred_check_branch
          %228 = sbr.rel (%p226) target = $region24
        $region23: #{tpu_custom_call.1} parent=11 // pred_region
          %s230 = ssub.s32 512, 512
          %231 = vsyncadd [#allocation10], %s230
          %s232 = sshll.u32 [#allocation11], 4
          %s233 = int_to_ptr.vmem [resolvable:$true] %s232
          %238 = dma.hbm_to_vmem [thread:$0]  %s4, 512, %s233, [#allocation10], 128, 128, 8
        $region24: #{tpu_custom_call.1} parent=11 // pred_fallthru
          _
        // Predicated region
        $region25: #{tpu_custom_call.1} parent=11 // pred_check
          %p239 = pneg %p159
        $region26: #{tpu_custom_call.1} parent=11 // pred_check_branch
          %241 = sbr.rel (%p239) target = $region28
        $region27: #{tpu_custom_call.1} parent=11 // pred_region
          %s243 = ssub.s32 16, 16
          %244 = vsyncadd [#allocation13], %s243
          %s246 = sshll.u32 [#allocation12], 4
          %s247 = int_to_ptr.vmem [resolvable:$true] %s246
          %249 = dma.hbm_to_vmem [thread:$0]  %s5, 16, %s247, [#allocation13]
        $region28: #{tpu_custom_call.1} parent=11 // pred_fallthru
          _
      $region12: #{tpu_custom_call.1} parent=5 // pred_fallthru
        _
      %p250 = scmp.lt.s32.totalorder %s23, 2
      // Predicated region
      $region29: #{tpu_custom_call.1} parent=5 // pred_check
        %p251 = pneg %p250
      $region30: #{tpu_custom_call.1} parent=5 // pred_check_branch
        %253 = sbr.rel (%p251) target = $region32
      $region31: #{tpu_custom_call.1} parent=5 // pred_region
        // Predicated region
        $region33: #{tpu_custom_call.1} parent=31 // pred_check
          %p254 = pneg %p43
        $region34: #{tpu_custom_call.1} parent=31 // pred_check_branch
          %256 = sbr.rel (%p254) target = $region36
        $region35: #{tpu_custom_call.1} parent=31 // pred_region
          %s257 = sand.u32 %s33, 1
          %s258 = scalar_lea.sflag [#allocation4], %s257
          %s259 = sand.u32 %s33, 1
          %s260 = smul.addr %s259, 8
          %s261 = scalar_lea.vmem [#allocation3], %s260
          %s263 = ssub.s32 128, 128
          %264 = vsyncadd %s258, %s263
          %s265 = smul.addr %s23, 128
          %s266 = scalar_lea.hbm %s0, %s265
          %s268 = sshll.u32 %s261, 4
          %s269 = int_to_ptr.vmem [resolvable:$true] %s268
          %271 = dma.hbm_to_vmem [thread:$0]  %s266, 128, %s269, %s258
        $region36: #{tpu_custom_call.1} parent=31 // pred_fallthru
          _
        // Predicated region
        $region37: #{tpu_custom_call.1} parent=31 // pred_check
          %p272 = pneg %p69
        $region38: #{tpu_custom_call.1} parent=31 // pred_check_branch
          %274 = sbr.rel (%p272) target = $region40
        $region39: #{tpu_custom_call.1} parent=31 // pred_region
          %s275 = sand.u32 %s23, 1
          %s276 = scalar_lea.sflag [#allocation7], %s275
          %s277 = sand.u32 %s59, 1
          %s278 = smul.addr %s277, 16
          %s279 = scalar_lea.vmem [#allocation6], %s278
          %s281 = ssub.s32 256, 256
          %282 = vsyncadd %s276, %s281
          %s283 = smul.addr %s23, 2
          %s284 = smul.addr %s283, 128
          %s285 = scalar_lea.hbm %s1, %s284
          %s286 = sshll.u32 %s279, 4
          %s287 = int_to_ptr.vmem [resolvable:$true] %s286
          %292 = dma.hbm_to_vmem [thread:$0]  %s285, 256, %s287, %s276, 128, 128, 8
        $region40: #{tpu_custom_call.1} parent=31 // pred_fallthru
          _
      $region32: #{tpu_custom_call.1} parent=5 // pred_fallthru
        _
      %p293 = scmp.le.s32.totalorder 1, %s23
      %p294 = scmp.lt.s32.totalorder %s23, 3
      %p295 = pnand %p293, %p294
      %p296 = pneg %p295
      // Predicated region
      $region41: #{tpu_custom_call.1} parent=5 // pred_check
        _
      $region42: #{tpu_custom_call.1} parent=5 // pred_check_branch
        %298 = sbr.rel (%p295) target = $region44
      $region43: #{tpu_custom_call.1} parent=5 // pred_region
        %s299 = ssub.s32 %s23, 1
        %s300 = sand.u32 %s36, 1
        %s301 = scalar_lea.sflag [#allocation4], %s300
        %s302 = sand.u32 %s36, 1
        %s303 = smul.addr %s302, 8
        %s304 = scalar_lea.vmem [#allocation3], %s303
        // Predicated region
        $region45: #{tpu_custom_call.1} parent=43 // pred_check
          %p305 = pneg %p49
        $region46: #{tpu_custom_call.1} parent=43 // pred_check_branch
          %307 = sbr.rel (%p305) target = $region48
        $region47: #{tpu_custom_call.1} parent=43 // pred_region
          %308 = dma.done %s301, 128
        $region48: #{tpu_custom_call.1} parent=43 // pred_fallthru
          _
        %s309 = sand.u32 %s28, 1
        %s310 = scalar_lea.sflag [#allocation7], %s309
        %s311 = sand.u32 %s62, 1
        %s312 = smul.addr %s311, 16
        %s313 = scalar_lea.vmem [#allocation6], %s312
        // Predicated region
        $region49: #{tpu_custom_call.1} parent=43 // pred_check
          %p314 = pneg %p75
        $region50: #{tpu_custom_call.1} parent=43 // pred_check_branch
          %316 = sbr.rel (%p314) target = $region52
        $region51: #{tpu_custom_call.1} parent=43 // pred_region
          %317 = dma.done %s310, 256
        $region52: #{tpu_custom_call.1} parent=43 // pred_fallthru
          _
        // Predicated region
        $region53: #{tpu_custom_call.1} parent=43 // pred_check
          %p318 = pneg %p96
        $region54: #{tpu_custom_call.1} parent=43 // pred_check_branch
          %320 = sbr.rel (%p318) target = $region56
        $region55: #{tpu_custom_call.1} parent=43 // pred_region
          %321 = dma.done [#allocation7], 512
        $region56: #{tpu_custom_call.1} parent=43 // pred_fallthru
          _
        // Predicated region
        $region57: #{tpu_custom_call.1} parent=43 // pred_check
          %p322 = pneg %p117
        $region58: #{tpu_custom_call.1} parent=43 // pred_check_branch
          %324 = sbr.rel (%p322) target = $region60
        $region59: #{tpu_custom_call.1} parent=43 // pred_region
          %325 = dma.done [#allocation10], 384
        $region60: #{tpu_custom_call.1} parent=43 // pred_fallthru
          _
        // Predicated region
        $region61: #{tpu_custom_call.1} parent=43 // pred_check
          %p326 = pneg %p138
        $region62: #{tpu_custom_call.1} parent=43 // pred_check_branch
          %328 = sbr.rel (%p326) target = $region64
        $region63: #{tpu_custom_call.1} parent=43 // pred_region
          %329 = dma.done [#allocation10], 512
        $region64: #{tpu_custom_call.1} parent=43 // pred_fallthru
          _
        // Predicated region
        $region65: #{tpu_custom_call.1} parent=43 // pred_check
          %p330 = pneg %p159
        $region66: #{tpu_custom_call.1} parent=43 // pred_check_branch
          %332 = sbr.rel (%p330) target = $region68
        $region67: #{tpu_custom_call.1} parent=43 // pred_region
          %333 = dma.done [#allocation13], 16
        $region68: #{tpu_custom_call.1} parent=43 // pred_fallthru
          _
        %s334 = sand.u32 %s36, 1
        %s335 = scalar_lea.sflag [#allocation4], %s334
        %s336 = sand.u32 %s36, 1
        %s337 = smul.addr %s336, 8
        %s338 = scalar_lea.vmem [#allocation3], %s337
        %p339 = pneg %p49
        %p340 = pneg %p46
        %s341 = sand.u32 %s28, 1
        %s342 = scalar_lea.sflag [#allocation7], %s341
        %s343 = sand.u32 %s62, 1
        %s344 = smul.addr %s343, 16
        %s345 = scalar_lea.vmem [#allocation6], %s344
        %p346 = pneg %p75
        %p347 = pneg %p72
        %p348 = pneg %p96
        %p349 = pneg %p93
        %p350 = pneg %p117
        %p351 = pneg %p114
        %p352 = pneg %p138
        %p353 = pneg %p135
        %p354 = pneg %p159
        %p355 = pneg %p156
        %p356 = pneg %p185
        %p357 = pneg %p182
        %s358 = sand.u32 %s172, 1
        %s359 = scalar_lea.sflag [#allocation5], %s358
        %s360 = sand.u32 %s172, 1
        %s361 = smul.addr %s360, 8
        %s362 = scalar_lea.vmem [#allocation14], %s361
        %v363 = vld [vmem:[%s304] sm:$0xff]
        %v364 = vld [vmem:[%s313] sm:$0xff]
        %v365 = vld [vmem:[%s313 + $0x8] sm:$0xff]
        %v366 = vld [vmem:[#allocation8] sm:$0xff]
        %v367 = vld [vmem:[#allocation8 + $0x8] sm:$0xff]
        %v368 = vld [vmem:[#allocation8 + $0x10] sm:$0xff]
        %v369 = vld [vmem:[#allocation8 + $0x18] sm:$0xff]
        %vm370 = vcmask 261120
        %v372 = vsel %vm370, %v363, 0
        %374 = vmatprep.subr.mxu0 0.0
        %375 = vmatpush1.msra.mxu0 %v366
        %376 = vmatprep.subr.mxu0 0.0
        %377 = vmatpush1.msra.mxu0 %v367
        %378 = vmatprep.subr.mxu0 0.0
        %379 = vmatpush1.msra.mxu0 %v368
        %380 = vmatprep.subr.mxu0 0.0
        %381 = vmatpush1.msra.mxu0 %v369
        %382 = vmatprep.subr.mxu0 0.0
        %383 = vmatpush1.msra.mxu0 0.0
        %384 = vmatprep.subr.mxu0 0.0
        %385 = vmatpush1.msra.mxu0 0.0
        %386 = vmatprep.subr.mxu0 0.0
        %387 = vmatpush1.msra.mxu0 0.0
        %388 = vmatprep.subr.mxu0 0.0
        %389 = vmatpush1.msra.mxu0 0.0
        %390 = vmatprep.subr.mxu0 0.0
        %391 = vmatpush1.msra.mxu0 0.0
        %392 = vmatprep.subr.mxu0 0.0
        %393 = vmatpush1.msra.mxu0 0.0
        %394 = vmatprep.subr.mxu0 0.0
        %395 = vmatpush1.msra.mxu0 0.0
        %396 = vmatprep.subr.mxu0 0.0
        %397 = vmatpush1.msra.mxu0 0.0
        %398 = vmatprep.subr.mxu0 0.0
        %399 = vmatpush1.msra.mxu0 0.0
        %400 = vmatprep.subr.mxu0 0.0
        %401 = vmatpush1.msra.mxu0 0.0
        %402 = vmatprep.subr.mxu0 0.0
        %403 = vmatpush1.msra.mxu0 0.0
        %404 = vmatprep.subr.mxu0 0.0
        %405 = vmatpush1.msra.mxu0 0.0
        %406 = vmatprep.subr.mxu0 0.0
        %407 = vmatpush1.msra.mxu0 0.0
        %408 = vmatprep.subr.mxu0 0.0
        %409 = vmatpush1.msra.mxu0 0.0
        %410 = vmatprep.subr.mxu0 0.0
        %411 = vmatpush1.msra.mxu0 0.0
        %412 = vmatprep.subr.mxu0 0.0
        %413 = vmatpush1.msra.mxu0 0.0
        %414 = vmatprep.subr.mxu0 0.0
        %415 = vmatpush1.msra.mxu0 0.0
        %416 = vmatprep.subr.mxu0 0.0
        %417 = vmatpush1.msra.mxu0 0.0
        %418 = vmatprep.subr.mxu0 0.0
        %419 = vmatpush1.msra.mxu0 0.0
        %420 = vmatprep.subr.mxu0 0.0
        %421 = vmatpush1.msra.mxu0 0.0
        %422 = vmatprep.subr.mxu0 0.0
        %423 = vmatpush1.msra.mxu0 0.0
        %424 = vmatprep.subr.mxu0 0.0
        %425 = vmatpush1.msra.mxu0 0.0
        %426 = vmatprep.subr.mxu0 0.0
        %427 = vmatpush1.msra.mxu0 0.0
        %428 = vmatprep.subr.mxu0 0.0
        %429 = vmatpush1.msra.mxu0 0.0
        %430 = vmatprep.subr.mxu0 0.0
        %431 = vmatpush1.msra.mxu0 0.0
        %432 = vmatprep.subr.mxu0 0.0
        %433 = vmatpush1.msra.mxu0 0.0
        %434 = vmatprep.subr.mxu0 0.0
        %435 = vmatpush1.msra.mxu0 0.0
        %436 = vmatprep.subr.mxu0 0.0
        %437 = vmatpush1.msra.mxu0 0.0
        %438 = vmatprep.mubr.f32.mxu0 0.0
        %439 = vmatmul.mubr.f32.gmra.mrb[0].mxu0 %v372
        %v440 = vpop.f32.mrb[0].mxu0
        %v441 = vadd.f32 0.0, %v440
        %v442 = vpop.f32.mrb[0].mxu0
        %443 = vdwg.mxu0
        %v444 = vmul.f32 %v441, 0.35355338
        %v445 = vld [vmem:[#allocation9] sm:$0xff]
        %v446 = vld [vmem:[#allocation9 + $0x8] sm:$0xff]
        %v447 = vld [vmem:[#allocation9 + $0x10] sm:$0xff]
        %vm448 = vcmask 195584
        %v450 = vsel %vm448, %v364, 0
        %v453 = vsel %vm448, %v365, 0
        %455 = vmatprep.subr.mxu0 0.0
        %456 = vmatpush1.msra.mxu0 %v445
        %457 = vmatprep.subr.mxu0 0.0
        %458 = vmatpush1.msra.mxu0 %v446
        %459 = vmatprep.subr.mxu0 0.0
        %460 = vmatpush1.msra.mxu0 %v447
        %461 = vmatprep.subr.mxu0 0.0
        %462 = vmatpush1.msra.mxu0 0.0
        %463 = vmatprep.subr.mxu0 0.0
        %464 = vmatpush1.msra.mxu0 0.0
        %465 = vmatprep.subr.mxu0 0.0
        %466 = vmatpush1.msra.mxu0 0.0
        %467 = vmatprep.subr.mxu0 0.0
        %468 = vmatpush1.msra.mxu0 0.0
        %469 = vmatprep.subr.mxu0 0.0
        %470 = vmatpush1.msra.mxu0 0.0
        %471 = vmatprep.subr.mxu0 0.0
        %472 = vmatpush1.msra.mxu0 0.0
        %473 = vmatprep.subr.mxu0 0.0
        %474 = vmatpush1.msra.mxu0 0.0
        %475 = vmatprep.subr.mxu0 0.0
        %476 = vmatpush1.msra.mxu0 0.0
        %477 = vmatprep.subr.mxu0 0.0
        %478 = vmatpush1.msra.mxu0 0.0
        %479 = vmatprep.subr.mxu0 0.0
        %480 = vmatpush1.msra.mxu0 0.0
        %481 = vmatprep.subr.mxu0 0.0
        %482 = vmatpush1.msra.mxu0 0.0
        %483 = vmatprep.subr.mxu0 0.0
        %484 = vmatpush1.msra.mxu0 0.0
        %485 = vmatprep.subr.mxu0 0.0
        %486 = vmatpush1.msra.mxu0 0.0
        %487 = vmatprep.subr.mxu0 0.0
        %488 = vmatpush1.msra.mxu0 0.0
        %489 = vmatprep.subr.mxu0 0.0
        %490 = vmatpush1.msra.mxu0 0.0
        %491 = vmatprep.subr.mxu0 0.0
        %492 = vmatpush1.msra.mxu0 0.0
        %493 = vmatprep.subr.mxu0 0.0
        %494 = vmatpush1.msra.mxu0 0.0
        %495 = vmatprep.subr.mxu0 0.0
        %496 = vmatpush1.msra.mxu0 0.0
        %497 = vmatprep.subr.mxu0 0.0
        %498 = vmatpush1.msra.mxu0 0.0
        %499 = vmatprep.subr.mxu0 0.0
        %500 = vmatpush1.msra.mxu0 0.0
        %501 = vmatprep.subr.mxu0 0.0
        %502 = vmatpush1.msra.mxu0 0.0
        %503 = vmatprep.subr.mxu0 0.0
        %504 = vmatpush1.msra.mxu0 0.0
        %505 = vmatprep.subr.mxu0 0.0
        %506 = vmatpush1.msra.mxu0 0.0
        %507 = vmatprep.subr.mxu0 0.0
        %508 = vmatpush1.msra.mxu0 0.0
        %509 = vmatprep.subr.mxu0 0.0
        %510 = vmatpush1.msra.mxu0 0.0
        %511 = vmatprep.subr.mxu0 0.0
        %512 = vmatpush1.msra.mxu0 0.0
        %513 = vmatprep.subr.mxu0 0.0
        %514 = vmatpush1.msra.mxu0 0.0
        %515 = vmatprep.subr.mxu0 0.0
        %516 = vmatpush1.msra.mxu0 0.0
        %517 = vmatprep.subr.mxu0 0.0
        %518 = vmatpush1.msra.mxu0 0.0
        %519 = vmatprep.mubr.f32.mxu0 0.0
        %520 = vmatmul.mubr.f32.gmra.mrb[0].mxu0 %v450
        %v521 = vpop.f32.mrb[0].mxu0
        %v522 = vadd.f32 0.0, %v521
        %v523 = vpop.f32.mrb[0].mxu0
        %524 = vmatprep.mubr.f32.mxu0 0.0
        %525 = vmatmul.mubr.f32.gmra.mrb[0].mxu0 %v453
        %v526 = vpop.f32.mrb[0].mxu0
        %v527 = vadd.f32 0.0, %v526
        %v528 = vpop.f32.mrb[0].mxu0
        %529 = vdwg.mxu0
        %vm530 = vcmask 64512
        %v532 = vsel %vm530, %v444, 0
        %v535 = vsel %vm530, %v522, 0
        %v538 = vsel %vm530, %v527, 0
        %540 = vmatprep.subr.mxu0 0.0
        %541 = vmatpush1.xpose.msra.mxu0 %v535
        %542 = vmatprep.subr.mxu0 0.0
        %543 = vmatpush1.xpose.msra.mxu0 %v538
        %544 = vmatprep.subr.mxu0 0.0
        %545 = vmatpush1.xpose.msra.mxu0 0.0
        %546 = vmatprep.subr.mxu0 0.0
        %547 = vmatpush1.xpose.msra.mxu0 0.0
        %548 = vmatprep.subr.mxu0 0.0
        %549 = vmatpush1.xpose.msra.mxu0 0.0
        %550 = vmatprep.subr.mxu0 0.0
        %551 = vmatpush1.xpose.msra.mxu0 0.0
        %552 = vmatprep.subr.mxu0 0.0
        %553 = vmatpush1.xpose.msra.mxu0 0.0
        %554 = vmatprep.subr.mxu0 0.0
        %555 = vmatpush1.xpose.msra.mxu0 0.0
        %556 = vmatprep.subr.mxu0 0.0
        %557 = vmatpush1.xpose.msra.mxu0 0.0
        %558 = vmatprep.subr.mxu0 0.0
        %559 = vmatpush1.xpose.msra.mxu0 0.0
        %560 = vmatprep.subr.mxu0 0.0
        %561 = vmatpush1.xpose.msra.mxu0 0.0
        %562 = vmatprep.subr.mxu0 0.0
        %563 = vmatpush1.xpose.msra.mxu0 0.0
        %564 = vmatprep.subr.mxu0 0.0
        %565 = vmatpush1.xpose.msra.mxu0 0.0
        %566 = vmatprep.subr.mxu0 0.0
        %567 = vmatpush1.xpose.msra.mxu0 0.0
        %568 = vmatprep.subr.mxu0 0.0
        %569 = vmatpush1.xpose.msra.mxu0 0.0
        %570 = vmatprep.subr.mxu0 0.0
        %571 = vmatpush1.xpose.msra.mxu0 0.0
        %572 = vmatprep.subr.mxu0 0.0
        %573 = vmatpush1.xpose.msra.mxu0 0.0
        %574 = vmatprep.subr.mxu0 0.0
        %575 = vmatpush1.xpose.msra.mxu0 0.0
        %576 = vmatprep.subr.mxu0 0.0
        %577 = vmatpush1.xpose.msra.mxu0 0.0
        %578 = vmatprep.subr.mxu0 0.0
        %579 = vmatpush1.xpose.msra.mxu0 0.0
        %580 = vmatprep.subr.mxu0 0.0
        %581 = vmatpush1.xpose.msra.mxu0 0.0
        %582 = vmatprep.subr.mxu0 0.0
        %583 = vmatpush1.xpose.msra.mxu0 0.0
        %584 = vmatprep.subr.mxu0 0.0
        %585 = vmatpush1.xpose.msra.mxu0 0.0
        %586 = vmatprep.subr.mxu0 0.0
        %587 = vmatpush1.xpose.msra.mxu0 0.0
        %588 = vmatprep.subr.mxu0 0.0
        %589 = vmatpush1.xpose.msra.mxu0 0.0
        %590 = vmatprep.subr.mxu0 0.0
        %591 = vmatpush1.xpose.msra.mxu0 0.0
        %592 = vmatprep.subr.mxu0 0.0
        %593 = vmatpush1.xpose.msra.mxu0 0.0
        %594 = vmatprep.subr.mxu0 0.0
        %595 = vmatpush1.xpose.msra.mxu0 0.0
        %596 = vmatprep.subr.mxu0 0.0
        %597 = vmatpush1.xpose.msra.mxu0 0.0
        %598 = vmatprep.subr.mxu0 0.0
        %599 = vmatpush1.xpose.msra.mxu0 0.0
        %600 = vmatprep.subr.mxu0 0.0
        %601 = vmatpush1.xpose.msra.mxu0 0.0
        %602 = vmatprep.subr.mxu0 0.0
        %603 = vmatpush1.xpose.msra.mxu0 0.0
        %604 = vmatprep.mubr.f32.mxu0 0.0
        %605 = vmatmul.mubr.f32.gmra.mrb[0].mxu0 %v532
        %v606 = vpop.f32.mrb[0].mxu0
        %v607 = vadd.f32 0.0, %v606
        %v608 = vpop.f32.mrb[0].mxu0
        %609 = vdwg.mxu0
        %vm610 = vcmask 130048
        %v611 = vsel %vm610, %v607, -inf
        %612 = vmax.xlane.f32.xlu0 %v611
        %v613 = vpop.xlane.xlu0 %612
        %v614 = vsub.f32 %v607, %v613
        %v615 = vmul.f32 %v614, 1.442695
        %v616 = vpow.pop %v615
        %v617 = vsel %vm610, %v616, 0.0
        %618 = vadd.xlane.f32.xlu0 %v617
        %v619 = vpop.xlane.xlu0 %618
        %v620 = vrcp.pop %v619
        %v621 = vmul.f32 %v616, %v620
        %622 = vrot.lane.b32.xlu0 %v522, 96
        %v623 = vpop.permute.xlu0 %622
        %624 = vrot.lane.b32.xlu0 %v527, 96
        %v625 = vpop.permute.xlu0 %624
        %v629 = vsel %vm610, %v621, 0
        %631 = vmatprep.subr.mxu0 0.0
        %632 = vmatpush1.msra.mxu0 %v623
        %633 = vmatprep.subr.mxu0 0.0
        %634 = vmatpush1.msra.mxu0 %v625
        %635 = vmatprep.subr.mxu0 0.0
        %636 = vmatpush1.msra.mxu0 0.0
        %637 = vmatprep.subr.mxu0 0.0
        %638 = vmatpush1.msra.mxu0 0.0
        %639 = vmatprep.subr.mxu0 0.0
        %640 = vmatpush1.msra.mxu0 0.0
        %641 = vmatprep.subr.mxu0 0.0
        %642 = vmatpush1.msra.mxu0 0.0
        %643 = vmatprep.subr.mxu0 0.0
        %644 = vmatpush1.msra.mxu0 0.0
        %645 = vmatprep.subr.mxu0 0.0
        %646 = vmatpush1.msra.mxu0 0.0
        %647 = vmatprep.subr.mxu0 0.0
        %648 = vmatpush1.msra.mxu0 0.0
        %649 = vmatprep.subr.mxu0 0.0
        %650 = vmatpush1.msra.mxu0 0.0
        %651 = vmatprep.subr.mxu0 0.0
        %652 = vmatpush1.msra.mxu0 0.0
        %653 = vmatprep.subr.mxu0 0.0
        %654 = vmatpush1.msra.mxu0 0.0
        %655 = vmatprep.subr.mxu0 0.0
        %656 = vmatpush1.msra.mxu0 0.0
        %657 = vmatprep.subr.mxu0 0.0
        %658 = vmatpush1.msra.mxu0 0.0
        %659 = vmatprep.subr.mxu0 0.0
        %660 = vmatpush1.msra.mxu0 0.0
        %661 = vmatprep.subr.mxu0 0.0
        %662 = vmatpush1.msra.mxu0 0.0
        %663 = vmatprep.subr.mxu0 0.0
        %664 = vmatpush1.msra.mxu0 0.0
        %665 = vmatprep.subr.mxu0 0.0
        %666 = vmatpush1.msra.mxu0 0.0
        %667 = vmatprep.subr.mxu0 0.0
        %668 = vmatpush1.msra.mxu0 0.0
        %669 = vmatprep.subr.mxu0 0.0
        %670 = vmatpush1.msra.mxu0 0.0
        %671 = vmatprep.subr.mxu0 0.0
        %672 = vmatpush1.msra.mxu0 0.0
        %673 = vmatprep.subr.mxu0 0.0
        %674 = vmatpush1.msra.mxu0 0.0
        %675 = vmatprep.subr.mxu0 0.0
        %676 = vmatpush1.msra.mxu0 0.0
        %677 = vmatprep.subr.mxu0 0.0
        %678 = vmatpush1.msra.mxu0 0.0
        %679 = vmatprep.subr.mxu0 0.0
        %680 = vmatpush1.msra.mxu0 0.0
        %681 = vmatprep.subr.mxu0 0.0
        %682 = vmatpush1.msra.mxu0 0.0
        %683 = vmatprep.subr.mxu0 0.0
        %684 = vmatpush1.msra.mxu0 0.0
        %685 = vmatprep.subr.mxu0 0.0
        %686 = vmatpush1.msra.mxu0 0.0
        %687 = vmatprep.subr.mxu0 0.0
        %688 = vmatpush1.msra.mxu0 0.0
        %689 = vmatprep.subr.mxu0 0.0
        %690 = vmatpush1.msra.mxu0 0.0
        %691 = vmatprep.subr.mxu0 0.0
        %692 = vmatpush1.msra.mxu0 0.0
        %693 = vmatprep.subr.mxu0 0.0
        %694 = vmatpush1.msra.mxu0 0.0
        %695 = vmatprep.mubr.f32.mxu0 0.0
        %696 = vmatmul.mubr.f32.gmra.mrb[0].mxu0 %v629
        %v697 = vpop.f32.mrb[0].mxu0
        %v698 = vadd.f32 0.0, %v697
        %v699 = vpop.f32.mrb[0].mxu0
        %700 = vdwg.mxu0
        %701 = vst.msk [vmem:[#allocation2] sm:$0xff] %vm530, %v698
        %702 = vrot.lane.b32.xlu0 %v444, 120
        %v703 = vpop.permute.xlu0 %702
        %704 = vrot.lane.b32.xlu0 %v522, 120
        %v705 = vpop.permute.xlu0 %704
        %706 = vrot.lane.b32.xlu0 %v527, 120
        %v707 = vpop.permute.xlu0 %706
        %v708 = vsel %vm530, %v703, 0
        %v710 = vsel %vm530, %v705, 0
        %v712 = vsel %vm530, %v707, 0
        %714 = vmatprep.subr.mxu0 0.0
        %715 = vmatpush1.xpose.msra.mxu0 %v710
        %716 = vmatprep.subr.mxu0 0.0
        %717 = vmatpush1.xpose.msra.mxu0 %v712
        %718 = vmatprep.subr.mxu0 0.0
        %719 = vmatpush1.xpose.msra.mxu0 0.0
        %720 = vmatprep.subr.mxu0 0.0
        %721 = vmatpush1.xpose.msra.mxu0 0.0
        %722 = vmatprep.subr.mxu0 0.0
        %723 = vmatpush1.xpose.msra.mxu0 0.0
        %724 = vmatprep.subr.mxu0 0.0
        %725 = vmatpush1.xpose.msra.mxu0 0.0
        %726 = vmatprep.subr.mxu0 0.0
        %727 = vmatpush1.xpose.msra.mxu0 0.0
        %728 = vmatprep.subr.mxu0 0.0
        %729 = vmatpush1.xpose.msra.mxu0 0.0
        %730 = vmatprep.subr.mxu0 0.0
        %731 = vmatpush1.xpose.msra.mxu0 0.0
        %732 = vmatprep.subr.mxu0 0.0
        %733 = vmatpush1.xpose.msra.mxu0 0.0
        %734 = vmatprep.subr.mxu0 0.0
        %735 = vmatpush1.xpose.msra.mxu0 0.0
        %736 = vmatprep.subr.mxu0 0.0
        %737 = vmatpush1.xpose.msra.mxu0 0.0
        %738 = vmatprep.subr.mxu0 0.0
        %739 = vmatpush1.xpose.msra.mxu0 0.0
        %740 = vmatprep.subr.mxu0 0.0
        %741 = vmatpush1.xpose.msra.mxu0 0.0
        %742 = vmatprep.subr.mxu0 0.0
        %743 = vmatpush1.xpose.msra.mxu0 0.0
        %744 = vmatprep.subr.mxu0 0.0
        %745 = vmatpush1.xpose.msra.mxu0 0.0
        %746 = vmatprep.subr.mxu0 0.0
        %747 = vmatpush1.xpose.msra.mxu0 0.0
        %748 = vmatprep.subr.mxu0 0.0
        %749 = vmatpush1.xpose.msra.mxu0 0.0
        %750 = vmatprep.subr.mxu0 0.0
        %751 = vmatpush1.xpose.msra.mxu0 0.0
        %752 = vmatprep.subr.mxu0 0.0
        %753 = vmatpush1.xpose.msra.mxu0 0.0
        %754 = vmatprep.subr.mxu0 0.0
        %755 = vmatpush1.xpose.msra.mxu0 0.0
        %756 = vmatprep.subr.mxu0 0.0
        %757 = vmatpush1.xpose.msra.mxu0 0.0
        %758 = vmatprep.subr.mxu0 0.0
        %759 = vmatpush1.xpose.msra.mxu0 0.0
        %760 = vmatprep.subr.mxu0 0.0
        %761 = vmatpush1.xpose.msra.mxu0 0.0
        %762 = vmatprep.subr.mxu0 0.0
        %763 = vmatpush1.xpose.msra.mxu0 0.0
        %764 = vmatprep.subr.mxu0 0.0
        %765 = vmatpush1.xpose.msra.mxu0 0.0
        %766 = vmatprep.subr.mxu0 0.0
        %767 = vmatpush1.xpose.msra.mxu0 0.0
        %768 = vmatprep.subr.mxu0 0.0
        %769 = vmatpush1.xpose.msra.mxu0 0.0
        %770 = vmatprep.subr.mxu0 0.0
        %771 = vmatpush1.xpose.msra.mxu0 0.0
        %772 = vmatprep.subr.mxu0 0.0
        %773 = vmatpush1.xpose.msra.mxu0 0.0
        %774 = vmatprep.subr.mxu0 0.0
        %775 = vmatpush1.xpose.msra.mxu0 0.0
        %776 = vmatprep.subr.mxu0 0.0
        %777 = vmatpush1.xpose.msra.mxu0 0.0
        %778 = vmatprep.mubr.f32.mxu0 0.0
        %779 = vmatmul.mubr.f32.gmra.mrb[0].mxu0 %v708
        %v780 = vpop.f32.mrb[0].mxu0
        %v781 = vadd.f32 0.0, %v780
        %v782 = vpop.f32.mrb[0].mxu0
        %783 = vdwg.mxu0
        %v784 = vsel %vm610, %v781, -inf
        %785 = vmax.xlane.f32.xlu0 %v784
        %v786 = vpop.xlane.xlu0 %785
        %v787 = vsub.f32 %v781, %v786
        %v788 = vmul.f32 %v787, 1.442695
        %v789 = vpow.pop %v788
        %v790 = vsel %vm610, %v789, 0.0
        %791 = vadd.xlane.f32.xlu0 %v790
        %v792 = vpop.xlane.xlu0 %791
        %v793 = vrcp.pop %v792
        %v794 = vmul.f32 %v789, %v793
        %795 = vrot.lane.b32.xlu0 %v522, 88
        %v796 = vpop.permute.xlu0 %795
        %797 = vrot.lane.b32.xlu0 %v527, 88
        %v798 = vpop.permute.xlu0 %797
        %v802 = vsel %vm610, %v794, 0
        %804 = vmatprep.subr.mxu0 0.0
        %805 = vmatpush1.msra.mxu0 %v796
        %806 = vmatprep.subr.mxu0 0.0
        %807 = vmatpush1.msra.mxu0 %v798
        %808 = vmatprep.subr.mxu0 0.0
        %809 = vmatpush1.msra.mxu0 0.0
        %810 = vmatprep.subr.mxu0 0.0
        %811 = vmatpush1.msra.mxu0 0.0
        %812 = vmatprep.subr.mxu0 0.0
        %813 = vmatpush1.msra.mxu0 0.0
        %814 = vmatprep.subr.mxu0 0.0
        %815 = vmatpush1.msra.mxu0 0.0
        %816 = vmatprep.subr.mxu0 0.0
        %817 = vmatpush1.msra.mxu0 0.0
        %818 = vmatprep.subr.mxu0 0.0
        %819 = vmatpush1.msra.mxu0 0.0
        %820 = vmatprep.subr.mxu0 0.0
        %821 = vmatpush1.msra.mxu0 0.0
        %822 = vmatprep.subr.mxu0 0.0
        %823 = vmatpush1.msra.mxu0 0.0
        %824 = vmatprep.subr.mxu0 0.0
        %825 = vmatpush1.msra.mxu0 0.0
        %826 = vmatprep.subr.mxu0 0.0
        %827 = vmatpush1.msra.mxu0 0.0
        %828 = vmatprep.subr.mxu0 0.0
        %829 = vmatpush1.msra.mxu0 0.0
        %830 = vmatprep.subr.mxu0 0.0
        %831 = vmatpush1.msra.mxu0 0.0
        %832 = vmatprep.subr.mxu0 0.0
        %833 = vmatpush1.msra.mxu0 0.0
        %834 = vmatprep.subr.mxu0 0.0
        %835 = vmatpush1.msra.mxu0 0.0
        %836 = vmatprep.subr.mxu0 0.0
        %837 = vmatpush1.msra.mxu0 0.0
        %838 = vmatprep.subr.mxu0 0.0
        %839 = vmatpush1.msra.mxu0 0.0
        %840 = vmatprep.subr.mxu0 0.0
        %841 = vmatpush1.msra.mxu0 0.0
        %842 = vmatprep.subr.mxu0 0.0
        %843 = vmatpush1.msra.mxu0 0.0
        %844 = vmatprep.subr.mxu0 0.0
        %845 = vmatpush1.msra.mxu0 0.0
        %846 = vmatprep.subr.mxu0 0.0
        %847 = vmatpush1.msra.mxu0 0.0
        %848 = vmatprep.subr.mxu0 0.0
        %849 = vmatpush1.msra.mxu0 0.0
        %850 = vmatprep.subr.mxu0 0.0
        %851 = vmatpush1.msra.mxu0 0.0
        %852 = vmatprep.subr.mxu0 0.0
        %853 = vmatpush1.msra.mxu0 0.0
        %854 = vmatprep.subr.mxu0 0.0
        %855 = vmatpush1.msra.mxu0 0.0
        %856 = vmatprep.subr.mxu0 0.0
        %857 = vmatpush1.msra.mxu0 0.0
        %858 = vmatprep.subr.mxu0 0.0
        %859 = vmatpush1.msra.mxu0 0.0
        %860 = vmatprep.subr.mxu0 0.0
        %861 = vmatpush1.msra.mxu0 0.0
        %862 = vmatprep.subr.mxu0 0.0
        %863 = vmatpush1.msra.mxu0 0.0
        %864 = vmatprep.subr.mxu0 0.0
        %865 = vmatpush1.msra.mxu0 0.0
        %866 = vmatprep.subr.mxu0 0.0
        %867 = vmatpush1.msra.mxu0 0.0
        %868 = vmatprep.mubr.f32.mxu0 0.0
        %869 = vmatmul.mubr.f32.gmra.mrb[0].mxu0 %v802
        %v870 = vpop.f32.mrb[0].mxu0
        %v871 = vadd.f32 0.0, %v870
        %v872 = vpop.f32.mrb[0].mxu0
        %873 = vdwg.mxu0
        %875 = vrot.lane.b32.xlu0 %v871, 8
        %v876 = vpop.permute.xlu0 %875
        %vm878 = vcmask 130112
        %879 = vst.msk [vmem:[#allocation2] sm:$0xff] %vm878, %v876
        %880 = vrot.lane.b32.xlu0 %v444, 112
        %v881 = vpop.permute.xlu0 %880
        %882 = vrot.lane.b32.xlu0 %v522, 112
        %v883 = vpop.permute.xlu0 %882
        %884 = vrot.lane.b32.xlu0 %v527, 112
        %v885 = vpop.permute.xlu0 %884
        %v886 = vsel %vm530, %v881, 0
        %v888 = vsel %vm530, %v883, 0
        %v890 = vsel %vm530, %v885, 0
        %892 = vmatprep.subr.mxu0 0.0
        %893 = vmatpush1.xpose.msra.mxu0 %v888
        %894 = vmatprep.subr.mxu0 0.0
        %895 = vmatpush1.xpose.msra.mxu0 %v890
        %896 = vmatprep.subr.mxu0 0.0
        %897 = vmatpush1.xpose.msra.mxu0 0.0
        %898 = vmatprep.subr.mxu0 0.0
        %899 = vmatpush1.xpose.msra.mxu0 0.0
        %900 = vmatprep.subr.mxu0 0.0
        %901 = vmatpush1.xpose.msra.mxu0 0.0
        %902 = vmatprep.subr.mxu0 0.0
        %903 = vmatpush1.xpose.msra.mxu0 0.0
        %904 = vmatprep.subr.mxu0 0.0
        %905 = vmatpush1.xpose.msra.mxu0 0.0
        %906 = vmatprep.subr.mxu0 0.0
        %907 = vmatpush1.xpose.msra.mxu0 0.0
        %908 = vmatprep.subr.mxu0 0.0
        %909 = vmatpush1.xpose.msra.mxu0 0.0
        %910 = vmatprep.subr.mxu0 0.0
        %911 = vmatpush1.xpose.msra.mxu0 0.0
        %912 = vmatprep.subr.mxu0 0.0
        %913 = vmatpush1.xpose.msra.mxu0 0.0
        %914 = vmatprep.subr.mxu0 0.0
        %915 = vmatpush1.xpose.msra.mxu0 0.0
        %916 = vmatprep.subr.mxu0 0.0
        %917 = vmatpush1.xpose.msra.mxu0 0.0
        %918 = vmatprep.subr.mxu0 0.0
        %919 = vmatpush1.xpose.msra.mxu0 0.0
        %920 = vmatprep.subr.mxu0 0.0
        %921 = vmatpush1.xpose.msra.mxu0 0.0
        %922 = vmatprep.subr.mxu0 0.0
        %923 = vmatpush1.xpose.msra.mxu0 0.0
        %924 = vmatprep.subr.mxu0 0.0
        %925 = vmatpush1.xpose.msra.mxu0 0.0
        %926 = vmatprep.subr.mxu0 0.0
        %927 = vmatpush1.xpose.msra.mxu0 0.0
        %928 = vmatprep.subr.mxu0 0.0
        %929 = vmatpush1.xpose.msra.mxu0 0.0
        %930 = vmatprep.subr.mxu0 0.0
        %931 = vmatpush1.xpose.msra.mxu0 0.0
        %932 = vmatprep.subr.mxu0 0.0
        %933 = vmatpush1.xpose.msra.mxu0 0.0
        %934 = vmatprep.subr.mxu0 0.0
        %935 = vmatpush1.xpose.msra.mxu0 0.0
        %936 = vmatprep.subr.mxu0 0.0
        %937 = vmatpush1.xpose.msra.mxu0 0.0
        %938 = vmatprep.subr.mxu0 0.0
        %939 = vmatpush1.xpose.msra.mxu0 0.0
        %940 = vmatprep.subr.mxu0 0.0
        %941 = vmatpush1.xpose.msra.mxu0 0.0
        %942 = vmatprep.subr.mxu0 0.0
        %943 = vmatpush1.xpose.msra.mxu0 0.0
        %944 = vmatprep.subr.mxu0 0.0
        %945 = vmatpush1.xpose.msra.mxu0 0.0
        %946 = vmatprep.subr.mxu0 0.0
        %947 = vmatpush1.xpose.msra.mxu0 0.0
        %948 = vmatprep.subr.mxu0 0.0
        %949 = vmatpush1.xpose.msra.mxu0 0.0
        %950 = vmatprep.subr.mxu0 0.0
        %951 = vmatpush1.xpose.msra.mxu0 0.0
        %952 = vmatprep.subr.mxu0 0.0
        %953 = vmatpush1.xpose.msra.mxu0 0.0
        %954 = vmatprep.subr.mxu0 0.0
        %955 = vmatpush1.xpose.msra.mxu0 0.0
        %956 = vmatprep.mubr.f32.mxu0 0.0
        %957 = vmatmul.mubr.f32.gmra.mrb[0].mxu0 %v886
        %v958 = vpop.f32.mrb[0].mxu0
        %v959 = vadd.f32 0.0, %v958
        %v960 = vpop.f32.mrb[0].mxu0
        %961 = vdwg.mxu0
        %v962 = vsel %vm610, %v959, -inf
        %963 = vmax.xlane.f32.xlu0 %v962
        %v964 = vpop.xlane.xlu0 %963
        %v965 = vsub.f32 %v959, %v964
        %v966 = vmul.f32 %v965, 1.442695
        %v967 = vpow.pop %v966
        %v968 = vsel %vm610, %v967, 0.0
        %969 = vadd.xlane.f32.xlu0 %v968
        %v970 = vpop.xlane.xlu0 %969
        %v971 = vrcp.pop %v970
        %v972 = vmul.f32 %v967, %v971
        %973 = vrot.lane.b32.xlu0 %v522, 80
        %v974 = vpop.permute.xlu0 %973
        %975 = vrot.lane.b32.xlu0 %v527, 80
        %v976 = vpop.permute.xlu0 %975
        %v980 = vsel %vm610, %v972, 0
        %982 = vmatprep.subr.mxu0 0.0
        %983 = vmatpush1.msra.mxu0 %v974
        %984 = vmatprep.subr.mxu0 0.0
        %985 = vmatpush1.msra.mxu0 %v976
        %986 = vmatprep.subr.mxu0 0.0
        %987 = vmatpush1.msra.mxu0 0.0
        %988 = vmatprep.subr.mxu0 0.0
        %989 = vmatpush1.msra.mxu0 0.0
        %990 = vmatprep.subr.mxu0 0.0
        %991 = vmatpush1.msra.mxu0 0.0
        %992 = vmatprep.subr.mxu0 0.0
        %993 = vmatpush1.msra.mxu0 0.0
        %994 = vmatprep.subr.mxu0 0.0
        %995 = vmatpush1.msra.mxu0 0.0
        %996 = vmatprep.subr.mxu0 0.0
        %997 = vmatpush1.msra.mxu0 0.0
        %998 = vmatprep.subr.mxu0 0.0
        %999 = vmatpush1.msra.mxu0 0.0
        %1000 = vmatprep.subr.mxu0 0.0
        %1001 = vmatpush1.msra.mxu0 0.0
        %1002 = vmatprep.subr.mxu0 0.0
        %1003 = vmatpush1.msra.mxu0 0.0
        %1004 = vmatprep.subr.mxu0 0.0
        %1005 = vmatpush1.msra.mxu0 0.0
        %1006 = vmatprep.subr.mxu0 0.0
        %1007 = vmatpush1.msra.mxu0 0.0
        %1008 = vmatprep.subr.mxu0 0.0
        %1009 = vmatpush1.msra.mxu0 0.0
        %1010 = vmatprep.subr.mxu0 0.0
        %1011 = vmatpush1.msra.mxu0 0.0
        %1012 = vmatprep.subr.mxu0 0.0
        %1013 = vmatpush1.msra.mxu0 0.0
        %1014 = vmatprep.subr.mxu0 0.0
        %1015 = vmatpush1.msra.mxu0 0.0
        %1016 = vmatprep.subr.mxu0 0.0
        %1017 = vmatpush1.msra.mxu0 0.0
        %1018 = vmatprep.subr.mxu0 0.0
        %1019 = vmatpush1.msra.mxu0 0.0
        %1020 = vmatprep.subr.mxu0 0.0
        %1021 = vmatpush1.msra.mxu0 0.0
        %1022 = vmatprep.subr.mxu0 0.0
        %1023 = vmatpush1.msra.mxu0 0.0
        %1024 = vmatprep.subr.mxu0 0.0
        %1025 = vmatpush1.msra.mxu0 0.0
        %1026 = vmatprep.subr.mxu0 0.0
        %1027 = vmatpush1.msra.mxu0 0.0
        %1028 = vmatprep.subr.mxu0 0.0
        %1029 = vmatpush1.msra.mxu0 0.0
        %1030 = vmatprep.subr.mxu0 0.0
        %1031 = vmatpush1.msra.mxu0 0.0
        %1032 = vmatprep.subr.mxu0 0.0
        %1033 = vmatpush1.msra.mxu0 0.0
        %1034 = vmatprep.subr.mxu0 0.0
        %1035 = vmatpush1.msra.mxu0 0.0
        %1036 = vmatprep.subr.mxu0 0.0
        %1037 = vmatpush1.msra.mxu0 0.0
        %1038 = vmatprep.subr.mxu0 0.0
        %1039 = vmatpush1.msra.mxu0 0.0
        %1040 = vmatprep.subr.mxu0 0.0
        %1041 = vmatpush1.msra.mxu0 0.0
        %1042 = vmatprep.subr.mxu0 0.0
        %1043 = vmatpush1.msra.mxu0 0.0
        %1044 = vmatprep.subr.mxu0 0.0
        %1045 = vmatpush1.msra.mxu0 0.0
        %1046 = vmatprep.mubr.f32.mxu0 0.0
        %1047 = vmatmul.mubr.f32.gmra.mrb[0].mxu0 %v980
        %v1048 = vpop.f32.mrb[0].mxu0
        %v1049 = vadd.f32 0.0, %v1048
        %v1050 = vpop.f32.mrb[0].mxu0
        %1051 = vdwg.mxu0
        %1053 = vrot.lane.b32.xlu0 %v1049, 16
        %v1054 = vpop.permute.xlu0 %1053
        %vm1056 = vcmask 195712
        %1057 = vst.msk [vmem:[#allocation2] sm:$0xff] %vm1056, %v1054
        %1058 = vrot.lane.b32.xlu0 %v444, 104
        %v1059 = vpop.permute.xlu0 %1058
        %1060 = vrot.lane.b32.xlu0 %v522, 104
        %v1061 = vpop.permute.xlu0 %1060
        %1062 = vrot.lane.b32.xlu0 %v527, 104
        %v1063 = vpop.permute.xlu0 %1062
        %v1064 = vsel %vm530, %v1059, 0
        %v1066 = vsel %vm530, %v1061, 0
        %v1068 = vsel %vm530, %v1063, 0
        %1070 = vmatprep.subr.mxu0 0.0
        %1071 = vmatpush1.xpose.msra.mxu0 %v1066
        %1072 = vmatprep.subr.mxu0 0.0
        %1073 = vmatpush1.xpose.msra.mxu0 %v1068
        %1074 = vmatprep.subr.mxu0 0.0
        %1075 = vmatpush1.xpose.msra.mxu0 0.0
        %1076 = vmatprep.subr.mxu0 0.0
        %1077 = vmatpush1.xpose.msra.mxu0 0.0
        %1078 = vmatprep.subr.mxu0 0.0
        %1079 = vmatpush1.xpose.msra.mxu0 0.0
        %1080 = vmatprep.subr.mxu0 0.0
        %1081 = vmatpush1.xpose.msra.mxu0 0.0
        %1082 = vmatprep.subr.mxu0 0.0
        %1083 = vmatpush1.xpose.msra.mxu0 0.0
        %1084 = vmatprep.subr.mxu0 0.0
        %1085 = vmatpush1.xpose.msra.mxu0 0.0
        %1086 = vmatprep.subr.mxu0 0.0
        %1087 = vmatpush1.xpose.msra.mxu0 0.0
        %1088 = vmatprep.subr.mxu0 0.0
        %1089 = vmatpush1.xpose.msra.mxu0 0.0
        %1090 = vmatprep.subr.mxu0 0.0
        %1091 = vmatpush1.xpose.msra.mxu0 0.0
        %1092 = vmatprep.subr.mxu0 0.0
        %1093 = vmatpush1.xpose.msra.mxu0 0.0
        %1094 = vmatprep.subr.mxu0 0.0
        %1095 = vmatpush1.xpose.msra.mxu0 0.0
        %1096 = vmatprep.subr.mxu0 0.0
        %1097 = vmatpush1.xpose.msra.mxu0 0.0
        %1098 = vmatprep.subr.mxu0 0.0
        %1099 = vmatpush1.xpose.msra.mxu0 0.0
        %1100 = vmatprep.subr.mxu0 0.0
        %1101 = vmatpush1.xpose.msra.mxu0 0.0
        %1102 = vmatprep.subr.mxu0 0.0
        %1103 = vmatpush1.xpose.msra.mxu0 0.0
        %1104 = vmatprep.subr.mxu0 0.0
        %1105 = vmatpush1.xpose.msra.mxu0 0.0
        %1106 = vmatprep.subr.mxu0 0.0
        %1107 = vmatpush1.xpose.msra.mxu0 0.0
        %1108 = vmatprep.subr.mxu0 0.0
        %1109 = vmatpush1.xpose.msra.mxu0 0.0
        %1110 = vmatprep.subr.mxu0 0.0
        %1111 = vmatpush1.xpose.msra.mxu0 0.0
        %1112 = vmatprep.subr.mxu0 0.0
        %1113 = vmatpush1.xpose.msra.mxu0 0.0
        %1114 = vmatprep.subr.mxu0 0.0
        %1115 = vmatpush1.xpose.msra.mxu0 0.0
        %1116 = vmatprep.subr.mxu0 0.0
        %1117 = vmatpush1.xpose.msra.mxu0 0.0
        %1118 = vmatprep.subr.mxu0 0.0
        %1119 = vmatpush1.xpose.msra.mxu0 0.0
        %1120 = vmatprep.subr.mxu0 0.0
        %1121 = vmatpush1.xpose.msra.mxu0 0.0
        %1122 = vmatprep.subr.mxu0 0.0
        %1123 = vmatpush1.xpose.msra.mxu0 0.0
        %1124 = vmatprep.subr.mxu0 0.0
        %1125 = vmatpush1.xpose.msra.mxu0 0.0
        %1126 = vmatprep.subr.mxu0 0.0
        %1127 = vmatpush1.xpose.msra.mxu0 0.0
        %1128 = vmatprep.subr.mxu0 0.0
        %1129 = vmatpush1.xpose.msra.mxu0 0.0
        %1130 = vmatprep.subr.mxu0 0.0
        %1131 = vmatpush1.xpose.msra.mxu0 0.0
        %1132 = vmatprep.subr.mxu0 0.0
        %1133 = vmatpush1.xpose.msra.mxu0 0.0
        %1134 = vmatprep.mubr.f32.mxu0 0.0
        %1135 = vmatmul.mubr.f32.gmra.mrb[0].mxu0 %v1064
        %v1136 = vpop.f32.mrb[0].mxu0
        %v1137 = vadd.f32 0.0, %v1136
        %v1138 = vpop.f32.mrb[0].mxu0
        %1139 = vdwg.mxu0
        %v1140 = vsel %vm610, %v1137, -inf
        %1141 = vmax.xlane.f32.xlu0 %v1140
        %v1142 = vpop.xlane.xlu0 %1141
        %v1143 = vsub.f32 %v1137, %v1142
        %v1144 = vmul.f32 %v1143, 1.442695
        %v1145 = vpow.pop %v1144
        %v1146 = vsel %vm610, %v1145, 0.0
        %1147 = vadd.xlane.f32.xlu0 %v1146
        %v1148 = vpop.xlane.xlu0 %1147
        %v1149 = vrcp.pop %v1148
        %v1150 = vmul.f32 %v1145, %v1149
        %1151 = vrot.lane.b32.xlu0 %v522, 72
        %v1152 = vpop.permute.xlu0 %1151
        %1153 = vrot.lane.b32.xlu0 %v527, 72
        %v1154 = vpop.permute.xlu0 %1153
        %v1158 = vsel %vm610, %v1150, 0
        %1160 = vmatprep.subr.mxu0 0.0
        %1161 = vmatpush1.msra.mxu0 %v1152
        %1162 = vmatprep.subr.mxu0 0.0
        %1163 = vmatpush1.msra.mxu0 %v1154
        %1164 = vmatprep.subr.mxu0 0.0
        %1165 = vmatpush1.msra.mxu0 0.0
        %1166 = vmatprep.subr.mxu0 0.0
        %1167 = vmatpush1.msra.mxu0 0.0
        %1168 = vmatprep.subr.mxu0 0.0
        %1169 = vmatpush1.msra.mxu0 0.0
        %1170 = vmatprep.subr.mxu0 0.0
        %1171 = vmatpush1.msra.mxu0 0.0
        %1172 = vmatprep.subr.mxu0 0.0
        %1173 = vmatpush1.msra.mxu0 0.0
        %1174 = vmatprep.subr.mxu0 0.0
        %1175 = vmatpush1.msra.mxu0 0.0
        %1176 = vmatprep.subr.mxu0 0.0
        %1177 = vmatpush1.msra.mxu0 0.0
        %1178 = vmatprep.subr.mxu0 0.0
        %1179 = vmatpush1.msra.mxu0 0.0
        %1180 = vmatprep.subr.mxu0 0.0
        %1181 = vmatpush1.msra.mxu0 0.0
        %1182 = vmatprep.subr.mxu0 0.0
        %1183 = vmatpush1.msra.mxu0 0.0
        %1184 = vmatprep.subr.mxu0 0.0
        %1185 = vmatpush1.msra.mxu0 0.0
        %1186 = vmatprep.subr.mxu0 0.0
        %1187 = vmatpush1.msra.mxu0 0.0
        %1188 = vmatprep.subr.mxu0 0.0
        %1189 = vmatpush1.msra.mxu0 0.0
        %1190 = vmatprep.subr.mxu0 0.0
        %1191 = vmatpush1.msra.mxu0 0.0
        %1192 = vmatprep.subr.mxu0 0.0
        %1193 = vmatpush1.msra.mxu0 0.0
        %1194 = vmatprep.subr.mxu0 0.0
        %1195 = vmatpush1.msra.mxu0 0.0
        %1196 = vmatprep.subr.mxu0 0.0
        %1197 = vmatpush1.msra.mxu0 0.0
        %1198 = vmatprep.subr.mxu0 0.0
        %1199 = vmatpush1.msra.mxu0 0.0
        %1200 = vmatprep.subr.mxu0 0.0
        %1201 = vmatpush1.msra.mxu0 0.0
        %1202 = vmatprep.subr.mxu0 0.0
        %1203 = vmatpush1.msra.mxu0 0.0
        %1204 = vmatprep.subr.mxu0 0.0
        %1205 = vmatpush1.msra.mxu0 0.0
        %1206 = vmatprep.subr.mxu0 0.0
        %1207 = vmatpush1.msra.mxu0 0.0
        %1208 = vmatprep.subr.mxu0 0.0
        %1209 = vmatpush1.msra.mxu0 0.0
        %1210 = vmatprep.subr.mxu0 0.0
        %1211 = vmatpush1.msra.mxu0 0.0
        %1212 = vmatprep.subr.mxu0 0.0
        %1213 = vmatpush1.msra.mxu0 0.0
        %1214 = vmatprep.subr.mxu0 0.0
        %1215 = vmatpush1.msra.mxu0 0.0
        %1216 = vmatprep.subr.mxu0 0.0
        %1217 = vmatpush1.msra.mxu0 0.0
        %1218 = vmatprep.subr.mxu0 0.0
        %1219 = vmatpush1.msra.mxu0 0.0
        %1220 = vmatprep.subr.mxu0 0.0
        %1221 = vmatpush1.msra.mxu0 0.0
        %1222 = vmatprep.subr.mxu0 0.0
        %1223 = vmatpush1.msra.mxu0 0.0
        %1224 = vmatprep.mubr.f32.mxu0 0.0
        %1225 = vmatmul.mubr.f32.gmra.mrb[0].mxu0 %v1158
        %v1226 = vpop.f32.mrb[0].mxu0
        %v1227 = vadd.f32 0.0, %v1226
        %v1228 = vpop.f32.mrb[0].mxu0
        %1229 = vdwg.mxu0
        %1231 = vrot.lane.b32.xlu0 %v1227, 24
        %v1232 = vpop.permute.xlu0 %1231
        %vm1234 = vcmask 261312
        %1235 = vst.msk [vmem:[#allocation2] sm:$0xff] %vm1234, %v1232
        %v1236 = vld [vmem:[#allocation2] sm:$0xff]
        %v1237 = vld [vmem:[#allocation11] sm:$0xff]
        %v1238 = vld [vmem:[#allocation11 + $0x8] sm:$0xff]
        %v1239 = vld [vmem:[#allocation11 + $0x10] sm:$0xff]
        %v1240 = vld [vmem:[#allocation11 + $0x18] sm:$0xff]
        %v1241 = vld [vmem:[#allocation12] sm:$0x1]
        %v1243 = vlaneseq
        %v1244 = vshrl.u32 %v1243, 7
        %v1245 = vsub.s32 0, %v1244
        %v1246 = vrot.slane %v1241, %v1245
        %v1249 = vsel %vm370, %v1236, 0
        %1251 = vmatprep.subr.mxu0 0.0
        %1252 = vmatpush1.msra.mxu0 %v1237
        %1253 = vmatprep.subr.mxu0 0.0
        %1254 = vmatpush1.msra.mxu0 %v1238
        %1255 = vmatprep.subr.mxu0 0.0
        %1256 = vmatpush1.msra.mxu0 %v1239
        %1257 = vmatprep.subr.mxu0 0.0
        %1258 = vmatpush1.msra.mxu0 %v1240
        %1259 = vmatprep.subr.mxu0 0.0
        %1260 = vmatpush1.msra.mxu0 0.0
        %1261 = vmatprep.subr.mxu0 0.0
        %1262 = vmatpush1.msra.mxu0 0.0
        %1263 = vmatprep.subr.mxu0 0.0
        %1264 = vmatpush1.msra.mxu0 0.0
        %1265 = vmatprep.subr.mxu0 0.0
        %1266 = vmatpush1.msra.mxu0 0.0
        %1267 = vmatprep.subr.mxu0 0.0
        %1268 = vmatpush1.msra.mxu0 0.0
        %1269 = vmatprep.subr.mxu0 0.0
        %1270 = vmatpush1.msra.mxu0 0.0
        %1271 = vmatprep.subr.mxu0 0.0
        %1272 = vmatpush1.msra.mxu0 0.0
        %1273 = vmatprep.subr.mxu0 0.0
        %1274 = vmatpush1.msra.mxu0 0.0
        %1275 = vmatprep.subr.mxu0 0.0
        %1276 = vmatpush1.msra.mxu0 0.0
        %1277 = vmatprep.subr.mxu0 0.0
        %1278 = vmatpush1.msra.mxu0 0.0
        %1279 = vmatprep.subr.mxu0 0.0
        %1280 = vmatpush1.msra.mxu0 0.0
        %1281 = vmatprep.subr.mxu0 0.0
        %1282 = vmatpush1.msra.mxu0 0.0
        %1283 = vmatprep.subr.mxu0 0.0
        %1284 = vmatpush1.msra.mxu0 0.0
        %1285 = vmatprep.subr.mxu0 0.0
        %1286 = vmatpush1.msra.mxu0 0.0
        %1287 = vmatprep.subr.mxu0 0.0
        %1288 = vmatpush1.msra.mxu0 0.0
        %1289 = vmatprep.subr.mxu0 0.0
        %1290 = vmatpush1.msra.mxu0 0.0
        %1291 = vmatprep.subr.mxu0 0.0
        %1292 = vmatpush1.msra.mxu0 0.0
        %1293 = vmatprep.subr.mxu0 0.0
        %1294 = vmatpush1.msra.mxu0 0.0
        %1295 = vmatprep.subr.mxu0 0.0
        %1296 = vmatpush1.msra.mxu0 0.0
        %1297 = vmatprep.subr.mxu0 0.0
        %1298 = vmatpush1.msra.mxu0 0.0
        %1299 = vmatprep.subr.mxu0 0.0
        %1300 = vmatpush1.msra.mxu0 0.0
        %1301 = vmatprep.subr.mxu0 0.0
        %1302 = vmatpush1.msra.mxu0 0.0
        %1303 = vmatprep.subr.mxu0 0.0
        %1304 = vmatpush1.msra.mxu0 0.0
        %1305 = vmatprep.subr.mxu0 0.0
        %1306 = vmatpush1.msra.mxu0 0.0
        %1307 = vmatprep.subr.mxu0 0.0
        %1308 = vmatpush1.msra.mxu0 0.0
        %1309 = vmatprep.subr.mxu0 0.0
        %1310 = vmatpush1.msra.mxu0 0.0
        %1311 = vmatprep.subr.mxu0 0.0
        %1312 = vmatpush1.msra.mxu0 0.0
        %1313 = vmatprep.subr.mxu0 0.0
        %1314 = vmatpush1.msra.mxu0 0.0
        %1315 = vmatprep.mubr.f32.mxu0 0.0
        %1316 = vmatmul.mubr.f32.gmra.mrb[0].mxu0 %v1249
        %v1317 = vpop.f32.mrb[0].mxu0
        %v1318 = vadd.f32 %v1246, %v1317
        %v1319 = vpop.f32.mrb[0].mxu0
        %1320 = vdwg.mxu0
        %1321 = vst.msk [vmem:[%s362] sm:$0xff] %vm370, %v1318
        %s1322 = sand.u32 %s172, 1
        %s1323 = scalar_lea.sflag [#allocation5], %s1322
        %s1324 = sand.u32 %s172, 1
        %s1325 = smul.addr %s1324, 8
        %s1326 = scalar_lea.vmem [#allocation14], %s1325
        // Predicated region
        $region69: #{tpu_custom_call.1} parent=43 // pred_check
          %p1327 = pneg %p182
        $region70: #{tpu_custom_call.1} parent=43 // pred_check_branch
          %1329 = sbr.rel (%p1327) target = $region72
        $region71: #{tpu_custom_call.1} parent=43 // pred_region
          %s1331 = ssub.s32 128, 128
          %1332 = vsyncadd %s1323, %s1331
          %s1333 = smul.addr %s28, 128
          %s1334 = scalar_lea.hbm %s6, %s1333
          %s1336 = sshll.u32 %s1326, 4
          %s1337 = int_to_ptr.vmem [resolvable:$true] %s1336
          %1339 = dma.vmem_to_hbm [thread:$0]  %s1337, 128, %s1334, %s1323
        $region72: #{tpu_custom_call.1} parent=43 // pred_fallthru
          _
      $region44: #{tpu_custom_call.1} parent=5 // pred_fallthru
        _
      %p1340 = scmp.le.s32.totalorder 2, %s23
      // Predicated region
      $region73: #{tpu_custom_call.1} parent=5 // pred_check
        %p1341 = pneg %p1340
      $region74: #{tpu_custom_call.1} parent=5 // pred_check_branch
        %1343 = sbr.rel (%p1341) target = $region76
      $region75: #{tpu_custom_call.1} parent=5 // pred_region
        %s1344 = ssub.s32 %s23, 2
        // Predicated region
        $region77: #{tpu_custom_call.1} parent=75 // pred_check
          %p1345 = pneg %p188
        $region78: #{tpu_custom_call.1} parent=75 // pred_check_branch
          %1347 = sbr.rel (%p1345) target = $region80
        $region79: #{tpu_custom_call.1} parent=75 // pred_region
          %s1348 = sand.u32 %s173, 1
          %s1349 = scalar_lea.sflag [#allocation5], %s1348
          %s1350 = sand.u32 %s173, 1
          %s1351 = smul.addr %s1350, 8
          %s1352 = scalar_lea.vmem [#allocation14], %s1351
          %1353 = dma.done %s1349, 128
        $region80: #{tpu_custom_call.1} parent=75 // pred_fallthru
          _
      $region76: #{tpu_custom_call.1} parent=5 // pred_fallthru
        _
    $region6: #{tpu_custom_call.1} parent=1 // loop_footer
      %s27 = sadd.s32 1, %s23
    $region7: #{tpu_custom_call.1} parent=1 // loop_footer_branch
      %22 = sbr.rel target = $region3
    $region8: #{tpu_custom_call.1} parent=1 // loop_exit
      _
    %1354 = vsyncpa [#allocation4], 1
    %s1355 = scalar_lea.sflag [#allocation4], 1
    %1356 = vsyncpa %s1355, 1
    %1357 = vsyncpa [#allocation7], 1
    %s1358 = scalar_lea.sflag [#allocation7], 1
    %1359 = vsyncpa %s1358, 1
    %1360 = vsyncpa [#allocation10], 1
    %1361 = vsyncpa [#allocation13], 1
    %1362 = vsyncpa [#allocation5], 1
    %s1363 = scalar_lea.sflag [#allocation5], 1
    %1364 = vsyncpa %s1363, 1

// kernel: tpu_custom_call.1
$region0: #{tpu_custom_call.1}
  #allocation0 [shape = 'u32[]', space=smem, size = 0x4, offset = 0x4, fixed_abs, tag = 'smem constant byte address 0x4 - core index']
  #allocation1 [shape = 'u32[144,128]{1,0:T(1,128)}', space=vmem, size = 0x12000, scoped, tag = 'internal scratch']
  #allocation2 [shape = 'f32[8,32]{1,0:T(8,128)}', space=vmem, size = 0x1000, scoped, tag = 'scratch operand']
  %s0 = inlined_call_operand.hbm [shape: f32[2,8,32], index: 0, kind: input, shape index: {}]
  %s1 = inlined_call_operand.hbm [shape: f32[2,16,24], index: 1, kind: input, shape index: {}]
  %s2 = inlined_call_operand.hbm [shape: f32[32,32], index: 2, kind: input, shape index: {}]
  %s3 = inlined_call_operand.hbm [shape: f32[24,64], index: 3, kind: input, shape index: {}]
  %s4 = inlined_call_operand.hbm [shape: f32[32,32], index: 4, kind: input, shape index: {}]
  %s5 = inlined_call_operand.hbm [shape: f32[1,32], index: 5, kind: input, shape index: {}]
  %s6 = inlined_call_operand.hbm [shape: f32[2,8,32], index: 6, kind: output, shape index: {}]
  %s7 = sld [smem:[#allocation0]]
  $region81: #{tpu_custom_call.1} parent=0
    _
  %s9 = ssub.s32 1, %s7
  %s10 = scalar_select 0, %s9, %s7
  $region1: #{tpu_custom_call.1} parent=0
    #allocation3 [shape = 'u8[8192]{0}', space=vmem, size = 0x2000, scoped, tag = 'input window, operand 0']
    #allocation4 [shape = 's32[2]{0}', space=sflag, size = 0x8, scoped, tag = 'scoped memory for tpu_custom_call.1']
    #allocation5 [shape = 's32[2]{0}', space=sflag, size = 0x8, scoped, tag = 'scoped memory for tpu_custom_call.1']
    #allocation6 [shape = 'u8[16384]{0}', space=vmem, size = 0x4000, scoped, tag = 'input window, operand 1']
    #allocation7 [shape = 's32[2]{0}', space=sflag, size = 0x8, scoped, tag = 'scoped memory for tpu_custom_call.1']
    #allocation8 [shape = 'u8[16384]{0}', space=vmem, size = 0x4000, scoped, tag = 'input window, operand 2, single buffered']
    #allocation9 [shape = 'u8[12288]{0}', space=vmem, size = 0x3000, scoped, tag = 'input window, operand 3, single buffered']
    #allocation10 [shape = 's32[1]{0}', space=sflag, size = 0x4, scoped, tag = 'scoped memory for tpu_custom_call.1']
    #allocation11 [shape = 'u8[16384]{0}', space=vmem, size = 0x4000, scoped, tag = 'input window, operand 4, single buffered']
    #allocation12 [shape = 'u8[512]{0}', space=vmem, size = 0x400, scoped, tag = 'input window, operand 5, single buffered']
    #allocation13 [shape = 's32[1]{0}', space=sflag, size = 0x4, scoped, tag = 'scoped memory for tpu_custom_call.1']
    #allocation14 [shape = 'u8[8192]{0}', space=vmem, size = 0x2000, scoped, tag = 'output window, operand 0']
    %11 = vsyncpa [#allocation4], 0
    %s12 = scalar_lea.sflag [#allocation4], 1
    %13 = vsyncpa %s12, 0
    %14 = vsyncpa [#allocation7], 0
    %s15 = scalar_lea.sflag [#allocation7], 1
    %16 = vsyncpa %s15, 0
    %17 = vsyncpa [#allocation10], 0
    %18 = vsyncpa [#allocation13], 0
    %19 = vsyncpa [#allocation5], 0
    %s20 = scalar_lea.sflag [#allocation5], 1
    %21 = vsyncpa %s20, 0
    loop: start=0, step=1, limit=4
    $region2: #{tpu_custom_call.1} parent=1 // loop_pre_header
      _
    $region3: #{tpu_custom_call.1} parent=1 // loop_header
      %s23 = sphi 0, %s27
      %p24 = scmp.ge.s32.totalorder %s23, 4
      %s33 = sphi 0, %s35
      %s36 = sphi 0, %s33
      %s37 = sphi 0, %s36
      %s53 = sphi 0, %s37
      %s59 = sphi 0, %s61
      %s62 = sphi 0, %s59
      %s63 = sphi 0, %s62
      %s79 = sphi 0, %s63
      %s83 = sphi 0, %s83
      %s85 = sphi 0, %s83
      %s86 = sphi 0, %s85
      %s100 = sphi 0, %s86
      %s104 = sphi 0, %s104
      %s106 = sphi 0, %s104
      %s107 = sphi 0, %s106
      %s121 = sphi 0, %s107
      %s125 = sphi 0, %s125
      %s127 = sphi 0, %s125
      %s128 = sphi 0, %s127
      %s142 = sphi 0, %s128
      %s146 = sphi 0, %s146
      %s148 = sphi 0, %s146
      %s149 = sphi 0, %s148
      %s163 = sphi 0, %s149
      %s169 = sphi 0, %s171
      %s172 = sphi 0, %s169
      %s173 = sphi 0, %s172
      %s189 = sphi 0, %s173
    $region4: #{tpu_custom_call.1} parent=1 // loop_header_branch
      %26 = sbr.rel (%p24) target = $region8
    $region5: #{tpu_custom_call.1} parent=1 // loop_body
      %s28 = ssub.s32 %s23, 1
      %s29 = ssub.s32 %s23, 2
      %s30 = sadd.s32 %s23, 1
      %s31 = ssub.s32 %s23, %s30
      %p32 = scmp.eq.s32.totalorder %s31, 0
      %s34 = sadd.s32 %s33, 1
      %s35 = scalar_select %p32, %s33, %s34
      %p38 = pneg %p32
      %p39 = scmp.eq.s32.totalorder %s23, 1
      %p40 = por %p38, %p39
      %p41 = scmp.ne.s32.totalorder %s33, %s36
      %p42 = scmp.eq.s32.totalorder %s23, 0
      %p43 = por %p41, %p42
      %p44 = scmp.ne.s32.totalorder %s33, %s36
      %p45 = scmp.eq.s32.totalorder %s28, 1
      %p46 = por %p44, %p45
      %p47 = scmp.ne.s32.totalorder %s36, %s37
      %p48 = scmp.eq.s32.totalorder %s28, 0
      %p49 = por %p47, %p48
      %p50 = scmp.ne.s32.totalorder %s36, %s37
      %p51 = scmp.eq.s32.totalorder %s29, 1
      %p52 = por %p50, %p51
      %p54 = scmp.ne.s32.totalorder %s37, %s53
      %p55 = scmp.eq.s32.totalorder %s29, 0
      %p56 = por %p54, %p55
      %s57 = ssub.s32 %s23, %s30
      %p58 = scmp.eq.s32.totalorder %s57, 0
      %s60 = sadd.s32 %s59, 1
      %s61 = scalar_select %p58, %s59, %s60
      %p64 = pneg %p58
      %p65 = scmp.eq.s32.totalorder %s23, 1
      %p66 = por %p64, %p65
      %p67 = scmp.ne.s32.totalorder %s59, %s62
      %p68 = scmp.eq.s32.totalorder %s23, 0
      %p69 = por %p67, %p68
      %p70 = scmp.ne.s32.totalorder %s59, %s62
      %p71 = scmp.eq.s32.totalorder %s28, 1
      %p72 = por %p70, %p71
      %p73 = scmp.ne.s32.totalorder %s62, %s63
      %p74 = scmp.eq.s32.totalorder %s28, 0
      %p75 = por %p73, %p74
      %p76 = scmp.ne.s32.totalorder %s62, %s63
      %p77 = scmp.eq.s32.totalorder %s29, 1
      %p78 = por %p76, %p77
      %p80 = scmp.ne.s32.totalorder %s63, %s79
      %p81 = scmp.eq.s32.totalorder %s29, 0
      %p82 = por %p80, %p81
      %s84 = sadd.s32 %s83, 1
      %p87 = scmp.eq.s32.totalorder %s23, 1
      %p88 = scmp.ne.s32.totalorder %s83, %s85
      %p89 = scmp.eq.s32.totalorder %s23, 0
      %p90 = por %p88, %p89
      %p91 = scmp.ne.s32.totalorder %s83, %s85
      %p92 = scmp.eq.s32.totalorder %s28, 1
      %p93 = por %p91, %p92
      %p94 = scmp.ne.s32.totalorder %s85, %s86
      %p95 = scmp.eq.s32.totalorder %s28, 0
      %p96 = por %p94, %p95
      %p97 = scmp.ne.s32.totalorder %s85, %s86
      %p98 = scmp.eq.s32.totalorder %s29, 1
      %p99 = por %p97, %p98
      %p101 = scmp.ne.s32.totalorder %s86, %s100
      %p102 = scmp.eq.s32.totalorder %s29, 0
      %p103 = por %p101, %p102
      %s105 = sadd.s32 %s104, 1
      %p108 = scmp.eq.s32.totalorder %s23, 1
      %p109 = scmp.ne.s32.totalorder %s104, %s106
      %p110 = scmp.eq.s32.totalorder %s23, 0
      %p111 = por %p109, %p110
      %p112 = scmp.ne.s32.totalorder %s104, %s106
      %p113 = scmp.eq.s32.totalorder %s28, 1
      %p114 = por %p112, %p113
      %p115 = scmp.ne.s32.totalorder %s106, %s107
      %p116 = scmp.eq.s32.totalorder %s28, 0
      %p117 = por %p115, %p116
      %p118 = scmp.ne.s32.totalorder %s106, %s107
      %p119 = scmp.eq.s32.totalorder %s29, 1
      %p120 = por %p118, %p119
      %p122 = scmp.ne.s32.totalorder %s107, %s121
      %p123 = scmp.eq.s32.totalorder %s29, 0
      %p124 = por %p122, %p123
      %s126 = sadd.s32 %s125, 1
      %p129 = scmp.eq.s32.totalorder %s23, 1
      %p130 = scmp.ne.s32.totalorder %s125, %s127
      %p131 = scmp.eq.s32.totalorder %s23, 0
      %p132 = por %p130, %p131
      %p133 = scmp.ne.s32.totalorder %s125, %s127
      %p134 = scmp.eq.s32.totalorder %s28, 1
      %p135 = por %p133, %p134
      %p136 = scmp.ne.s32.totalorder %s127, %s128
      %p137 = scmp.eq.s32.totalorder %s28, 0
      %p138 = por %p136, %p137
      %p139 = scmp.ne.s32.totalorder %s127, %s128
      %p140 = scmp.eq.s32.totalorder %s29, 1
      %p141 = por %p139, %p140
      %p143 = scmp.ne.s32.totalorder %s128, %s142
      %p144 = scmp.eq.s32.totalorder %s29, 0
      %p145 = por %p143, %p144
      %s147 = sadd.s32 %s146, 1
      %p150 = scmp.eq.s32.totalorder %s23, 1
      %p151 = scmp.ne.s32.totalorder %s146, %s148
      %p152 = scmp.eq.s32.totalorder %s23, 0
      %p153 = por %p151, %p152
      %p154 = scmp.ne.s32.totalorder %s146, %s148
      %p155 = scmp.eq.s32.totalorder %s28, 1
      %p156 = por %p154, %p155
      %p157 = scmp.ne.s32.totalorder %s148, %s149
      %p158 = scmp.eq.s32.totalorder %s28, 0
      %p159 = por %p157, %p158
      %p160 = scmp.ne.s32.totalorder %s148, %s149
      %p161 = scmp.eq.s32.totalorder %s29, 1
      %p162 = por %p160, %p161
      %p164 = scmp.ne.s32.totalorder %s149, %s163
      %p165 = scmp.eq.s32.totalorder %s29, 0
      %p166 = por %p164, %p165
      %s167 = ssub.s32 %s23, %s30
      %p168 = scmp.eq.s32.totalorder %s167, 0
      %s170 = sadd.s32 %s169, 1
      %s171 = scalar_select %p168, %s169, %s170
      %p174 = pneg %p168
      %p175 = scmp.eq.s32.totalorder %s23, 1
      %p176 = por %p174, %p175
      %p177 = scmp.ne.s32.totalorder %s169, %s172
      %p178 = scmp.eq.s32.totalorder %s23, 0
      %p179 = por %p177, %p178
      %p180 = scmp.ne.s32.totalorder %s169, %s172
      %p181 = scmp.eq.s32.totalorder %s28, 1
      %p182 = por %p180, %p181
      %p183 = scmp.ne.s32.totalorder %s172, %s173
      %p184 = scmp.eq.s32.totalorder %s28, 0
      %p185 = por %p183, %p184
      %p186 = scmp.ne.s32.totalorder %s172, %s173
      %p187 = scmp.eq.s32.totalorder %s29, 1
      %p188 = por %p186, %p187
      %p190 = scmp.ne.s32.totalorder %s173, %s189
      %p191 = scmp.eq.s32.totalorder %s29, 0
      %p192 = por %p190, %p191
      %p193 = scmp.le.s32.totalorder 1, %s23
      %p194 = scmp.lt.s32.totalorder %s23, 3
      %p195 = pnand %p193, %p194
      %p196 = pneg %p195
      // Predicated region
      $region9: #{tpu_custom_call.1} parent=5 // pred_check
        _
      $region10: #{tpu_custom_call.1} parent=5 // pred_check_branch
        %198 = sbr.rel (%p195) target = $region12
      $region11: #{tpu_custom_call.1} parent=5 // pred_region
        %s199 = ssub.s32 %s23, 1
        // Predicated region
        $region13: #{tpu_custom_call.1} parent=11 // pred_check
          %p200 = pneg %p96
        $region14: #{tpu_custom_call.1} parent=11 // pred_check_branch
          %202 = sbr.rel (%p200) target = $region16
        $region15: #{tpu_custom_call.1} parent=11 // pred_region
          %s204 = ssub.s32 512, 512
          %205 = vsyncadd [#allocation7], %s204
          %s206 = sshll.u32 [#allocation8], 4
          %s207 = int_to_ptr.vmem [resolvable:$true] %s206
          %212 = dma.hbm_to_vmem [thread:$0]  %s2, 512, %s207, [#allocation7], 128, 128, 8
        $region16: #{tpu_custom_call.1} parent=11 // pred_fallthru
          _
        // Predicated region
        $region17: #{tpu_custom_call.1} parent=11 // pred_check
          %p213 = pneg %p117
        $region18: #{tpu_custom_call.1} parent=11 // pred_check_branch
          %215 = sbr.rel (%p213) target = $region20
        $region19: #{tpu_custom_call.1} parent=11 // pred_region
          %s217 = ssub.s32 384, 384
          %218 = vsyncadd [#allocation10], %s217
          %s219 = sshll.u32 [#allocation9], 4
          %s220 = int_to_ptr.vmem [resolvable:$true] %s219
          %225 = dma.hbm_to_vmem [thread:$0]  %s3, 384, %s220, [#allocation10], 128, 128, 8
        $region20: #{tpu_custom_call.1} parent=11 // pred_fallthru
          _
        // Predicated region
        $region21: #{tpu_custom_call.1} parent=11 // pred_check
          %p226 = pneg %p138
        $region22: #{tpu_custom_call.1} parent=11 // pred_check_branch
          %228 = sbr.rel (%p226) target = $region24
        $region23: #{tpu_custom_call.1} parent=11 // pred_region
          %s230 = ssub.s32 512, 512
          %231 = vsyncadd [#allocation10], %s230
          %s232 = sshll.u32 [#allocation11], 4
          %s233 = int_to_ptr.vmem [resolvable:$true] %s232
          %238 = dma.hbm_to_vmem [thread:$0]  %s4, 512, %s233, [#allocation10], 128, 128, 8
        $region24: #{tpu_custom_call.1} parent=11 // pred_fallthru
          _
        // Predicated region
        $region25: #{tpu_custom_call.1} parent=11 // pred_check
          %p239 = pneg %p159
        $region26: #{tpu_custom_call.1} parent=11 // pred_check_branch
          %241 = sbr.rel (%p239) target = $region28
        $region27: #{tpu_custom_call.1} parent=11 // pred_region
          %s243 = ssub.s32 16, 16
          %244 = vsyncadd [#allocation13], %s243
          %s246 = sshll.u32 [#allocation12], 4
          %s247 = int_to_ptr.vmem [resolvable:$true] %s246
          %249 = dma.hbm_to_vmem [thread:$0]  %s5, 16, %s247, [#allocation13]
        $region28: #{tpu_custom_call.1} parent=11 // pred_fallthru
          _
      $region12: #{tpu_custom_call.1} parent=5 // pred_fallthru
        _
      %p250 = scmp.lt.s32.totalorder %s23, 2
      // Predicated region
      $region29: #{tpu_custom_call.1} parent=5 // pred_check
        %p251 = pneg %p250
      $region30: #{tpu_custom_call.1} parent=5 // pred_check_branch
        %253 = sbr.rel (%p251) target = $region32
      $region31: #{tpu_custom_call.1} parent=5 // pred_region
        // Predicated region
        $region33: #{tpu_custom_call.1} parent=31 // pred_check
          %p254 = pneg %p43
        $region34: #{tpu_custom_call.1} parent=31 // pred_check_branch
          %256 = sbr.rel (%p254) target = $region36
        $region35: #{tpu_custom_call.1} parent=31 // pred_region
          %s257 = sand.u32 %s33, 1
          %s258 = scalar_lea.sflag [#allocation4], %s257
          %s259 = sand.u32 %s33, 1
          %s260 = smul.addr %s259, 8
          %s261 = scalar_lea.vmem [#allocation3], %s260
          %s263 = ssub.s32 128, 128
          %264 = vsyncadd %s258, %s263
          %s265 = smul.addr %s23, 128
          %s266 = scalar_lea.hbm %s0, %s265
          %s268 = sshll.u32 %s261, 4
          %s269 = int_to_ptr.vmem [resolvable:$true] %s268
          %271 = dma.hbm_to_vmem [thread:$0]  %s266, 128, %s269, %s258
        $region36: #{tpu_custom_call.1} parent=31 // pred_fallthru
          _
        // Predicated region
        $region37: #{tpu_custom_call.1} parent=31 // pred_check
          %p272 = pneg %p69
        $region38: #{tpu_custom_call.1} parent=31 // pred_check_branch
          %274 = sbr.rel (%p272) target = $region40
        $region39: #{tpu_custom_call.1} parent=31 // pred_region
          %s275 = sand.u32 %s23, 1
          %s276 = scalar_lea.sflag [#allocation7], %s275
          %s277 = sand.u32 %s59, 1
          %s278 = smul.addr %s277, 16
          %s279 = scalar_lea.vmem [#allocation6], %s278
          %s281 = ssub.s32 256, 256
          %282 = vsyncadd %s276, %s281
          %s283 = smul.addr %s23, 2
          %s284 = smul.addr %s283, 128
          %s285 = scalar_lea.hbm %s1, %s284
          %s286 = sshll.u32 %s279, 4
          %s287 = int_to_ptr.vmem [resolvable:$true] %s286
          %292 = dma.hbm_to_vmem [thread:$0]  %s285, 256, %s287, %s276, 128, 128, 8
        $region40: #{tpu_custom_call.1} parent=31 // pred_fallthru
          _
      $region32: #{tpu_custom_call.1} parent=5 // pred_fallthru
        _
      %p293 = scmp.le.s32.totalorder 1, %s23
      %p294 = scmp.lt.s32.totalorder %s23, 3
      %p295 = pnand %p293, %p294
      %p296 = pneg %p295
      // Predicated region
      $region41: #{tpu_custom_call.1} parent=5 // pred_check
        _
      $region42: #{tpu_custom_call.1} parent=5 // pred_check_branch
        %298 = sbr.rel (%p295) target = $region44
      $region43: #{tpu_custom_call.1} parent=5 // pred_region
        %s299 = ssub.s32 %s23, 1
        %s300 = sand.u32 %s36, 1
        %s301 = scalar_lea.sflag [#allocation4], %s300
        %s302 = sand.u32 %s36, 1
        %s303 = smul.addr %s302, 8
        %s304 = scalar_lea.vmem [#allocation3], %s303
        // Predicated region
        $region45: #{tpu_custom_call.1} parent=43 // pred_check
          %p305 = pneg %p49
        $region46: #{tpu_custom_call.1} parent=43 // pred_check_branch
          %307 = sbr.rel (%p305) target = $region48
        $region47: #{tpu_custom_call.1} parent=43 // pred_region
          %308 = dma.done %s301, 128
        $region48: #{tpu_custom_call.1} parent=43 // pred_fallthru
          _
        %s309 = sand.u32 %s28, 1
        %s310 = scalar_lea.sflag [#allocation7], %s309
        %s311 = sand.u32 %s62, 1
        %s312 = smul.addr %s311, 16
        %s313 = scalar_lea.vmem [#allocation6], %s312
        // Predicated region
        $region49: #{tpu_custom_call.1} parent=43 // pred_check
          %p314 = pneg %p75
        $region50: #{tpu_custom_call.1} parent=43 // pred_check_branch
          %316 = sbr.rel (%p314) target = $region52
        $region51: #{tpu_custom_call.1} parent=43 // pred_region
          %317 = dma.done %s310, 256
        $region52: #{tpu_custom_call.1} parent=43 // pred_fallthru
          _
        // Predicated region
        $region53: #{tpu_custom_call.1} parent=43 // pred_check
          %p318 = pneg %p96
        $region54: #{tpu_custom_call.1} parent=43 // pred_check_branch
          %320 = sbr.rel (%p318) target = $region56
        $region55: #{tpu_custom_call.1} parent=43 // pred_region
          %321 = dma.done [#allocation7], 512
        $region56: #{tpu_custom_call.1} parent=43 // pred_fallthru
          _
        // Predicated region
        $region57: #{tpu_custom_call.1} parent=43 // pred_check
          %p322 = pneg %p117
        $region58: #{tpu_custom_call.1} parent=43 // pred_check_branch
          %324 = sbr.rel (%p322) target = $region60
        $region59: #{tpu_custom_call.1} parent=43 // pred_region
          %325 = dma.done [#allocation10], 384
        $region60: #{tpu_custom_call.1} parent=43 // pred_fallthru
          _
        // Predicated region
        $region61: #{tpu_custom_call.1} parent=43 // pred_check
          %p326 = pneg %p138
        $region62: #{tpu_custom_call.1} parent=43 // pred_check_branch
          %328 = sbr.rel (%p326) target = $region64
        $region63: #{tpu_custom_call.1} parent=43 // pred_region
          %329 = dma.done [#allocation10], 512
        $region64: #{tpu_custom_call.1} parent=43 // pred_fallthru
          _
        // Predicated region
        $region65: #{tpu_custom_call.1} parent=43 // pred_check
          %p330 = pneg %p159
        $region66: #{tpu_custom_call.1} parent=43 // pred_check_branch
          %332 = sbr.rel (%p330) target = $region68
        $region67: #{tpu_custom_call.1} parent=43 // pred_region
          %333 = dma.done [#allocation13], 16
        $region68: #{tpu_custom_call.1} parent=43 // pred_fallthru
          _
        %s334 = sand.u32 %s36, 1
        %s335 = scalar_lea.sflag [#allocation4], %s334
        %s336 = sand.u32 %s36, 1
        %s337 = smul.addr %s336, 8
        %s338 = scalar_lea.vmem [#allocation3], %s337
        %p339 = pneg %p49
        %p340 = pneg %p46
        %s341 = sand.u32 %s28, 1
        %s342 = scalar_lea.sflag [#allocation7], %s341
        %s343 = sand.u32 %s62, 1
        %s344 = smul.addr %s343, 16
        %s345 = scalar_lea.vmem [#allocation6], %s344
        %p346 = pneg %p75
        %p347 = pneg %p72
        %p348 = pneg %p96
        %p349 = pneg %p93
        %p350 = pneg %p117
        %p351 = pneg %p114
        %p352 = pneg %p138
        %p353 = pneg %p135
        %p354 = pneg %p159
        %p355 = pneg %p156
        %p356 = pneg %p185
        %p357 = pneg %p182
        %s358 = sand.u32 %s172, 1
        %s359 = scalar_lea.sflag [#allocation5], %s358
        %s360 = sand.u32 %s172, 1
        %s361 = smul.addr %s360, 8
        %s362 = scalar_lea.vmem [#allocation14], %s361
        %v363 = vld [vmem:[%s304] sm:$0xff]
        %v364 = vld [vmem:[%s313] sm:$0xff]
        %v365 = vld [vmem:[%s313 + $0x8] sm:$0xff]
        %v366 = vld [vmem:[#allocation8] sm:$0xff]
        %v367 = vld [vmem:[#allocation8 + $0x8] sm:$0xff]
        %v368 = vld [vmem:[#allocation8 + $0x10] sm:$0xff]
        %v369 = vld [vmem:[#allocation8 + $0x18] sm:$0xff]
        %vm370 = vcmask 261120
        %v372 = vsel %vm370, %v363, 0
        %374 = vmatprep.subr.mxu0 0.0
        %375 = vmatpush1.msra.mxu0 %v366
        %376 = vmatprep.subr.mxu0 0.0
        %377 = vmatpush1.msra.mxu0 %v367
        %378 = vmatprep.subr.mxu0 0.0
        %379 = vmatpush1.msra.mxu0 %v368
        %380 = vmatprep.subr.mxu0 0.0
        %381 = vmatpush1.msra.mxu0 %v369
        %382 = vmatprep.subr.mxu0 0.0
        %383 = vmatpush1.msra.mxu0 0.0
        %384 = vmatprep.subr.mxu0 0.0
        %385 = vmatpush1.msra.mxu0 0.0
        %386 = vmatprep.subr.mxu0 0.0
        %387 = vmatpush1.msra.mxu0 0.0
        %388 = vmatprep.subr.mxu0 0.0
        %389 = vmatpush1.msra.mxu0 0.0
        %390 = vmatprep.subr.mxu0 0.0
        %391 = vmatpush1.msra.mxu0 0.0
        %392 = vmatprep.subr.mxu0 0.0
        %393 = vmatpush1.msra.mxu0 0.0
        %394 = vmatprep.subr.mxu0 0.0
        %395 = vmatpush1.msra.mxu0 0.0
        %396 = vmatprep.subr.mxu0 0.0
        %397 = vmatpush1.msra.mxu0 0.0
        %398 = vmatprep.subr.mxu0 0.0
        %399 = vmatpush1.msra.mxu0 0.0
        %400 = vmatprep.subr.mxu0 0.0
        %401 = vmatpush1.msra.mxu0 0.0
        %402 = vmatprep.subr.mxu0 0.0
        %403 = vmatpush1.msra.mxu0 0.0
        %404 = vmatprep.subr.mxu0 0.0
        %405 = vmatpush1.msra.mxu0 0.0
        %406 = vmatprep.subr.mxu0 0.0
        %407 = vmatpush1.msra.mxu0 0.0
        %408 = vmatprep.subr.mxu0 0.0
        %409 = vmatpush1.msra.mxu0 0.0
        %410 = vmatprep.subr.mxu0 0.0
        %411 = vmatpush1.msra.mxu0 0.0
        %412 = vmatprep.subr.mxu0 0.0
        %413 = vmatpush1.msra.mxu0 0.0
        %414 = vmatprep.subr.mxu0 0.0
        %415 = vmatpush1.msra.mxu0 0.0
        %416 = vmatprep.subr.mxu0 0.0
        %417 = vmatpush1.msra.mxu0 0.0
        %418 = vmatprep.subr.mxu0 0.0
        %419 = vmatpush1.msra.mxu0 0.0
        %420 = vmatprep.subr.mxu0 0.0
        %421 = vmatpush1.msra.mxu0 0.0
        %422 = vmatprep.subr.mxu0 0.0
        %423 = vmatpush1.msra.mxu0 0.0
        %424 = vmatprep.subr.mxu0 0.0
        %425 = vmatpush1.msra.mxu0 0.0
        %426 = vmatprep.subr.mxu0 0.0
        %427 = vmatpush1.msra.mxu0 0.0
        %428 = vmatprep.subr.mxu0 0.0
        %429 = vmatpush1.msra.mxu0 0.0
        %430 = vmatprep.subr.mxu0 0.0
        %431 = vmatpush1.msra.mxu0 0.0
        %432 = vmatprep.subr.mxu0 0.0
        %433 = vmatpush1.msra.mxu0 0.0
        %434 = vmatprep.subr.mxu0 0.0
        %435 = vmatpush1.msra.mxu0 0.0
        %436 = vmatprep.subr.mxu0 0.0
        %437 = vmatpush1.msra.mxu0 0.0
        %438 = vmatprep.mubr.f32.mxu0 0.0
        %439 = vmatmul.mubr.f32.gmra.mrb[0].mxu0 %v372
        %v440 = vpop.f32.mrb[0].mxu0
        %v441 = vadd.f32 0.0, %v440
        %v442 = vpop.f32.mrb[0].mxu0
        %443 = vdwg.mxu0
        %v444 = vmul.f32 %v441, 0.35355338
        %v445 = vld [vmem:[#allocation9] sm:$0xff]
        %v446 = vld [vmem:[#allocation9 + $0x8] sm:$0xff]
        %v447 = vld [vmem:[#allocation9 + $0x10] sm:$0xff]
        %vm448 = vcmask 195584
        %v450 = vsel %vm448, %v364, 0
        %v453 = vsel %vm448, %v365, 0
        %455 = vmatprep.subr.mxu0 0.0
        %456 = vmatpush1.msra.mxu0 %v445
        %457 = vmatprep.subr.mxu0 0.0
        %458 = vmatpush1.msra.mxu0 %v446
        %459 = vmatprep.subr.mxu0 0.0
        %460 = vmatpush1.msra.mxu0 %v447
        %461 = vmatprep.subr.mxu0 0.0
        %462 = vmatpush1.msra.mxu0 0.0
        %463 = vmatprep.subr.mxu0 0.0
        %464 = vmatpush1.msra.mxu0 0.0
        %465 = vmatprep.subr.mxu0 0.0
        %466 = vmatpush1.msra.mxu0 0.0
        %467 = vmatprep.subr.mxu0 0.0
        %468 = vmatpush1.msra.mxu0 0.0
        %469 = vmatprep.subr.mxu0 0.0
        %470 = vmatpush1.msra.mxu0 0.0
        %471 = vmatprep.subr.mxu0 0.0
        %472 = vmatpush1.msra.mxu0 0.0
        %473 = vmatprep.subr.mxu0 0.0
        %474 = vmatpush1.msra.mxu0 0.0
        %475 = vmatprep.subr.mxu0 0.0
        %476 = vmatpush1.msra.mxu0 0.0
        %477 = vmatprep.subr.mxu0 0.0
        %478 = vmatpush1.msra.mxu0 0.0
        %479 = vmatprep.subr.mxu0 0.0
        %480 = vmatpush1.msra.mxu0 0.0
        %481 = vmatprep.subr.mxu0 0.0
        %482 = vmatpush1.msra.mxu0 0.0
        %483 = vmatprep.subr.mxu0 0.0
        %484 = vmatpush1.msra.mxu0 0.0
        %485 = vmatprep.subr.mxu0 0.0
        %486 = vmatpush1.msra.mxu0 0.0
        %487 = vmatprep.subr.mxu0 0.0
        %488 = vmatpush1.msra.mxu0 0.0
        %489 = vmatprep.subr.mxu0 0.0
        %490 = vmatpush1.msra.mxu0 0.0
        %491 = vmatprep.subr.mxu0 0.0
        %492 = vmatpush1.msra.mxu0 0.0
        %493 = vmatprep.subr.mxu0 0.0
        %494 = vmatpush1.msra.mxu0 0.0
        %495 = vmatprep.subr.mxu0 0.0
        %496 = vmatpush1.msra.mxu0 0.0
        %497 = vmatprep.subr.mxu0 0.0
        %498 = vmatpush1.msra.mxu0 0.0
        %499 = vmatprep.subr.mxu0 0.0
        %500 = vmatpush1.msra.mxu0 0.0
        %501 = vmatprep.subr.mxu0 0.0
        %502 = vmatpush1.msra.mxu0 0.0
        %503 = vmatprep.subr.mxu0 0.0
        %504 = vmatpush1.msra.mxu0 0.0
        %505 = vmatprep.subr.mxu0 0.0
        %506 = vmatpush1.msra.mxu0 0.0
        %507 = vmatprep.subr.mxu0 0.0
        %508 = vmatpush1.msra.mxu0 0.0
        %509 = vmatprep.subr.mxu0 0.0
        %510 = vmatpush1.msra.mxu0 0.0
        %511 = vmatprep.subr.mxu0 0.0
        %512 = vmatpush1.msra.mxu0 0.0
        %513 = vmatprep.subr.mxu0 0.0
        %514 = vmatpush1.msra.mxu0 0.0
        %515 = vmatprep.subr.mxu0 0.0
        %516 = vmatpush1.msra.mxu0 0.0
        %517 = vmatprep.subr.mxu0 0.0
        %518 = vmatpush1.msra.mxu0 0.0
        %519 = vmatprep.mubr.f32.mxu0 0.0
        %520 = vmatmul.mubr.f32.gmra.mrb[0].mxu0 %v450
        %v521 = vpop.f32.mrb[0].mxu0
        %v522 = vadd.f32 0.0, %v521
        %v523 = vpop.f32.mrb[0].mxu0
        %524 = vmatprep.mubr.f32.mxu0 0.0
        %525 = vmatmul.mubr.f32.gmra.mrb[0].mxu0 %v453
        %v526 = vpop.f32.mrb[0].mxu0
        %v527 = vadd.f32 0.0, %v526
        %v528 = vpop.f32.mrb[0].mxu0
        %529 = vdwg.mxu0
        %vm530 = vcmask 64512
        %v532 = vsel %vm530, %v444, 0
        %v535 = vsel %vm530, %v522, 0
        %v538 = vsel %vm530, %v527, 0
        %540 = vmatprep.subr.mxu0 0.0
        %541 = vmatpush1.xpose.msra.mxu0 %v535
        %542 = vmatprep.subr.mxu0 0.0
        %543 = vmatpush1.xpose.msra.mxu0 %v538
        %544 = vmatprep.subr.mxu0 0.0
        %545 = vmatpush1.xpose.msra.mxu0 0.0
        %546 = vmatprep.subr.mxu0 0.0
        %547 = vmatpush1.xpose.msra.mxu0 0.0
        %548 = vmatprep.subr.mxu0 0.0
        %549 = vmatpush1.xpose.msra.mxu0 0.0
        %550 = vmatprep.subr.mxu0 0.0
        %551 = vmatpush1.xpose.msra.mxu0 0.0
        %552 = vmatprep.subr.mxu0 0.0
        %553 = vmatpush1.xpose.msra.mxu0 0.0
        %554 = vmatprep.subr.mxu0 0.0
        %555 = vmatpush1.xpose.msra.mxu0 0.0
        %556 = vmatprep.subr.mxu0 0.0
        %557 = vmatpush1.xpose.msra.mxu0 0.0
        %558 = vmatprep.subr.mxu0 0.0
        %559 = vmatpush1.xpose.msra.mxu0 0.0
        %560 = vmatprep.subr.mxu0 0.0
        %561 = vmatpush1.xpose.msra.mxu0 0.0
        %562 = vmatprep.subr.mxu0 0.0
        %563 = vmatpush1.xpose.msra.mxu0 0.0
        %564 = vmatprep.subr.mxu0 0.0
        %565 = vmatpush1.xpose.msra.mxu0 0.0
        %566 = vmatprep.subr.mxu0 0.0
        %567 = vmatpush1.xpose.msra.mxu0 0.0
        %568 = vmatprep.subr.mxu0 0.0
        %569 = vmatpush1.xpose.msra.mxu0 0.0
        %570 = vmatprep.subr.mxu0 0.0
        %571 = vmatpush1.xpose.msra.mxu0 0.0
        %572 = vmatprep.subr.mxu0 0.0
        %573 = vmatpush1.xpose.msra.mxu0 0.0
        %574 = vmatprep.subr.mxu0 0.0
        %575 = vmatpush1.xpose.msra.mxu0 0.0
        %576 = vmatprep.subr.mxu0 0.0
        %577 = vmatpush1.xpose.msra.mxu0 0.0
        %578 = vmatprep.subr.mxu0 0.0
        %579 = vmatpush1.xpose.msra.mxu0 0.0
        %580 = vmatprep.subr.mxu0 0.0
        %581 = vmatpush1.xpose.msra.mxu0 0.0
        %582 = vmatprep.subr.mxu0 0.0
        %583 = vmatpush1.xpose.msra.mxu0 0.0
        %584 = vmatprep.subr.mxu0 0.0
        %585 = vmatpush1.xpose.msra.mxu0 0.0
        %586 = vmatprep.subr.mxu0 0.0
        %587 = vmatpush1.xpose.msra.mxu0 0.0
        %588 = vmatprep.subr.mxu0 0.0
        %589 = vmatpush1.xpose.msra.mxu0 0.0
        %590 = vmatprep.subr.mxu0 0.0
        %591 = vmatpush1.xpose.msra.mxu0 0.0
        %592 = vmatprep.subr.mxu0 0.0
        %593 = vmatpush1.xpose.msra.mxu0 0.0
        %594 = vmatprep.subr.mxu0 0.0
        %595 = vmatpush1.xpose.msra.mxu0 0.0
        %596 = vmatprep.subr.mxu0 0.0
        %597 = vmatpush1.xpose.msra.mxu0 0.0
        %598 = vmatprep.subr.mxu0 0.0
        %599 = vmatpush1.xpose.msra.mxu0 0.0
        %600 = vmatprep.subr.mxu0 0.0
        %601 = vmatpush1.xpose.msra.mxu0 0.0
        %602 = vmatprep.subr.mxu0 0.0
        %603 = vmatpush1.xpose.msra.mxu0 0.0
        %604 = vmatprep.mubr.f32.mxu0 0.0
        %605 = vmatmul.mubr.f32.gmra.mrb[0].mxu0 %v532
        %v606 = vpop.f32.mrb[0].mxu0
        %v607 = vadd.f32 0.0, %v606
        %v608 = vpop.f32.mrb[0].mxu0
        %609 = vdwg.mxu0
        %vm610 = vcmask 130048
        %v611 = vsel %vm610, %v607, -inf
        %612 = vmax.xlane.f32.xlu0 %v611
        %v613 = vpop.xlane.xlu0 %612
        %v614 = vsub.f32 %v607, %v613
        %v615 = vmul.f32 %v614, 1.442695
        %v616 = vpow.pop %v615
        %v617 = vsel %vm610, %v616, 0.0
        %618 = vadd.xlane.f32.xlu0 %v617
        %v619 = vpop.xlane.xlu0 %618
        %v620 = vrcp.pop %v619
        %v621 = vmul.f32 %v616, %v620
        %622 = vrot.lane.b32.xlu0 %v522, 96
        %v623 = vpop.permute.xlu0 %622
        %624 = vrot.lane.b32.xlu0 %v527, 96
        %v625 = vpop.permute.xlu0 %624
        %v629 = vsel %vm610, %v621, 0
        %631 = vmatprep.subr.mxu0 0.0
        %632 = vmatpush1.msra.mxu0 %v623
        %633 = vmatprep.subr.mxu0 0.0
        %634 = vmatpush1.msra.mxu0 %v625
        %635 = vmatprep.subr.mxu0 0.0
        %636 = vmatpush1.msra.mxu0 0.0
        %637 = vmatprep.subr.mxu0 0.0
        %638 = vmatpush1.msra.mxu0 0.0
        %639 = vmatprep.subr.mxu0 0.0
        %640 = vmatpush1.msra.mxu0 0.0
        %641 = vmatprep.subr.mxu0 0.0
        %642 = vmatpush1.msra.mxu0 0.0
        %643 = vmatprep.subr.mxu0 0.0
        %644 = vmatpush1.msra.mxu0 0.0
        %645 = vmatprep.subr.mxu0 0.0
        %646 = vmatpush1.msra.mxu0 0.0
        %647 = vmatprep.subr.mxu0 0.0
        %648 = vmatpush1.msra.mxu0 0.0
        %649 = vmatprep.subr.mxu0 0.0
        %650 = vmatpush1.msra.mxu0 0.0
        %651 = vmatprep.subr.mxu0 0.0
        %652 = vmatpush1.msra.mxu0 0.0
        %653 = vmatprep.subr.mxu0 0.0
        %654 = vmatpush1.msra.mxu0 0.0
        %655 = vmatprep.subr.mxu0 0.0
        %656 = vmatpush1.msra.mxu0 0.0
        %657 = vmatprep.subr.mxu0 0.0
        %658 = vmatpush1.msra.mxu0 0.0
        %659 = vmatprep.subr.mxu0 0.0
        %660 = vmatpush1.msra.mxu0 0.0
        %661 = vmatprep.subr.mxu0 0.0
        %662 = vmatpush1.msra.mxu0 0.0
        %663 = vmatprep.subr.mxu0 0.0
        %664 = vmatpush1.msra.mxu0 0.0
        %665 = vmatprep.subr.mxu0 0.0
        %666 = vmatpush1.msra.mxu0 0.0
        %667 = vmatprep.subr.mxu0 0.0
        %668 = vmatpush1.msra.mxu0 0.0
        %669 = vmatprep.subr.mxu0 0.0
        %670 = vmatpush1.msra.mxu0 0.0
        %671 = vmatprep.subr.mxu0 0.0
        %672 = vmatpush1.msra.mxu0 0.0
        %673 = vmatprep.subr.mxu0 0.0
        %674 = vmatpush1.msra.mxu0 0.0
        %675 = vmatprep.subr.mxu0 0.0
        %676 = vmatpush1.msra.mxu0 0.0
        %677 = vmatprep.subr.mxu0 0.0
        %678 = vmatpush1.msra.mxu0 0.0
        %679 = vmatprep.subr.mxu0 0.0
        %680 = vmatpush1.msra.mxu0 0.0
        %681 = vmatprep.subr.mxu0 0.0
        %682 = vmatpush1.msra.mxu0 0.0
        %683 = vmatprep.subr.mxu0 0.0
        %684 = vmatpush1.msra.mxu0 0.0
        %685 = vmatprep.subr.mxu0 0.0
        %686 = vmatpush1.msra.mxu0 0.0
        %687 = vmatprep.subr.mxu0 0.0
        %688 = vmatpush1.msra.mxu0 0.0
        %689 = vmatprep.subr.mxu0 0.0
        %690 = vmatpush1.msra.mxu0 0.0
        %691 = vmatprep.subr.mxu0 0.0
        %692 = vmatpush1.msra.mxu0 0.0
        %693 = vmatprep.subr.mxu0 0.0
        %694 = vmatpush1.msra.mxu0 0.0
        %695 = vmatprep.mubr.f32.mxu0 0.0
        %696 = vmatmul.mubr.f32.gmra.mrb[0].mxu0 %v629
        %v697 = vpop.f32.mrb[0].mxu0
        %v698 = vadd.f32 0.0, %v697
        %v699 = vpop.f32.mrb[0].mxu0
        %700 = vdwg.mxu0
        %701 = vst.msk [vmem:[#allocation2] sm:$0xff] %vm530, %v698
        %702 = vrot.lane.b32.xlu0 %v444, 120
        %v703 = vpop.permute.xlu0 %702
        %704 = vrot.lane.b32.xlu0 %v522, 120
        %v705 = vpop.permute.xlu0 %704
        %706 = vrot.lane.b32.xlu0 %v527, 120
        %v707 = vpop.permute.xlu0 %706
        %v708 = vsel %vm530, %v703, 0
        %v710 = vsel %vm530, %v705, 0
        %v712 = vsel %vm530, %v707, 0
        %714 = vmatprep.subr.mxu0 0.0
        %715 = vmatpush1.xpose.msra.mxu0 %v710
        %716 = vmatprep.subr.mxu0 0.0
        %717 = vmatpush1.xpose.msra.mxu0 %v712
        %718 = vmatprep.subr.mxu0 0.0
        %719 = vmatpush1.xpose.msra.mxu0 0.0
        %720 = vmatprep.subr.mxu0 0.0
        %721 = vmatpush1.xpose.msra.mxu0 0.0
        %722 = vmatprep.subr.mxu0 0.0
        %723 = vmatpush1.xpose.msra.mxu0 0.0
        %724 = vmatprep.subr.mxu0 0.0
        %725 = vmatpush1.xpose.msra.mxu0 0.0
        %726 = vmatprep.subr.mxu0 0.0
        %727 = vmatpush1.xpose.msra.mxu0 0.0
        %728 = vmatprep.subr.mxu0 0.0
        %729 = vmatpush1.xpose.msra.mxu0 0.0
        %730 = vmatprep.subr.mxu0 0.0
        %731 = vmatpush1.xpose.msra.mxu0 0.0
        %732 = vmatprep.subr.mxu0 0.0
        %733 = vmatpush1.xpose.msra.mxu0 0.0
        %734 = vmatprep.subr.mxu0 0.0
        %735 = vmatpush1.xpose.msra.mxu0 0.0
        %736 = vmatprep.subr.mxu0 0.0
        %737 = vmatpush1.xpose.msra.mxu0 0.0
        %738 = vmatprep.subr.mxu0 0.0
        %739 = vmatpush1.xpose.msra.mxu0 0.0
        %740 = vmatprep.subr.mxu0 0.0
        %741 = vmatpush1.xpose.msra.mxu0 0.0
        %742 = vmatprep.subr.mxu0 0.0
        %743 = vmatpush1.xpose.msra.mxu0 0.0
        %744 = vmatprep.subr.mxu0 0.0
        %745 = vmatpush1.xpose.msra.mxu0 0.0
        %746 = vmatprep.subr.mxu0 0.0
        %747 = vmatpush1.xpose.msra.mxu0 0.0
        %748 = vmatprep.subr.mxu0 0.0
        %749 = vmatpush1.xpose.msra.mxu0 0.0
        %750 = vmatprep.subr.mxu0 0.0
        %751 = vmatpush1.xpose.msra.mxu0 0.0
        %752 = vmatprep.subr.mxu0 0.0
        %753 = vmatpush1.xpose.msra.mxu0 0.0
        %754 = vmatprep.subr.mxu0 0.0
        %755 = vmatpush1.xpose.msra.mxu0 0.0
        %756 = vmatprep.subr.mxu0 0.0
        %757 = vmatpush1.xpose.msra.mxu0 0.0
        %758 = vmatprep.subr.mxu0 0.0
        %759 = vmatpush1.xpose.msra.mxu0 0.0
        %760 = vmatprep.subr.mxu0 0.0
        %761 = vmatpush1.xpose.msra.mxu0 0.0
        %762 = vmatprep.subr.mxu0 0.0
        %763 = vmatpush1.xpose.msra.mxu0 0.0
        %764 = vmatprep.subr.mxu0 0.0
        %765 = vmatpush1.xpose.msra.mxu0 0.0
        %766 = vmatprep.subr.mxu0 0.0
        %767 = vmatpush1.xpose.msra.mxu0 0.0
        %768 = vmatprep.subr.mxu0 0.0
        %769 = vmatpush1.xpose.msra.mxu0 0.0
        %770 = vmatprep.subr.mxu0 0.0
        %771 = vmatpush1.xpose.msra.mxu0 0.0
        %772 = vmatprep.subr.mxu0 0.0
        %773 = vmatpush1.xpose.msra.mxu0 0.0
        %774 = vmatprep.subr.mxu0 0.0
        %775 = vmatpush1.xpose.msra.mxu0 0.0
        %776 = vmatprep.subr.mxu0 0.0
        %777 = vmatpush1.xpose.msra.mxu0 0.0
        %778 = vmatprep.mubr.f32.mxu0 0.0
        %779 = vmatmul.mubr.f32.gmra.mrb[0].mxu0 %v708
        %v780 = vpop.f32.mrb[0].mxu0
        %v781 = vadd.f32 0.0, %v780
        %v782 = vpop.f32.mrb[0].mxu0
        %783 = vdwg.mxu0
        %v784 = vsel %vm610, %v781, -inf
        %785 = vmax.xlane.f32.xlu0 %v784
        %v786 = vpop.xlane.xlu0 %785
        %v787 = vsub.f32 %v781, %v786
        %v788 = vmul.f32 %v787, 1.442695
        %v789 = vpow.pop %v788
        %v790 = vsel %vm610, %v789, 0.0
        %791 = vadd.xlane.f32.xlu0 %v790
        %v792 = vpop.xlane.xlu0 %791
        %v793 = vrcp.pop %v792
        %v794 = vmul.f32 %v789, %v793
        %795 = vrot.lane.b32.xlu0 %v522, 88
        %v796 = vpop.permute.xlu0 %795
        %797 = vrot.lane.b32.xlu0 %v527, 88
        %v798 = vpop.permute.xlu0 %797
        %v802 = vsel %vm610, %v794, 0
        %804 = vmatprep.subr.mxu0 0.0
        %805 = vmatpush1.msra.mxu0 %v796
        %806 = vmatprep.subr.mxu0 0.0
        %807 = vmatpush1.msra.mxu0 %v798
        %808 = vmatprep.subr.mxu0 0.0
        %809 = vmatpush1.msra.mxu0 0.0
        %810 = vmatprep.subr.mxu0 0.0
        %811 = vmatpush1.msra.mxu0 0.0
        %812 = vmatprep.subr.mxu0 0.0
        %813 = vmatpush1.msra.mxu0 0.0
        %814 = vmatprep.subr.mxu0 0.0
        %815 = vmatpush1.msra.mxu0 0.0
        %816 = vmatprep.subr.mxu0 0.0
        %817 = vmatpush1.msra.mxu0 0.0
        %818 = vmatprep.subr.mxu0 0.0
        %819 = vmatpush1.msra.mxu0 0.0
        %820 = vmatprep.subr.mxu0 0.0
        %821 = vmatpush1.msra.mxu0 0.0
        %822 = vmatprep.subr.mxu0 0.0
        %823 = vmatpush1.msra.mxu0 0.0
        %824 = vmatprep.subr.mxu0 0.0
        %825 = vmatpush1.msra.mxu0 0.0
        %826 = vmatprep.subr.mxu0 0.0
        %827 = vmatpush1.msra.mxu0 0.0
        %828 = vmatprep.subr.mxu0 0.0
        %829 = vmatpush1.msra.mxu0 0.0
        %830 = vmatprep.subr.mxu0 0.0
        %831 = vmatpush1.msra.mxu0 0.0
        %832 = vmatprep.subr.mxu0 0.0
        %833 = vmatpush1.msra.mxu0 0.0
        %834 = vmatprep.subr.mxu0 0.0
        %835 = vmatpush1.msra.mxu0 0.0
        %836 = vmatprep.subr.mxu0 0.0
        %837 = vmatpush1.msra.mxu0 0.0
        %838 = vmatprep.subr.mxu0 0.0
        %839 = vmatpush1.msra.mxu0 0.0
        %840 = vmatprep.subr.mxu0 0.0
        %841 = vmatpush1.msra.mxu0 0.0
        %842 = vmatprep.subr.mxu0 0.0
        %843 = vmatpush1.msra.mxu0 0.0
        %844 = vmatprep.subr.mxu0 0.0
        %845 = vmatpush1.msra.mxu0 0.0
        %846 = vmatprep.subr.mxu0 0.0
        %847 = vmatpush1.msra.mxu0 0.0
        %848 = vmatprep.subr.mxu0 0.0
        %849 = vmatpush1.msra.mxu0 0.0
        %850 = vmatprep.subr.mxu0 0.0
        %851 = vmatpush1.msra.mxu0 0.0
        %852 = vmatprep.subr.mxu0 0.0
        %853 = vmatpush1.msra.mxu0 0.0
        %854 = vmatprep.subr.mxu0 0.0
        %855 = vmatpush1.msra.mxu0 0.0
        %856 = vmatprep.subr.mxu0 0.0
        %857 = vmatpush1.msra.mxu0 0.0
        %858 = vmatprep.subr.mxu0 0.0
        %859 = vmatpush1.msra.mxu0 0.0
        %860 = vmatprep.subr.mxu0 0.0
        %861 = vmatpush1.msra.mxu0 0.0
        %862 = vmatprep.subr.mxu0 0.0
        %863 = vmatpush1.msra.mxu0 0.0
        %864 = vmatprep.subr.mxu0 0.0
        %865 = vmatpush1.msra.mxu0 0.0
        %866 = vmatprep.subr.mxu0 0.0
        %867 = vmatpush1.msra.mxu0 0.0
        %868 = vmatprep.mubr.f32.mxu0 0.0
        %869 = vmatmul.mubr.f32.gmra.mrb[0].mxu0 %v802
        %v870 = vpop.f32.mrb[0].mxu0
        %v871 = vadd.f32 0.0, %v870
        %v872 = vpop.f32.mrb[0].mxu0
        %873 = vdwg.mxu0
        %875 = vrot.lane.b32.xlu0 %v871, 8
        %v876 = vpop.permute.xlu0 %875
        %vm878 = vcmask 130112
        %879 = vst.msk [vmem:[#allocation2] sm:$0xff] %vm878, %v876
        %880 = vrot.lane.b32.xlu0 %v444, 112
        %v881 = vpop.permute.xlu0 %880
        %882 = vrot.lane.b32.xlu0 %v522, 112
        %v883 = vpop.permute.xlu0 %882
        %884 = vrot.lane.b32.xlu0 %v527, 112
        %v885 = vpop.permute.xlu0 %884
        %v886 = vsel %vm530, %v881, 0
        %v888 = vsel %vm530, %v883, 0
        %v890 = vsel %vm530, %v885, 0
        %892 = vmatprep.subr.mxu0 0.0
        %893 = vmatpush1.xpose.msra.mxu0 %v888
        %894 = vmatprep.subr.mxu0 0.0
        %895 = vmatpush1.xpose.msra.mxu0 %v890
        %896 = vmatprep.subr.mxu0 0.0
        %897 = vmatpush1.xpose.msra.mxu0 0.0
        %898 = vmatprep.subr.mxu0 0.0
        %899 = vmatpush1.xpose.msra.mxu0 0.0
        %900 = vmatprep.subr.mxu0 0.0
        %901 = vmatpush1.xpose.msra.mxu0 0.0
        %902 = vmatprep.subr.mxu0 0.0
        %903 = vmatpush1.xpose.msra.mxu0 0.0
        %904 = vmatprep.subr.mxu0 0.0
        %905 = vmatpush1.xpose.msra.mxu0 0.0
        %906 = vmatprep.subr.mxu0 0.0
        %907 = vmatpush1.xpose.msra.mxu0 0.0
        %908 = vmatprep.subr.mxu0 0.0
        %909 = vmatpush1.xpose.msra.mxu0 0.0
        %910 = vmatprep.subr.mxu0 0.0
        %911 = vmatpush1.xpose.msra.mxu0 0.0
        %912 = vmatprep.subr.mxu0 0.0
        %913 = vmatpush1.xpose.msra.mxu0 0.0
        %914 = vmatprep.subr.mxu0 0.0
        %915 = vmatpush1.xpose.msra.mxu0 0.0
        %916 = vmatprep.subr.mxu0 0.0
        %917 = vmatpush1.xpose.msra.mxu0 0.0
        %918 = vmatprep.subr.mxu0 0.0
        %919 = vmatpush1.xpose.msra.mxu0 0.0
        %920 = vmatprep.subr.mxu0 0.0
        %921 = vmatpush1.xpose.msra.mxu0 0.0
        %922 = vmatprep.subr.mxu0 0.0
        %923 = vmatpush1.xpose.msra.mxu0 0.0
        %924 = vmatprep.subr.mxu0 0.0
        %925 = vmatpush1.xpose.msra.mxu0 0.0
        %926 = vmatprep.subr.mxu0 0.0
        %927 = vmatpush1.xpose.msra.mxu0 0.0
        %928 = vmatprep.subr.mxu0 0.0
        %929 = vmatpush1.xpose.msra.mxu0 0.0
        %930 = vmatprep.subr.mxu0 0.0
        %931 = vmatpush1.xpose.msra.mxu0 0.0
        %932 = vmatprep.subr.mxu0 0.0
        %933 = vmatpush1.xpose.msra.mxu0 0.0
        %934 = vmatprep.subr.mxu0 0.0
        %935 = vmatpush1.xpose.msra.mxu0 0.0
        %936 = vmatprep.subr.mxu0 0.0
        %937 = vmatpush1.xpose.msra.mxu0 0.0
        %938 = vmatprep.subr.mxu0 0.0
        %939 = vmatpush1.xpose.msra.mxu0 0.0
        %940 = vmatprep.subr.mxu0 0.0
        %941 = vmatpush1.xpose.msra.mxu0 0.0
        %942 = vmatprep.subr.mxu0 0.0
        %943 = vmatpush1.xpose.msra.mxu0 0.0
        %944 = vmatprep.subr.mxu0 0.0
        %945 = vmatpush1.xpose.msra.mxu0 0.0
        %946 = vmatprep.subr.mxu0 0.0
        %947 = vmatpush1.xpose.msra.mxu0 0.0
        %948 = vmatprep.subr.mxu0 0.0
        %949 = vmatpush1.xpose.msra.mxu0 0.0
        %950 = vmatprep.subr.mxu0 0.0
        %951 = vmatpush1.xpose.msra.mxu0 0.0
        %952 = vmatprep.subr.mxu0 0.0
        %953 = vmatpush1.xpose.msra.mxu0 0.0
        %954 = vmatprep.subr.mxu0 0.0
        %955 = vmatpush1.xpose.msra.mxu0 0.0
        %956 = vmatprep.mubr.f32.mxu0 0.0
        %957 = vmatmul.mubr.f32.gmra.mrb[0].mxu0 %v886
        %v958 = vpop.f32.mrb[0].mxu0
        %v959 = vadd.f32 0.0, %v958
        %v960 = vpop.f32.mrb[0].mxu0
        %961 = vdwg.mxu0
        %v962 = vsel %vm610, %v959, -inf
        %963 = vmax.xlane.f32.xlu0 %v962
        %v964 = vpop.xlane.xlu0 %963
        %v965 = vsub.f32 %v959, %v964
        %v966 = vmul.f32 %v965, 1.442695
        %v967 = vpow.pop %v966
        %v968 = vsel %vm610, %v967, 0.0
        %969 = vadd.xlane.f32.xlu0 %v968
        %v970 = vpop.xlane.xlu0 %969
        %v971 = vrcp.pop %v970
        %v972 = vmul.f32 %v967, %v971
        %973 = vrot.lane.b32.xlu0 %v522, 80
        %v974 = vpop.permute.xlu0 %973
        %975 = vrot.lane.b32.xlu0 %v527, 80
        %v976 = vpop.permute.xlu0 %975
        %v980 = vsel %vm610, %v972, 0
        %982 = vmatprep.subr.mxu0 0.0
        %983 = vmatpush1.msra.mxu0 %v974
        %984 = vmatprep.subr.mxu0 0.0
        %985 = vmatpush1.msra.mxu0 %v976
        %986 = vmatprep.subr.mxu0 0.0
        %987 = vmatpush1.msra.mxu0 0.0
        %988 = vmatprep.subr.mxu0 0.0
        %989 = vmatpush1.msra.mxu0 0.0
        %990 = vmatprep.subr.mxu0 0.0
        %991 = vmatpush1.msra.mxu0 0.0
        %992 = vmatprep.subr.mxu0 0.0
        %993 = vmatpush1.msra.mxu0 0.0
        %994 = vmatprep.subr.mxu0 0.0
        %995 = vmatpush1.msra.mxu0 0.0
        %996 = vmatprep.subr.mxu0 0.0
        %997 = vmatpush1.msra.mxu0 0.0
        %998 = vmatprep.subr.mxu0 0.0
        %999 = vmatpush1.msra.mxu0 0.0
        %1000 = vmatprep.subr.mxu0 0.0
        %1001 = vmatpush1.msra.mxu0 0.0
        %1002 = vmatprep.subr.mxu0 0.0
        %1003 = vmatpush1.msra.mxu0 0.0
        %1004 = vmatprep.subr.mxu0 0.0
        %1005 = vmatpush1.msra.mxu0 0.0
        %1006 = vmatprep.subr.mxu0 0.0
        %1007 = vmatpush1.msra.mxu0 0.0
        %1008 = vmatprep.subr.mxu0 0.0
        %1009 = vmatpush1.msra.mxu0 0.0
        %1010 = vmatprep.subr.mxu0 0.0
        %1011 = vmatpush1.msra.mxu0 0.0
        %1012 = vmatprep.subr.mxu0 0.0
        %1013 = vmatpush1.msra.mxu0 0.0
        %1014 = vmatprep.subr.mxu0 0.0
        %1015 = vmatpush1.msra.mxu0 0.0
        %1016 = vmatprep.subr.mxu0 0.0
        %1017 = vmatpush1.msra.mxu0 0.0
        %1018 = vmatprep.subr.mxu0 0.0
        %1019 = vmatpush1.msra.mxu0 0.0
        %1020 = vmatprep.subr.mxu0 0.0
        %1021 = vmatpush1.msra.mxu0 0.0
        %1022 = vmatprep.subr.mxu0 0.0
        %1023 = vmatpush1.msra.mxu0 0.0
        %1024 = vmatprep.subr.mxu0 0.0
        %1025 = vmatpush1.msra.mxu0 0.0
        %1026 = vmatprep.subr.mxu0 0.0
        %1027 = vmatpush1.msra.mxu0 0.0
        %1028 = vmatprep.subr.mxu0 0.0
        %1029 = vmatpush1.msra.mxu0 0.0
        %1030 = vmatprep.subr.mxu0 0.0
        %1031 = vmatpush1.msra.mxu0 0.0
        %1032 = vmatprep.subr.mxu0 0.0
        %1033 = vmatpush1.msra.mxu0 0.0
        %1034 = vmatprep.subr.mxu0 0.0
        %1035 = vmatpush1.msra.mxu0 0.0
        %1036 = vmatprep.subr.mxu0 0.0
        %1037 = vmatpush1.msra.mxu0 0.0
        %1038 = vmatprep.subr.mxu0 0.0
        %1039 = vmatpush1.msra.mxu0 0.0
        %1040 = vmatprep.subr.mxu0 0.0
        %1041 = vmatpush1.msra.mxu0 0.0
        %1042 = vmatprep.subr.mxu0 0.0
        %1043 = vmatpush1.msra.mxu0 0.0
        %1044 = vmatprep.subr.mxu0 0.0
        %1045 = vmatpush1.msra.mxu0 0.0
        %1046 = vmatprep.mubr.f32.mxu0 0.0
        %1047 = vmatmul.mubr.f32.gmra.mrb[0].mxu0 %v980
        %v1048 = vpop.f32.mrb[0].mxu0
        %v1049 = vadd.f32 0.0, %v1048
        %v1050 = vpop.f32.mrb[0].mxu0
        %1051 = vdwg.mxu0
        %1053 = vrot.lane.b32.xlu0 %v1049, 16
        %v1054 = vpop.permute.xlu0 %1053
        %vm1056 = vcmask 195712
        %1057 = vst.msk [vmem:[#allocation2] sm:$0xff] %vm1056, %v1054
        %1058 = vrot.lane.b32.xlu0 %v444, 104
        %v1059 = vpop.permute.xlu0 %1058
        %1060 = vrot.lane.b32.xlu0 %v522, 104
        %v1061 = vpop.permute.xlu0 %1060
        %1062 = vrot.lane.b32.xlu0 %v527, 104
        %v1063 = vpop.permute.xlu0 %1062
        %v1064 = vsel %vm530, %v1059, 0
        %v1066 = vsel %vm530, %v1061, 0
        %v1068 = vsel %vm530, %v1063, 0
        %1070 = vmatprep.subr.mxu0 0.0
        %1071 = vmatpush1.xpose.msra.mxu0 %v1066
        %1072 = vmatprep.subr.mxu0 0.0
        %1073 = vmatpush1.xpose.msra.mxu0 %v1068
        %1074 = vmatprep.subr.mxu0 0.0
        %1075 = vmatpush1.xpose.msra.mxu0 0.0
        %1076 = vmatprep.subr.mxu0 0.0
        %1077 = vmatpush1.xpose.msra.mxu0 0.0
        %1078 = vmatprep.subr.mxu0 0.0
        %1079 = vmatpush1.xpose.msra.mxu0 0.0
        %1080 = vmatprep.subr.mxu0 0.0
        %1081 = vmatpush1.xpose.msra.mxu0 0.0
        %1082 = vmatprep.subr.mxu0 0.0
        %1083 = vmatpush1.xpose.msra.mxu0 0.0
        %1084 = vmatprep.subr.mxu0 0.0
        %1085 = vmatpush1.xpose.msra.mxu0 0.0
        %1086 = vmatprep.subr.mxu0 0.0
        %1087 = vmatpush1.xpose.msra.mxu0 0.0
        %1088 = vmatprep.subr.mxu0 0.0
        %1089 = vmatpush1.xpose.msra.mxu0 0.0
        %1090 = vmatprep.subr.mxu0 0.0
        %1091 = vmatpush1.xpose.msra.mxu0 0.0
        %1092 = vmatprep.subr.mxu0 0.0
        %1093 = vmatpush1.xpose.msra.mxu0 0.0
        %1094 = vmatprep.subr.mxu0 0.0
        %1095 = vmatpush1.xpose.msra.mxu0 0.0
        %1096 = vmatprep.subr.mxu0 0.0
        %1097 = vmatpush1.xpose.msra.mxu0 0.0
        %1098 = vmatprep.subr.mxu0 0.0
        %1099 = vmatpush1.xpose.msra.mxu0 0.0
        %1100 = vmatprep.subr.mxu0 0.0
        %1101 = vmatpush1.xpose.msra.mxu0 0.0
        %1102 = vmatprep.subr.mxu0 0.0
        %1103 = vmatpush1.xpose.msra.mxu0 0.0
        %1104 = vmatprep.subr.mxu0 0.0
        %1105 = vmatpush1.xpose.msra.mxu0 0.0
        %1106 = vmatprep.subr.mxu0 0.0
        %1107 = vmatpush1.xpose.msra.mxu0 0.0
        %1108 = vmatprep.subr.mxu0 0.0
        %1109 = vmatpush1.xpose.msra.mxu0 0.0
        %1110 = vmatprep.subr.mxu0 0.0
        %1111 = vmatpush1.xpose.msra.mxu0 0.0
        %1112 = vmatprep.subr.mxu0 0.0
        %1113 = vmatpush1.xpose.msra.mxu0 0.0
        %1114 = vmatprep.subr.mxu0 0.0
        %1115 = vmatpush1.xpose.msra.mxu0 0.0
        %1116 = vmatprep.subr.mxu0 0.0
        %1117 = vmatpush1.xpose.msra.mxu0 0.0
        %1118 = vmatprep.subr.mxu0 0.0
        %1119 = vmatpush1.xpose.msra.mxu0 0.0
        %1120 = vmatprep.subr.mxu0 0.0
        %1121 = vmatpush1.xpose.msra.mxu0 0.0
        %1122 = vmatprep.subr.mxu0 0.0
        %1123 = vmatpush1.xpose.msra.mxu0 0.0
        %1124 = vmatprep.subr.mxu0 0.0
        %1125 = vmatpush1.xpose.msra.mxu0 0.0
        %1126 = vmatprep.subr.mxu0 0.0
        %1127 = vmatpush1.xpose.msra.mxu0 0.0
        %1128 = vmatprep.subr.mxu0 0.0
        %1129 = vmatpush1.xpose.msra.mxu0 0.0
        %1130 = vmatprep.subr.mxu0 0.0
        %1131 = vmatpush1.xpose.msra.mxu0 0.0
        %1132 = vmatprep.subr.mxu0 0.0
        %1133 = vmatpush1.xpose.msra.mxu0 0.0
        %1134 = vmatprep.mubr.f32.mxu0 0.0
        %1135 = vmatmul.mubr.f32.gmra.mrb[0].mxu0 %v1064
        %v1136 = vpop.f32.mrb[0].mxu0
        %v1137 = vadd.f32 0.0, %v1136
        %v1138 = vpop.f32.mrb[0].mxu0
        %1139 = vdwg.mxu0
        %v1140 = vsel %vm610, %v1137, -inf
        %1141 = vmax.xlane.f32.xlu0 %v1140
        %v1142 = vpop.xlane.xlu0 %1141
        %v1143 = vsub.f32 %v1137, %v1142
        %v1144 = vmul.f32 %v1143, 1.442695
        %v1145 = vpow.pop %v1144
        %v1146 = vsel %vm610, %v1145, 0.0
        %1147 = vadd.xlane.f32.xlu0 %v1146
        %v1148 = vpop.xlane.xlu0 %1147
        %v1149 = vrcp.pop %v1148
        %v1150 = vmul.f32 %v1145, %v1149
        %1151 = vrot.lane.b32.xlu0 %v522, 72
        %v1152 = vpop.permute.xlu0 %1151
        %1153 = vrot.lane.b32.xlu0 %v527, 72
        %v1154 = vpop.permute.xlu0 %1153
        %v1158 = vsel %vm610, %v1150, 0
        %1160 = vmatprep.subr.mxu0 0.0
        %1161 = vmatpush1.msra.mxu0 %v1152
        %1162 = vmatprep.subr.mxu0 0.0
        %1163 = vmatpush1.msra.mxu0 %v1154
        %1164 = vmatprep.subr.mxu0 0.0
        %1165 = vmatpush1.msra.mxu0 0.0
        %1166 = vmatprep.subr.mxu0 0.0
        %1167 = vmatpush1.msra.mxu0 0.0
        %1168 = vmatprep.subr.mxu0 0.0
        %1169 = vmatpush1.msra.mxu0 0.0
        %1170 = vmatprep.subr.mxu0 0.0
        %1171 = vmatpush1.msra.mxu0 0.0
        %1172 = vmatprep.subr.mxu0 0.0
        %1173 = vmatpush1.msra.mxu0 0.0
        %1174 = vmatprep.subr.mxu0 0.0
        %1175 = vmatpush1.msra.mxu0 0.0
        %1176 = vmatprep.subr.mxu0 0.0
        %1177 = vmatpush1.msra.mxu0 0.0
        %1178 = vmatprep.subr.mxu0 0.0
        %1179 = vmatpush1.msra.mxu0 0.0
        %1180 = vmatprep.subr.mxu0 0.0
        %1181 = vmatpush1.msra.mxu0 0.0
        %1182 = vmatprep.subr.mxu0 0.0
        %1183 = vmatpush1.msra.mxu0 0.0
        %1184 = vmatprep.subr.mxu0 0.0
        %1185 = vmatpush1.msra.mxu0 0.0
        %1186 = vmatprep.subr.mxu0 0.0
        %1187 = vmatpush1.msra.mxu0 0.0
        %1188 = vmatprep.subr.mxu0 0.0
        %1189 = vmatpush1.msra.mxu0 0.0
        %1190 = vmatprep.subr.mxu0 0.0
        %1191 = vmatpush1.msra.mxu0 0.0
        %1192 = vmatprep.subr.mxu0 0.0
        %1193 = vmatpush1.msra.mxu0 0.0
        %1194 = vmatprep.subr.mxu0 0.0
        %1195 = vmatpush1.msra.mxu0 0.0
        %1196 = vmatprep.subr.mxu0 0.0
        %1197 = vmatpush1.msra.mxu0 0.0
        %1198 = vmatprep.subr.mxu0 0.0
        %1199 = vmatpush1.msra.mxu0 0.0
        %1200 = vmatprep.subr.mxu0 0.0
        %1201 = vmatpush1.msra.mxu0 0.0
        %1202 = vmatprep.subr.mxu0 0.0
        %1203 = vmatpush1.msra.mxu0 0.0
        %1204 = vmatprep.subr.mxu0 0.0
        %1205 = vmatpush1.msra.mxu0 0.0
        %1206 = vmatprep.subr.mxu0 0.0
        %1207 = vmatpush1.msra.mxu0 0.0
        %1208 = vmatprep.subr.mxu0 0.0
        %1209 = vmatpush1.msra.mxu0 0.0
        %1210 = vmatprep.subr.mxu0 0.0
        %1211 = vmatpush1.msra.mxu0 0.0
        %1212 = vmatprep.subr.mxu0 0.0
        %1213 = vmatpush1.msra.mxu0 0.0
        %1214 = vmatprep.subr.mxu0 0.0
        %1215 = vmatpush1.msra.mxu0 0.0
        %1216 = vmatprep.subr.mxu0 0.0
        %1217 = vmatpush1.msra.mxu0 0.0
        %1218 = vmatprep.subr.mxu0 0.0
        %1219 = vmatpush1.msra.mxu0 0.0
        %1220 = vmatprep.subr.mxu0 0.0
        %1221 = vmatpush1.msra.mxu0 0.0
        %1222 = vmatprep.subr.mxu0 0.0
        %1223 = vmatpush1.msra.mxu0 0.0
        %1224 = vmatprep.mubr.f32.mxu0 0.0
        %1225 = vmatmul.mubr.f32.gmra.mrb[0].mxu0 %v1158
        %v1226 = vpop.f32.mrb[0].mxu0
        %v1227 = vadd.f32 0.0, %v1226
        %v1228 = vpop.f32.mrb[0].mxu0
        %1229 = vdwg.mxu0
        %1231 = vrot.lane.b32.xlu0 %v1227, 24
        %v1232 = vpop.permute.xlu0 %1231
        %vm1234 = vcmask 261312
        %1235 = vst.msk [vmem:[#allocation2] sm:$0xff] %vm1234, %v1232
        %v1236 = vld [vmem:[#allocation2] sm:$0xff]
        %v1237 = vld [vmem:[#allocation11] sm:$0xff]
        %v1238 = vld [vmem:[#allocation11 + $0x8] sm:$0xff]
        %v1239 = vld [vmem:[#allocation11 + $0x10] sm:$0xff]
        %v1240 = vld [vmem:[#allocation11 + $0x18] sm:$0xff]
        %v1241 = vld [vmem:[#allocation12] sm:$0x1]
        %v1243 = vlaneseq
        %v1244 = vshrl.u32 %v1243, 7
        %v1245 = vsub.s32 0, %v1244
        %v1246 = vrot.slane %v1241, %v1245
        %v1249 = vsel %vm370, %v1236, 0
        %1251 = vmatprep.subr.mxu0 0.0
        %1252 = vmatpush1.msra.mxu0 %v1237
        %1253 = vmatprep.subr.mxu0 0.0
        %1254 = vmatpush1.msra.mxu0 %v1238
        %1255 = vmatprep.subr.mxu0 0.0
        %1256 = vmatpush1.msra.mxu0 %v1239
        %1257 = vmatprep.subr.mxu0 0.0
        %1258 = vmatpush1.msra.mxu0 %v1240
        %1259 = vmatprep.subr.mxu0 0.0
        %1260 = vmatpush1.msra.mxu0 0.0
        %1261 = vmatprep.subr.mxu0 0.0
        %1262 = vmatpush1.msra.mxu0 0.0
        %1263 = vmatprep.subr.mxu0 0.0
        %1264 = vmatpush1.msra.mxu0 0.0
        %1265 = vmatprep.subr.mxu0 0.0
        %1266 = vmatpush1.msra.mxu0 0.0
        %1267 = vmatprep.subr.mxu0 0.0
        %1268 = vmatpush1.msra.mxu0 0.0
        %1269 = vmatprep.subr.mxu0 0.0
        %1270 = vmatpush1.msra.mxu0 0.0
        %1271 = vmatprep.subr.mxu0 0.0
        %1272 = vmatpush1.msra.mxu0 0.0
        %1273 = vmatprep.subr.mxu0 0.0
        %1274 = vmatpush1.msra.mxu0 0.0
        %1275 = vmatprep.subr.mxu0 0.0
        %1276 = vmatpush1.msra.mxu0 0.0
        %1277 = vmatprep.subr.mxu0 0.0
        %1278 = vmatpush1.msra.mxu0 0.0
        %1279 = vmatprep.subr.mxu0 0.0
        %1280 = vmatpush1.msra.mxu0 0.0
        %1281 = vmatprep.subr.mxu0 0.0
        %1282 = vmatpush1.msra.mxu0 0.0
        %1283 = vmatprep.subr.mxu0 0.0
        %1284 = vmatpush1.msra.mxu0 0.0
        %1285 = vmatprep.subr.mxu0 0.0
        %1286 = vmatpush1.msra.mxu0 0.0
        %1287 = vmatprep.subr.mxu0 0.0
        %1288 = vmatpush1.msra.mxu0 0.0
        %1289 = vmatprep.subr.mxu0 0.0
        %1290 = vmatpush1.msra.mxu0 0.0
        %1291 = vmatprep.subr.mxu0 0.0
        %1292 = vmatpush1.msra.mxu0 0.0
        %1293 = vmatprep.subr.mxu0 0.0
        %1294 = vmatpush1.msra.mxu0 0.0
        %1295 = vmatprep.subr.mxu0 0.0
        %1296 = vmatpush1.msra.mxu0 0.0
        %1297 = vmatprep.subr.mxu0 0.0
        %1298 = vmatpush1.msra.mxu0 0.0
        %1299 = vmatprep.subr.mxu0 0.0
        %1300 = vmatpush1.msra.mxu0 0.0
        %1301 = vmatprep.subr.mxu0 0.0
        %1302 = vmatpush1.msra.mxu0 0.0
        %1303 = vmatprep.subr.mxu0 0.0
        %1304 = vmatpush1.msra.mxu0 0.0
        %1305 = vmatprep.subr.mxu0 0.0
        %1306 = vmatpush1.msra.mxu0 0.0
        %1307 = vmatprep.subr.mxu0 0.0
        %1308 = vmatpush1.msra.mxu0 0.0
        %1309 = vmatprep.subr.mxu0 0.0
        %1310 = vmatpush1.msra.mxu0 0.0
        %1311 = vmatprep.subr.mxu0 0.0
        %1312 = vmatpush1.msra.mxu0 0.0
        %1313 = vmatprep.subr.mxu0 0.0
        %1314 = vmatpush1.msra.mxu0 0.0
        %1315 = vmatprep.mubr.f32.mxu0 0.0
        %1316 = vmatmul.mubr.f32.gmra.mrb[0].mxu0 %v1249
        %v1317 = vpop.f32.mrb[0].mxu0
        %v1318 = vadd.f32 %v1246, %v1317
        %v1319 = vpop.f32.mrb[0].mxu0
        %1320 = vdwg.mxu0
        %1321 = vst.msk [vmem:[%s362] sm:$0xff] %vm370, %v1318
        %s1322 = sand.u32 %s172, 1
        %s1323 = scalar_lea.sflag [#allocation5], %s1322
        %s1324 = sand.u32 %s172, 1
        %s1325 = smul.addr %s1324, 8
        %s1326 = scalar_lea.vmem [#allocation14], %s1325
        // Predicated region
        $region69: #{tpu_custom_call.1} parent=43 // pred_check
          %p1327 = pneg %p182
        $region70: #{tpu_custom_call.1} parent=43 // pred_check_branch
          %1329 = sbr.rel (%p1327) target = $region72
        $region71: #{tpu_custom_call.1} parent=43 // pred_region
          %s1331 = ssub.s32 128, 128
          %1332 = vsyncadd %s1323, %s1331
          %s1333 = smul.addr %s28, 128
          %s1334 = scalar_lea.hbm %s6, %s1333
          %s1336 = sshll.u32 %s1326, 4
          %s1337 = int_to_ptr.vmem [resolvable:$true] %s1336
          %1339 = dma.vmem_to_hbm [thread:$0]  %s1337, 128, %s1334, %s1323
        $region72: #{tpu_custom_call.1} parent=43 // pred_fallthru
          _
      $region44: #{tpu_custom_call.1} parent=5 // pred_fallthru
        _
      %p1340 = scmp.le.s32.totalorder 2, %s23
      // Predicated region
      $region73: #{tpu_custom_call.1} parent=5 // pred_check
        %p1341 = pneg %p1340
      $region74: #{tpu_custom_call.1} parent=5 // pred_check_branch
        %1343 = sbr.rel (%p1341) target = $region76
      $region75: #{tpu_custom_call.1} parent=5 // pred_region
        %s1344 = ssub.s32 %s23, 2
        // Predicated region
        $region77: #{tpu_custom_call.1} parent=75 // pred_check
          %p1345 = pneg %p188
        $region78: #{tpu_custom_call.1} parent=75 // pred_check_branch
          %1347 = sbr.rel (%p1345) target = $region80
        $region79: #{tpu_custom_call.1} parent=75 // pred_region
          %s1348 = sand.u32 %s173, 1
          %s1349 = scalar_lea.sflag [#allocation5], %s1348
          %s1350 = sand.u32 %s173, 1
          %s1351 = smul.addr %s1350, 8
          %s1352 = scalar_lea.vmem [#allocation14], %s1351
          %1353 = dma.done %s1349, 128
        $region80: #{tpu_custom_call.1} parent=75 // pred_fallthru
          _
      $region76: #{tpu_custom_call.1} parent=5 // pred_fallthru
        _
    $region6: #{tpu_custom_call.1} parent=1 // loop_footer
      %s27 = sadd.s32 1, %s23
    $region7: #{tpu_custom_call.1} parent=1 // loop_footer_branch
      %22 = sbr.rel target = $region3
    $region8: #{tpu_custom_call.1} parent=1 // loop_exit
      _
    %1354 = vsyncpa [#allocation4], 1
    %s1355 = scalar_lea.sflag [#allocation4], 1
    %1356 = vsyncpa %s1355, 1
    %1357 = vsyncpa [#allocation7], 1
    %s1358 = scalar_lea.sflag [#allocation7], 1
    %1359 = vsyncpa %s1358, 1
    %1360 = vsyncpa [#allocation10], 1
    %1361 = vsyncpa [#allocation13], 1
    %1362 = vsyncpa [#allocation5], 1
    %s1363 = scalar_lea.sflag [#allocation5], 1
    %1364 = vsyncpa %s1363, 1

</llo_original>
